<compile_context>
chip_gen: v5e
topology: v5e:2x2
jax: 0.10.0
libtpu: 0.0.40
codegen_flags: <defaults>
</compile_context>

<pallas_src>
import math

import jax
import jax.numpy as jnp
from jax import lax
from jax.experimental import pallas as pl
from jax.experimental.pallas import tpu as pltpu


def _softplus(x):
    # numerically stable log(1 + exp(x))
    return jnp.maximum(x, 0.0) + jnp.log1p(jnp.exp(-jnp.abs(x)))


def _sigmoid(x):
    return 1.0 / (1.0 + jnp.exp(-x))


def write_head_fused_kernel(x_ref, wfc_ref, b_ref, mem_in_ref, wlast0_ref,
                            mem_out_ref, w_out_ref, k_sc, ae_sc, scal_sc):
    """All T NTM write-head steps in one invocation; memory/w_last carried in vregs."""
    T, C = x_ref.shape
    N, M = mem_in_ref.shape       # memory is (N, M): word dim on sublanes, slots on lanes

    # ------------- hoisted, carry-independent precompute (off the serial chain) ----
    x = x_ref[...]                # (T, C)
    wfc = wfc_ref[...]            # (L_pad, C)
    bias = b_ref[...]             # (1, L_pad)

    dn_nt = (((1,), (1,)), ((), ()))  # contract last dims: A @ B^T
    param = lax.dot_general(x, wfc, dn_nt,
                            preferred_element_type=jnp.float32) + bias   # (T, L_pad)

    k_all = jnp.tanh(param[:, 0:N])                        # (T, N)
    beta_all = _softplus(param[:, N:N + 1])                # (T, 1)
    g_all = _sigmoid(param[:, N + 1:N + 2])                # (T, 1)
    s_raw = param[:, N + 2:N + 5]                          # (T, 3)
    gamma_all = 1.0 + _softplus(param[:, N + 5:N + 6])     # (T, 1)

    # [a | e] block in place with a lane mask (a = tanh, e = sigmoid)
    ae_raw = param[:, N + 6:3 * N + 6]                     # (T, 2N)
    lane = lax.broadcasted_iota(jnp.int32, ae_raw.shape, 1)
    ae_all = jnp.where(lane < N, jnp.tanh(ae_raw), _sigmoid(ae_raw))

    # softmax over the 3 shift logits (hoisted: the max-shift is off the step chain)
    s_sh = s_raw - jnp.max(s_raw, axis=1, keepdims=True)
    s_exp = jnp.exp(s_sh)
    s_all = s_exp / jnp.sum(s_exp, axis=1, keepdims=True)  # (T, 3)

    knorm_all = jnp.sqrt(jnp.sum(k_all * k_all, axis=1, keepdims=True))  # (T, 1)

    # Pre-broadcast every per-step scalar across all M lanes.  Slot order (each M
    # lanes wide, vreg-aligned): [beta, g, 1-g, gamma, s0, s1, s2, |k|].
    def bcast(v):
        return jnp.broadcast_to(v, (T, M))

    scal_sc[...] = jnp.concatenate(
        [bcast(beta_all), bcast(g_all), bcast(1.0 - g_all), bcast(gamma_all),
         bcast(s_all[:, 0:1]), bcast(s_all[:, 1:2]), bcast(s_all[:, 2:3]),
         bcast(knorm_all)], axis=1)                        # (T, 8*M)
    k_sc[...] = k_all
    ae_sc[...] = ae_all

    # ------------- serial NTM recurrence (memory, w_last carried as values) --------
    def step(t, carry):
        memory, w_last = carry                             # (N, M), (1, M)

        k_t = k_sc[pl.ds(t, 1), :]                         # (1, N)
        ae_t = ae_sc[pl.ds(t, 1), :]                       # (1, 2N)
        row = scal_sc[pl.ds(t, 1), :]                      # (1, 8*M), lane-aligned slots
        beta_r = row[:, 0 * M:1 * M]
        g_r = row[:, 1 * M:2 * M]
        omg_r = row[:, 2 * M:3 * M]
        gamma_r = row[:, 3 * M:4 * M]
        s0_r = row[:, 4 * M:5 * M]
        s1_r = row[:, 5 * M:6 * M]
        s2_r = row[:, 6 * M:7 * M]
        knorm_r = row[:, 7 * M:8 * M]

        # similarity: softmax(beta * cosine(memory, k)); shift by beta (valid bound)
        dots = jnp.dot(k_t, memory, preferred_element_type=jnp.float32)   # (1, M)
        mem_norm = jnp.sqrt(jnp.sum(memory * memory, axis=0, keepdims=True))
        cos = dots / jnp.maximum(mem_norm * knorm_r, 1e-16)
        ez = jnp.exp(beta_r * cos - beta_r)                # args <= 0, no lane max
        wc = ez / jnp.sum(ez, axis=1, keepdims=True)       # (1, M)

        # interpolate
        wg = g_r * wc + omg_r * w_last                     # (1, M)

        # circular 3-tap shift (XLU lane rotation == wrapped conv1d)
        w_m1 = pltpu.roll(wg, 1, axis=1)                   # w[(i-1) % M]
        w_p1 = pltpu.roll(wg, M - 1, axis=1)               # w[(i+1) % M]
        w_hat = s0_r * w_m1 + s1_r * wg + s2_r * w_p1      # (1, M)

        # sharpen: w_hat ** gamma, normalize (clamp guards log(0))
        w_hat = jnp.maximum(w_hat, 1e-16)
        w_pow = jnp.exp(gamma_r * jnp.log(w_hat))
        w = w_pow / (jnp.sum(w_pow, axis=1, keepdims=True) + 1e-16)       # (1, M)

        # write: memory * (1 - outer(e, w)) + outer(a, w)  (one fused MXU call)
        dn_outer = (((0,), (0,)), ((), ()))                # contract singleton dim
        outer = lax.dot_general(ae_t, w, dn_outer,
                                preferred_element_type=jnp.float32)       # (2N, M)
        mem_new = memory * (1.0 - outer[N:, :]) + outer[:N, :]            # (N, M)

        w_out_ref[pl.ds(t, 1), :] = w                      # resident (T, M) output
        return mem_new, w

    mem_fin, _ = lax.fori_loop(0, T, step,
                               (mem_in_ref[...], wlast0_ref[...]),
                               unroll=True)
    mem_out_ref[...] = mem_fin                             # single final memory store


@jax.jit
def write_head_forward_seq(x_seq, w_fc, b_fc, memory, w_last0):
    """Run T write-head steps fused in one pallas_call.

    x_seq:  (T, C) controller outputs, one per step
    w_fc:   (L, C) fc_write weight (L = 3N + 6)
    b_fc:   (L,)   fc_write bias
    memory: (M, N) initial memory
    w_last0:(1, M) initial addressing weight
    returns (memory_out (M, N), w_seq (T, M))
    """
    T, C = x_seq.shape
    M, N = memory.shape
    L = w_fc.shape[0]
    L_pad = ((L + 127) // 128) * 128                       # lane-align fc output

    w_fc_pad = jnp.zeros((L_pad, C), jnp.float32).at[:L, :].set(w_fc)
    b_pad = jnp.zeros((1, L_pad), jnp.float32).at[0, :L].set(b_fc)
    mem_nm = memory.T                                      # (N, M): slots on lanes

    mem_out_nm, w_seq = pl.pallas_call(
        write_head_fused_kernel,
        out_shape=(jax.ShapeDtypeStruct((N, M), jnp.float32),
                   jax.ShapeDtypeStruct((T, M), jnp.float32)),
        grid_spec=pltpu.PrefetchScalarGridSpec(
            num_scalar_prefetch=0,
            grid=(1,),                                     # single invocation; loop is in-kernel
            in_specs=[
                pl.BlockSpec((T, C), lambda i: (0, 0)),        # x_seq (resident)
                pl.BlockSpec((L_pad, C), lambda i: (0, 0)),    # fc weight (resident)
                pl.BlockSpec((1, L_pad), lambda i: (0, 0)),    # fc bias (resident)
                pl.BlockSpec((N, M), lambda i: (0, 0)),        # initial memory
                pl.BlockSpec((1, M), lambda i: (0, 0)),        # initial w_last
            ],
            out_specs=(
                pl.BlockSpec((N, M), lambda i: (0, 0)),        # final memory
                pl.BlockSpec((T, M), lambda i: (0, 0)),        # w per step (resident)
            ),
            scratch_shapes=[
                pltpu.VMEM((T, N), jnp.float32),               # hoisted k per step
                pltpu.VMEM((T, 2 * N), jnp.float32),           # hoisted [a|e] per step
                pltpu.VMEM((T, 8 * M), jnp.float32),           # pre-broadcast scalars
            ],
        ),
        input_output_aliases={3: 0},                       # memory input reused for output
        compiler_params=pltpu.CompilerParams(
            dimension_semantics=("arbitrary",)),
    )(x_seq, w_fc_pad, b_pad, mem_nm, w_last0)

    return mem_out_nm.T, w_seq


# ---------------------------- pure-JAX reference -----------------------------
def _write_head_reference_step(x, w_fc, b_fc, memory, w_last):
    """Mirror of the PyTorch WriteHead.forward for a single step ((M, N) layout)."""
    M, N = memory.shape
    param = x @ w_fc.T + b_fc
    k = jnp.tanh(param[:, :N])
    beta = jax.nn.softplus(param[:, N:N + 1])
    g = jax.nn.sigmoid(param[:, N + 1:N + 2])
    s = jax.nn.softmax(param[:, N + 2:N + 5], axis=-1)
    gamma = 1.0 + jax.nn.softplus(param[:, N + 5:N + 6])
    a = jnp.tanh(param[:, N + 6:2 * N + 6])
    e = jax.nn.sigmoid(param[:, 2 * N + 6:3 * N + 6])

    dots = jnp.sum(memory * k, axis=-1)                                 # (M,)
    denom = jnp.maximum(jnp.linalg.norm(memory, axis=-1)
                        * jnp.linalg.norm(k, axis=-1), 1e-16)
    cos = dots / denom
    wc = jax.nn.softmax(beta * cos, axis=-1)                            # (1, M)
    wg = g * wc + (1.0 - g) * w_last                                    # (1, M)

    wv = wg[0]
    t = jnp.concatenate([wv[-1:], wv, wv[:1]])
    w_hat = s[0, 0] * t[:-2] + s[0, 1] * t[1:-1] + s[0, 2] * t[2:]      # (M,)
    w_hat = w_hat[None, :]
    w_pow = w_hat ** gamma
    w = w_pow / (jnp.sum(w_pow, axis=-1, keepdims=True) + 1e-16)        # (1, M)

    erase = jnp.outer(w[0], e[0])
    add = jnp.outer(w[0], a[0])
    mem_out = memory * (1.0 - erase) + add
    return mem_out, w


def write_head_reference_seq(x_seq, w_fc, b_fc, memory, w_last):
    ws = []
    for t in range(x_seq.shape[0]):
        memory, w = _write_head_reference_step(
            x_seq[t:t + 1], w_fc, b_fc, memory, w_last)
        w_last = w
        ws.append(w[0])
    return memory, jnp.stack(ws, axis=0)   # (M, N), (T, M)


if __name__ == "__main__":
    # M memory slots, N word size, C controller output width, T fused timesteps.
    # Batch stays 1 as required by the original module's _convolve assertion.
    M, N, C, T = 128, 32, 64, 8
    L = 3 * N + 6

    key = jax.random.PRNGKey(0)
    k1, k2, k3, k4 = jax.random.split(key, 4)

    # nn.init.xavier_uniform_(weight, gain=1.4); nn.init.normal_(bias, std=0.01)
    bound = 1.4 * math.sqrt(6.0 / (C + L))
    w_fc = jax.random.uniform(k1, (L, C), jnp.float32, -bound, bound)
    b_fc = 0.01 * jax.random.normal(k2, (L,), jnp.float32)

    x_seq = jax.random.normal(k3, (T, C), jnp.float32)
    memory = jax.random.normal(k4, (M, N), jnp.float32)
    w_last0 = jnp.zeros((1, M), jnp.float32)     # Memory.reset_memory()

    mem_out, w_seq = write_head_forward_seq(x_seq, w_fc, b_fc, memory, w_last0)
    jax.block_until_ready((mem_out, w_seq))

    mem_ref, w_ref_seq = write_head_reference_seq(x_seq, w_fc, b_fc, memory, w_last0)
    assert mem_out.shape == (M, N) and w_seq.shape == (T, M)
    # tolerance covers MXU default-precision passes accumulated through the memory carry
    assert jnp.allclose(mem_out, mem_ref, atol=5e-3, rtol=5e-3)
    assert jnp.allclose(w_seq, w_ref_seq, atol=5e-3, rtol=5e-3)

    print("KERNEL_OK")
</pallas_src>

<mosaic_0001>
module attributes {stable_mosaic.version = 11 : i64} {
  func.func @write_head_fused_kernel(%arg0: i32, %arg1: memref<8x64xf32, #tpu.memory_space<vmem>>, %arg2: memref<128x64xf32, #tpu.memory_space<vmem>>, %arg3: memref<1x128xf32, #tpu.memory_space<vmem>>, %arg4: memref<32x128xf32, #tpu.memory_space<vmem>>, %arg5: memref<1x128xf32, #tpu.memory_space<vmem>>, %arg6: memref<32x128xf32, #tpu.memory_space<vmem>>, %arg7: memref<8x128xf32, #tpu.memory_space<vmem>>, %arg8: memref<8x32xf32, #tpu.memory_space<vmem>>, %arg9: memref<8x64xf32, #tpu.memory_space<vmem>>, %arg10: memref<8x1024xf32, #tpu.memory_space<vmem>>) attributes {dimension_semantics = [#tpu.dimension_semantics<arbitrary>], iteration_bounds = array<i64: 1>, scalar_prefetch = 0 : i64, scratch_operands = 3 : i64, tpu.core_type = #tpu.core_type<tc>, window_params = [{pipeline_mode = #tpu.pipeline_mode<synchronous>, transform_indices = @transform_0, window_bounds = array<i64: 8, 64>}, {pipeline_mode = #tpu.pipeline_mode<synchronous>, transform_indices = @transform_1, window_bounds = array<i64: 128, 64>}, {pipeline_mode = #tpu.pipeline_mode<synchronous>, transform_indices = @transform_2, window_bounds = array<i64: 1, 128>}, {pipeline_mode = #tpu.pipeline_mode<synchronous>, transform_indices = @transform_3, window_bounds = array<i64: 32, 128>}, {pipeline_mode = #tpu.pipeline_mode<synchronous>, transform_indices = @transform_4, window_bounds = array<i64: 1, 128>}, {pipeline_mode = #tpu.pipeline_mode<synchronous>, transform_indices = @transform_5, window_bounds = array<i64: 32, 128>}, {pipeline_mode = #tpu.pipeline_mode<synchronous>, transform_indices = @transform_6, window_bounds = array<i64: 8, 128>}]} {
    %c0 = arith.constant 0 : index
    %c0_0 = arith.constant 0 : index
    %0 = vector.load %arg1[%c0, %c0_0] : memref<8x64xf32, #tpu.memory_space<vmem>>, vector<8x64xf32>
    %c0_1 = arith.constant 0 : index
    %c0_2 = arith.constant 0 : index
    %1 = vector.load %arg2[%c0_1, %c0_2] : memref<128x64xf32, #tpu.memory_space<vmem>>, vector<128x64xf32>
    %c0_3 = arith.constant 0 : index
    %c0_4 = arith.constant 0 : index
    %2 = vector.load %arg3[%c0_3, %c0_4] : memref<1x128xf32, #tpu.memory_space<vmem>>, vector<1x128xf32>
    %cst = arith.constant dense<0.000000e+00> : vector<8x128xf32>
    %3 = tpu.matmul %0, %1, %cst {dimension_numbers = #tpu.dot_dimension_numbers<[1], [1], [0], [0], [0, 0, 1, 0], [], []>} : vector<8x64xf32>, vector<128x64xf32>, vector<8x128xf32> -> vector<8x128xf32>
    %4 = vector.broadcast %2 : vector<1x128xf32> to vector<8x128xf32>
    %5 = arith.addf %3, %4 : vector<8x128xf32>
    %6 = vector.extract_strided_slice %5 {offsets = [0, 0], sizes = [8, 32], strides = [1, 1]} : vector<8x128xf32> to vector<8x32xf32>
    %7 = math.tanh %6 : vector<8x32xf32>
    %8 = vector.extract_strided_slice %5 {offsets = [0, 32], sizes = [8, 1], strides = [1, 1]} : vector<8x128xf32> to vector<8x1xf32>
    %cst_5 = arith.constant 0.000000e+00 : f32
    %9 = vector.broadcast %cst_5 : f32 to vector<8x1xf32>
    %10 = arith.maximumf %8, %9 : vector<8x1xf32>
    %11 = math.absf %8 : vector<8x1xf32>
    %cst_6 = arith.constant 0.000000e+00 : f32
    %12 = vector.broadcast %cst_6 : f32 to vector<8x1xf32>
    %13 = arith.subf %12, %11 : vector<8x1xf32>
    %14 = math.exp %13 : vector<8x1xf32>
    %15 = math.log1p %14 : vector<8x1xf32>
    %16 = arith.addf %10, %15 : vector<8x1xf32>
    %17 = vector.extract_strided_slice %5 {offsets = [0, 33], sizes = [8, 1], strides = [1, 1]} : vector<8x128xf32> to vector<8x1xf32>
    %cst_7 = arith.constant 0.000000e+00 : f32
    %18 = vector.broadcast %cst_7 : f32 to vector<8x1xf32>
    %19 = arith.subf %18, %17 : vector<8x1xf32>
    %20 = math.exp %19 : vector<8x1xf32>
    %cst_8 = arith.constant 1.000000e+00 : f32
    %21 = vector.broadcast %cst_8 : f32 to vector<8x1xf32>
    %22 = arith.addf %21, %20 : vector<8x1xf32>
    %cst_9 = arith.constant 1.000000e+00 : f32
    %23 = vector.broadcast %cst_9 : f32 to vector<8x1xf32>
    %24 = arith.divf %23, %22 : vector<8x1xf32>
    %25 = vector.extract_strided_slice %5 {offsets = [0, 34], sizes = [8, 3], strides = [1, 1]} : vector<8x128xf32> to vector<8x3xf32>
    %26 = vector.extract_strided_slice %5 {offsets = [0, 37], sizes = [8, 1], strides = [1, 1]} : vector<8x128xf32> to vector<8x1xf32>
    %cst_10 = arith.constant 0.000000e+00 : f32
    %27 = vector.broadcast %cst_10 : f32 to vector<8x1xf32>
    %28 = arith.maximumf %26, %27 : vector<8x1xf32>
    %29 = math.absf %26 : vector<8x1xf32>
    %cst_11 = arith.constant 0.000000e+00 : f32
    %30 = vector.broadcast %cst_11 : f32 to vector<8x1xf32>
    %31 = arith.subf %30, %29 : vector<8x1xf32>
    %32 = math.exp %31 : vector<8x1xf32>
    %33 = math.log1p %32 : vector<8x1xf32>
    %34 = arith.addf %28, %33 : vector<8x1xf32>
    %cst_12 = arith.constant 1.000000e+00 : f32
    %35 = vector.broadcast %cst_12 : f32 to vector<8x1xf32>
    %36 = arith.addf %35, %34 : vector<8x1xf32>
    %37 = vector.extract_strided_slice %5 {offsets = [0, 38], sizes = [8, 64], strides = [1, 1]} : vector<8x128xf32> to vector<8x64xf32>
    %38 = tpu.iota {dimensions = array<i32: 1>} : vector<8x64xi32>
    %c32_i32 = arith.constant 32 : i32
    %39 = vector.broadcast %c32_i32 : i32 to vector<8x64xi32>
    %40 = arith.cmpi slt, %38, %39 : vector<8x64xi32>
    %41 = math.tanh %37 : vector<8x64xf32>
    %cst_13 = arith.constant 0.000000e+00 : f32
    %42 = vector.broadcast %cst_13 : f32 to vector<8x64xf32>
    %43 = arith.subf %42, %37 : vector<8x64xf32>
    %44 = math.exp %43 : vector<8x64xf32>
    %cst_14 = arith.constant 1.000000e+00 : f32
    %45 = vector.broadcast %cst_14 : f32 to vector<8x64xf32>
    %46 = arith.addf %45, %44 : vector<8x64xf32>
    %cst_15 = arith.constant 1.000000e+00 : f32
    %47 = vector.broadcast %cst_15 : f32 to vector<8x64xf32>
    %48 = arith.divf %47, %46 : vector<8x64xf32>
    %49 = arith.select %40, %41, %48 : vector<8x64xi1>, vector<8x64xf32>
    %cst_16 = arith.constant dense<0xFF800000> : vector<8xf32>
    %50 = vector.multi_reduction <maximumf>, %25, %cst_16 [1] : vector<8x3xf32> to vector<8xf32>
    %51 = vector.shape_cast %50 : vector<8xf32> to vector<8x1xf32>
    %52 = vector.broadcast %51 : vector<8x1xf32> to vector<8x3xf32>
    %53 = arith.subf %25, %52 : vector<8x3xf32>
    %54 = math.exp %53 : vector<8x3xf32>
    %cst_17 = arith.constant dense<0.000000e+00> : vector<8xf32>
    %55 = vector.multi_reduction <add>, %54, %cst_17 [1] : vector<8x3xf32> to vector<8xf32>
    %56 = vector.shape_cast %55 : vector<8xf32> to vector<8x1xf32>
    %57 = vector.broadcast %56 : vector<8x1xf32> to vector<8x3xf32>
    %58 = arith.divf %54, %57 : vector<8x3xf32>
    %59 = arith.mulf %7, %7 : vector<8x32xf32>
    %cst_18 = arith.constant dense<0.000000e+00> : vector<8xf32>
    %60 = vector.multi_reduction <add>, %59, %cst_18 [1] : vector<8x32xf32> to vector<8xf32>
    %61 = vector.shape_cast %60 : vector<8xf32> to vector<8x1xf32>
    %62 = math.sqrt %61 : vector<8x1xf32>
    %63 = vector.shape_cast %16 : vector<8x1xf32> to vector<8x1xf32>
    %64 = vector.broadcast %63 : vector<8x1xf32> to vector<8x128xf32>
    %65 = vector.shape_cast %24 : vector<8x1xf32> to vector<8x1xf32>
    %66 = vector.broadcast %65 : vector<8x1xf32> to vector<8x128xf32>
    %cst_19 = arith.constant 1.000000e+00 : f32
    %67 = vector.broadcast %cst_19 : f32 to vector<8x1xf32>
    %68 = arith.subf %67, %24 : vector<8x1xf32>
    %69 = vector.shape_cast %68 : vector<8x1xf32> to vector<8x1xf32>
    %70 = vector.broadcast %69 : vector<8x1xf32> to vector<8x128xf32>
    %71 = vector.shape_cast %36 : vector<8x1xf32> to vector<8x1xf32>
    %72 = vector.broadcast %71 : vector<8x1xf32> to vector<8x128xf32>
    %73 = vector.extract_strided_slice %58 {offsets = [0, 0], sizes = [8, 1], strides = [1, 1]} : vector<8x3xf32> to vector<8x1xf32>
    %74 = vector.shape_cast %73 : vector<8x1xf32> to vector<8x1xf32>
    %75 = vector.broadcast %74 : vector<8x1xf32> to vector<8x128xf32>
    %76 = vector.extract_strided_slice %58 {offsets = [0, 1], sizes = [8, 1], strides = [1, 1]} : vector<8x3xf32> to vector<8x1xf32>
    %77 = vector.shape_cast %76 : vector<8x1xf32> to vector<8x1xf32>
    %78 = vector.broadcast %77 : vector<8x1xf32> to vector<8x128xf32>
    %79 = vector.extract_strided_slice %58 {offsets = [0, 2], sizes = [8, 1], strides = [1, 1]} : vector<8x3xf32> to vector<8x1xf32>
    %80 = vector.shape_cast %79 : vector<8x1xf32> to vector<8x1xf32>
    %81 = vector.broadcast %80 : vector<8x1xf32> to vector<8x128xf32>
    %82 = vector.shape_cast %62 : vector<8x1xf32> to vector<8x1xf32>
    %83 = vector.broadcast %82 : vector<8x1xf32> to vector<8x128xf32>
    %84 = tpu.concatenate %64, %66, %70, %72, %75, %78, %81, %83 in 1 : vector<8x128xf32>, vector<8x128xf32>, vector<8x128xf32>, vector<8x128xf32>, vector<8x128xf32>, vector<8x128xf32>, vector<8x128xf32>, vector<8x128xf32> -> vector<8x1024xf32>
    %c0_20 = arith.constant 0 : index
    %c0_21 = arith.constant 0 : index
    %85 = vector.load %arg10[%c0_20, %c0_21] : memref<8x1024xf32, #tpu.memory_space<vmem>>, vector<8x1024xf32>
    tpu.vector_store %arg10[%c0_20, %c0_21], %84 {strides = array<i32>} : memref<8x1024xf32, #tpu.memory_space<vmem>>, vector<8x1024xf32>,
    %c0_22 = arith.constant 0 : index
    %c0_23 = arith.constant 0 : index
    %86 = vector.load %arg8[%c0_22, %c0_23] : memref<8x32xf32, #tpu.memory_space<vmem>>, vector<8x32xf32>
    tpu.vector_store %arg8[%c0_22, %c0_23], %7 {strides = array<i32>} : memref<8x32xf32, #tpu.memory_space<vmem>>, vector<8x32xf32>,
    %c0_24 = arith.constant 0 : index
    %c0_25 = arith.constant 0 : index
    %87 = vector.load %arg9[%c0_24, %c0_25] : memref<8x64xf32, #tpu.memory_space<vmem>>, vector<8x64xf32>
    tpu.vector_store %arg9[%c0_24, %c0_25], %49 {strides = array<i32>} : memref<8x64xf32, #tpu.memory_space<vmem>>, vector<8x64xf32>,
    %c0_26 = arith.constant 0 : index
    %c0_27 = arith.constant 0 : index
    %88 = vector.load %arg4[%c0_26, %c0_27] : memref<32x128xf32, #tpu.memory_space<vmem>>, vector<32x128xf32>
    %c0_28 = arith.constant 0 : index
    %c0_29 = arith.constant 0 : index
    %89 = vector.load %arg5[%c0_28, %c0_29] : memref<1x128xf32, #tpu.memory_space<vmem>>, vector<1x128xf32>
    %c0_i32 = arith.constant 0 : i32
    %90 = arith.index_cast %c0_i32 : i32 to index
    %c0_30 = arith.constant 0 : index
    %91 = vector.load %arg8[%90, %c0_30] : memref<8x32xf32, #tpu.memory_space<vmem>>, vector<1x32xf32>
    %92 = arith.index_cast %c0_i32 : i32 to index
    %c0_31 = arith.constant 0 : index
    %93 = vector.load %arg9[%92, %c0_31] : memref<8x64xf32, #tpu.memory_space<vmem>>, vector<1x64xf32>
    %94 = arith.index_cast %c0_i32 : i32 to index
    %c0_32 = arith.constant 0 : index
    %95 = vector.load %arg10[%94, %c0_32] : memref<8x1024xf32, #tpu.memory_space<vmem>>, vector<1x1024xf32>
    %96 = vector.extract_strided_slice %95 {offsets = [0, 0], sizes = [1, 128], strides = [1, 1]} : vector<1x1024xf32> to vector<1x128xf32>
    %97 = vector.extract_strided_slice %95 {offsets = [0, 128], sizes = [1, 128], strides = [1, 1]} : vector<1x1024xf32> to vector<1x128xf32>
    %98 = vector.extract_strided_slice %95 {offsets = [0, 256], sizes = [1, 128], strides = [1, 1]} : vector<1x1024xf32> to vector<1x128xf32>
    %99 = vector.extract_strided_slice %95 {offsets = [0, 384], sizes = [1, 128], strides = [1, 1]} : vector<1x1024xf32> to vector<1x128xf32>
    %100 = vector.extract_strided_slice %95 {offsets = [0, 512], sizes = [1, 128], strides = [1, 1]} : vector<1x1024xf32> to vector<1x128xf32>
    %101 = vector.extract_strided_slice %95 {offsets = [0, 640], sizes = [1, 128], strides = [1, 1]} : vector<1x1024xf32> to vector<1x128xf32>
    %102 = vector.extract_strided_slice %95 {offsets = [0, 768], sizes = [1, 128], strides = [1, 1]} : vector<1x1024xf32> to vector<1x128xf32>
    %103 = vector.extract_strided_slice %95 {offsets = [0, 896], sizes = [1, 128], strides = [1, 1]} : vector<1x1024xf32> to vector<1x128xf32>
    %cst_33 = arith.constant dense<0.000000e+00> : vector<1x128xf32>
    %104 = tpu.matmul %91, %88, %cst_33 {dimension_numbers = #tpu.dot_dimension_numbers<[1], [0], [0], [1], [0, 0, 1, 1], [], []>} : vector<1x32xf32>, vector<32x128xf32>, vector<1x128xf32> -> vector<1x128xf32>
    %105 = arith.mulf %88, %88 : vector<32x128xf32>
    %cst_34 = arith.constant dense<0.000000e+00> : vector<128xf32>
    %106 = vector.multi_reduction <add>, %105, %cst_34 [0] : vector<32x128xf32> to vector<128xf32>
    %107 = vector.shape_cast %106 : vector<128xf32> to vector<1x128xf32>
    %108 = math.sqrt %107 : vector<1x128xf32>
    %109 = arith.mulf %108, %103 : vector<1x128xf32>
    %cst_35 = arith.constant 1.000000e-16 : f32
    %110 = vector.broadcast %cst_35 : f32 to vector<1x128xf32>
    %111 = arith.maximumf %109, %110 : vector<1x128xf32>
    %112 = arith.divf %104, %111 : vector<1x128xf32>
    %113 = arith.mulf %96, %112 : vector<1x128xf32>
    %114 = arith.subf %113, %96 : vector<1x128xf32>
    %115 = math.exp %114 : vector<1x128xf32>
    %cst_36 = arith.constant dense<0.000000e+00> : vector<1xf32>
    %116 = vector.multi_reduction <add>, %115, %cst_36 [1] : vector<1x128xf32> to vector<1xf32>
    %117 = vector.shape_cast %116 : vector<1xf32> to vector<1x1xf32>
    %118 = vector.broadcast %117 : vector<1x1xf32> to vector<1x128xf32>
    %119 = arith.divf %115, %118 : vector<1x128xf32>
    %120 = arith.mulf %97, %119 : vector<1x128xf32>
    %121 = arith.mulf %98, %89 : vector<1x128xf32>
    %122 = arith.addf %120, %121 : vector<1x128xf32>
    %c1_i32 = arith.constant 1 : i32
    %123 = tpu.dynamic_rotate %122 by %c1_i32 dim 1 : vector<1x128xf32>, i32 -> vector<1x128xf32>
    %c127_i32 = arith.constant 127 : i32
    %124 = tpu.dynamic_rotate %122 by %c127_i32 dim 1 : vector<1x128xf32>, i32 -> vector<1x128xf32>
    %125 = arith.mulf %100, %123 : vector<1x128xf32>
    %126 = arith.mulf %101, %122 : vector<1x128xf32>
    %127 = arith.addf %125, %126 : vector<1x128xf32>
    %128 = arith.mulf %102, %124 : vector<1x128xf32>
    %129 = arith.addf %127, %128 : vector<1x128xf32>
    %cst_37 = arith.constant 1.000000e-16 : f32
    %130 = vector.broadcast %cst_37 : f32 to vector<1x128xf32>
    %131 = arith.maximumf %129, %130 : vector<1x128xf32>
    %132 = math.log %131 : vector<1x128xf32>
    %133 = arith.mulf %99, %132 : vector<1x128xf32>
    %134 = math.exp %133 : vector<1x128xf32>
    %cst_38 = arith.constant dense<0.000000e+00> : vector<1xf32>
    %135 = vector.multi_reduction <add>, %134, %cst_38 [1] : vector<1x128xf32> to vector<1xf32>
    %136 = vector.shape_cast %135 : vector<1xf32> to vector<1x1xf32>
    %cst_39 = arith.constant 1.000000e-16 : f32
    %137 = vector.broadcast %cst_39 : f32 to vector<1x1xf32>
    %138 = arith.addf %136, %137 : vector<1x1xf32>
    %139 = vector.broadcast %138 : vector<1x1xf32> to vector<1x128xf32>
    %140 = arith.divf %134, %139 : vector<1x128xf32>
    %cst_40 = arith.constant dense<0.000000e+00> : vector<64x128xf32>
    %141 = tpu.matmul %93, %140, %cst_40 {dimension_numbers = #tpu.dot_dimension_numbers<[0], [0], [1], [1], [0, 1, 1, 1], [], []>} : vector<1x64xf32>, vector<1x128xf32>, vector<64x128xf32> -> vector<64x128xf32>
    %142 = vector.extract_strided_slice %141 {offsets = [32, 0], sizes = [32, 128], strides = [1, 1]} : vector<64x128xf32> to vector<32x128xf32>
    %cst_41 = arith.constant 1.000000e+00 : f32
    %143 = vector.broadcast %cst_41 : f32 to vector<32x128xf32>
    %144 = arith.subf %143, %142 : vector<32x128xf32>
    %145 = arith.mulf %88, %144 : vector<32x128xf32>
    %146 = vector.extract_strided_slice %141 {offsets = [0, 0], sizes = [32, 128], strides = [1, 1]} : vector<64x128xf32> to vector<32x128xf32>
    %147 = arith.addf %145, %146 : vector<32x128xf32>
    %148 = arith.index_cast %c0_i32 : i32 to index
    %c0_42 = arith.constant 0 : index
    %149 = vector.load %arg7[%148, %c0_42] : memref<8x128xf32, #tpu.memory_space<vmem>>, vector<1x128xf32>
    tpu.vector_store %arg7[%148, %c0_42], %140 {strides = array<i32>} : memref<8x128xf32, #tpu.memory_space<vmem>>, vector<1x128xf32>,
    %c1_i32_43 = arith.constant 1 : i32
    %150 = arith.index_cast %c1_i32_43 : i32 to index
    %c0_44 = arith.constant 0 : index
    %151 = vector.load %arg8[%150, %c0_44] : memref<8x32xf32, #tpu.memory_space<vmem>>, vector<1x32xf32>
    %152 = arith.index_cast %c1_i32_43 : i32 to index
    %c0_45 = arith.constant 0 : index
    %153 = vector.load %arg9[%152, %c0_45] : memref<8x64xf32, #tpu.memory_space<vmem>>, vector<1x64xf32>
    %154 = arith.index_cast %c1_i32_43 : i32 to index
    %c0_46 = arith.constant 0 : index
    %155 = vector.load %arg10[%154, %c0_46] : memref<8x1024xf32, #tpu.memory_space<vmem>>, vector<1x1024xf32>
    %156 = vector.extract_strided_slice %155 {offsets = [0, 0], sizes = [1, 128], strides = [1, 1]} : vector<1x1024xf32> to vector<1x128xf32>
    %157 = vector.extract_strided_slice %155 {offsets = [0, 128], sizes = [1, 128], strides = [1, 1]} : vector<1x1024xf32> to vector<1x128xf32>
    %158 = vector.extract_strided_slice %155 {offsets = [0, 256], sizes = [1, 128], strides = [1, 1]} : vector<1x1024xf32> to vector<1x128xf32>
    %159 = vector.extract_strided_slice %155 {offsets = [0, 384], sizes = [1, 128], strides = [1, 1]} : vector<1x1024xf32> to vector<1x128xf32>
    %160 = vector.extract_strided_slice %155 {offsets = [0, 512], sizes = [1, 128], strides = [1, 1]} : vector<1x1024xf32> to vector<1x128xf32>
    %161 = vector.extract_strided_slice %155 {offsets = [0, 640], sizes = [1, 128], strides = [1, 1]} : vector<1x1024xf32> to vector<1x128xf32>
    %162 = vector.extract_strided_slice %155 {offsets = [0, 768], sizes = [1, 128], strides = [1, 1]} : vector<1x1024xf32> to vector<1x128xf32>
    %163 = vector.extract_strided_slice %155 {offsets = [0, 896], sizes = [1, 128], strides = [1, 1]} : vector<1x1024xf32> to vector<1x128xf32>
    %cst_47 = arith.constant dense<0.000000e+00> : vector<1x128xf32>
    %164 = tpu.matmul %151, %147, %cst_47 {dimension_numbers = #tpu.dot_dimension_numbers<[1], [0], [0], [1], [0, 0, 1, 1], [], []>} : vector<1x32xf32>, vector<32x128xf32>, vector<1x128xf32> -> vector<1x128xf32>
    %165 = arith.mulf %147, %147 : vector<32x128xf32>
    %cst_48 = arith.constant dense<0.000000e+00> : vector<128xf32>
    %166 = vector.multi_reduction <add>, %165, %cst_48 [0] : vector<32x128xf32> to vector<128xf32>
    %167 = vector.shape_cast %166 : vector<128xf32> to vector<1x128xf32>
    %168 = math.sqrt %167 : vector<1x128xf32>
    %169 = arith.mulf %168, %163 : vector<1x128xf32>
    %cst_49 = arith.constant 1.000000e-16 : f32
    %170 = vector.broadcast %cst_49 : f32 to vector<1x128xf32>
    %171 = arith.maximumf %169, %170 : vector<1x128xf32>
    %172 = arith.divf %164, %171 : vector<1x128xf32>
    %173 = arith.mulf %156, %172 : vector<1x128xf32>
    %174 = arith.subf %173, %156 : vector<1x128xf32>
    %175 = math.exp %174 : vector<1x128xf32>
    %cst_50 = arith.constant dense<0.000000e+00> : vector<1xf32>
    %176 = vector.multi_reduction <add>, %175, %cst_50 [1] : vector<1x128xf32> to vector<1xf32>
    %177 = vector.shape_cast %176 : vector<1xf32> to vector<1x1xf32>
    %178 = vector.broadcast %177 : vector<1x1xf32> to vector<1x128xf32>
    %179 = arith.divf %175, %178 : vector<1x128xf32>
    %180 = arith.mulf %157, %179 : vector<1x128xf32>
    %181 = arith.mulf %158, %140 : vector<1x128xf32>
    %182 = arith.addf %180, %181 : vector<1x128xf32>
    %c1_i32_51 = arith.constant 1 : i32
    %183 = tpu.dynamic_rotate %182 by %c1_i32_51 dim 1 : vector<1x128xf32>, i32 -> vector<1x128xf32>
    %c127_i32_52 = arith.constant 127 : i32
    %184 = tpu.dynamic_rotate %182 by %c127_i32_52 dim 1 : vector<1x128xf32>, i32 -> vector<1x128xf32>
    %185 = arith.mulf %160, %183 : vector<1x128xf32>
    %186 = arith.mulf %161, %182 : vector<1x128xf32>
    %187 = arith.addf %185, %186 : vector<1x128xf32>
    %188 = arith.mulf %162, %184 : vector<1x128xf32>
    %189 = arith.addf %187, %188 : vector<1x128xf32>
    %cst_53 = arith.constant 1.000000e-16 : f32
    %190 = vector.broadcast %cst_53 : f32 to vector<1x128xf32>
    %191 = arith.maximumf %189, %190 : vector<1x128xf32>
    %192 = math.log %191 : vector<1x128xf32>
    %193 = arith.mulf %159, %192 : vector<1x128xf32>
    %194 = math.exp %193 : vector<1x128xf32>
    %cst_54 = arith.constant dense<0.000000e+00> : vector<1xf32>
    %195 = vector.multi_reduction <add>, %194, %cst_54 [1] : vector<1x128xf32> to vector<1xf32>
    %196 = vector.shape_cast %195 : vector<1xf32> to vector<1x1xf32>
    %cst_55 = arith.constant 1.000000e-16 : f32
    %197 = vector.broadcast %cst_55 : f32 to vector<1x1xf32>
    %198 = arith.addf %196, %197 : vector<1x1xf32>
    %199 = vector.broadcast %198 : vector<1x1xf32> to vector<1x128xf32>
    %200 = arith.divf %194, %199 : vector<1x128xf32>
    %cst_56 = arith.constant dense<0.000000e+00> : vector<64x128xf32>
    %201 = tpu.matmul %153, %200, %cst_56 {dimension_numbers = #tpu.dot_dimension_numbers<[0], [0], [1], [1], [0, 1, 1, 1], [], []>} : vector<1x64xf32>, vector<1x128xf32>, vector<64x128xf32> -> vector<64x128xf32>
    %202 = vector.extract_strided_slice %201 {offsets = [32, 0], sizes = [32, 128], strides = [1, 1]} : vector<64x128xf32> to vector<32x128xf32>
    %cst_57 = arith.constant 1.000000e+00 : f32
    %203 = vector.broadcast %cst_57 : f32 to vector<32x128xf32>
    %204 = arith.subf %203, %202 : vector<32x128xf32>
    %205 = arith.mulf %147, %204 : vector<32x128xf32>
    %206 = vector.extract_strided_slice %201 {offsets = [0, 0], sizes = [32, 128], strides = [1, 1]} : vector<64x128xf32> to vector<32x128xf32>
    %207 = arith.addf %205, %206 : vector<32x128xf32>
    %208 = arith.index_cast %c1_i32_43 : i32 to index
    %c0_58 = arith.constant 0 : index
    %209 = vector.load %arg7[%208, %c0_58] : memref<8x128xf32, #tpu.memory_space<vmem>>, vector<1x128xf32>
    tpu.vector_store %arg7[%208, %c0_58], %200 {strides = array<i32>} : memref<8x128xf32, #tpu.memory_space<vmem>>, vector<1x128xf32>,
    %c2_i32 = arith.constant 2 : i32
    %210 = arith.index_cast %c2_i32 : i32 to index
    %c0_59 = arith.constant 0 : index
    %211 = vector.load %arg8[%210, %c0_59] : memref<8x32xf32, #tpu.memory_space<vmem>>, vector<1x32xf32>
    %212 = arith.index_cast %c2_i32 : i32 to index
    %c0_60 = arith.constant 0 : index
    %213 = vector.load %arg9[%212, %c0_60] : memref<8x64xf32, #tpu.memory_space<vmem>>, vector<1x64xf32>
    %214 = arith.index_cast %c2_i32 : i32 to index
    %c0_61 = arith.constant 0 : index
    %215 = vector.load %arg10[%214, %c0_61] : memref<8x1024xf32, #tpu.memory_space<vmem>>, vector<1x1024xf32>
    %216 = vector.extract_strided_slice %215 {offsets = [0, 0], sizes = [1, 128], strides = [1, 1]} : vector<1x1024xf32> to vector<1x128xf32>
    %217 = vector.extract_strided_slice %215 {offsets = [0, 128], sizes = [1, 128], strides = [1, 1]} : vector<1x1024xf32> to vector<1x128xf32>
    %218 = vector.extract_strided_slice %215 {offsets = [0, 256], sizes = [1, 128], strides = [1, 1]} : vector<1x1024xf32> to vector<1x128xf32>
    %219 = vector.extract_strided_slice %215 {offsets = [0, 384], sizes = [1, 128], strides = [1, 1]} : vector<1x1024xf32> to vector<1x128xf32>
    %220 = vector.extract_strided_slice %215 {offsets = [0, 512], sizes = [1, 128], strides = [1, 1]} : vector<1x1024xf32> to vector<1x128xf32>
    %221 = vector.extract_strided_slice %215 {offsets = [0, 640], sizes = [1, 128], strides = [1, 1]} : vector<1x1024xf32> to vector<1x128xf32>
    %222 = vector.extract_strided_slice %215 {offsets = [0, 768], sizes = [1, 128], strides = [1, 1]} : vector<1x1024xf32> to vector<1x128xf32>
    %223 = vector.extract_strided_slice %215 {offsets = [0, 896], sizes = [1, 128], strides = [1, 1]} : vector<1x1024xf32> to vector<1x128xf32>
    %cst_62 = arith.constant dense<0.000000e+00> : vector<1x128xf32>
    %224 = tpu.matmul %211, %207, %cst_62 {dimension_numbers = #tpu.dot_dimension_numbers<[1], [0], [0], [1], [0, 0, 1, 1], [], []>} : vector<1x32xf32>, vector<32x128xf32>, vector<1x128xf32> -> vector<1x128xf32>
    %225 = arith.mulf %207, %207 : vector<32x128xf32>
    %cst_63 = arith.constant dense<0.000000e+00> : vector<128xf32>
    %226 = vector.multi_reduction <add>, %225, %cst_63 [0] : vector<32x128xf32> to vector<128xf32>
    %227 = vector.shape_cast %226 : vector<128xf32> to vector<1x128xf32>
    %228 = math.sqrt %227 : vector<1x128xf32>
    %229 = arith.mulf %228, %223 : vector<1x128xf32>
    %cst_64 = arith.constant 1.000000e-16 : f32
    %230 = vector.broadcast %cst_64 : f32 to vector<1x128xf32>
    %231 = arith.maximumf %229, %230 : vector<1x128xf32>
    %232 = arith.divf %224, %231 : vector<1x128xf32>
    %233 = arith.mulf %216, %232 : vector<1x128xf32>
    %234 = arith.subf %233, %216 : vector<1x128xf32>
    %235 = math.exp %234 : vector<1x128xf32>
    %cst_65 = arith.constant dense<0.000000e+00> : vector<1xf32>
    %236 = vector.multi_reduction <add>, %235, %cst_65 [1] : vector<1x128xf32> to vector<1xf32>
    %237 = vector.shape_cast %236 : vector<1xf32> to vector<1x1xf32>
    %238 = vector.broadcast %237 : vector<1x1xf32> to vector<1x128xf32>
    %239 = arith.divf %235, %238 : vector<1x128xf32>
    %240 = arith.mulf %217, %239 : vector<1x128xf32>
    %241 = arith.mulf %218, %200 : vector<1x128xf32>
    %242 = arith.addf %240, %241 : vector<1x128xf32>
    %c1_i32_66 = arith.constant 1 : i32
    %243 = tpu.dynamic_rotate %242 by %c1_i32_66 dim 1 : vector<1x128xf32>, i32 -> vector<1x128xf32>
    %c127_i32_67 = arith.constant 127 : i32
    %244 = tpu.dynamic_rotate %242 by %c127_i32_67 dim 1 : vector<1x128xf32>, i32 -> vector<1x128xf32>
    %245 = arith.mulf %220, %243 : vector<1x128xf32>
    %246 = arith.mulf %221, %242 : vector<1x128xf32>
    %247 = arith.addf %245, %246 : vector<1x128xf32>
    %248 = arith.mulf %222, %244 : vector<1x128xf32>
    %249 = arith.addf %247, %248 : vector<1x128xf32>
    %cst_68 = arith.constant 1.000000e-16 : f32
    %250 = vector.broadcast %cst_68 : f32 to vector<1x128xf32>
    %251 = arith.maximumf %249, %250 : vector<1x128xf32>
    %252 = math.log %251 : vector<1x128xf32>
    %253 = arith.mulf %219, %252 : vector<1x128xf32>
    %254 = math.exp %253 : vector<1x128xf32>
    %cst_69 = arith.constant dense<0.000000e+00> : vector<1xf32>
    %255 = vector.multi_reduction <add>, %254, %cst_69 [1] : vector<1x128xf32> to vector<1xf32>
    %256 = vector.shape_cast %255 : vector<1xf32> to vector<1x1xf32>
    %cst_70 = arith.constant 1.000000e-16 : f32
    %257 = vector.broadcast %cst_70 : f32 to vector<1x1xf32>
    %258 = arith.addf %256, %257 : vector<1x1xf32>
    %259 = vector.broadcast %258 : vector<1x1xf32> to vector<1x128xf32>
    %260 = arith.divf %254, %259 : vector<1x128xf32>
    %cst_71 = arith.constant dense<0.000000e+00> : vector<64x128xf32>
    %261 = tpu.matmul %213, %260, %cst_71 {dimension_numbers = #tpu.dot_dimension_numbers<[0], [0], [1], [1], [0, 1, 1, 1], [], []>} : vector<1x64xf32>, vector<1x128xf32>, vector<64x128xf32> -> vector<64x128xf32>
    %262 = vector.extract_strided_slice %261 {offsets = [32, 0], sizes = [32, 128], strides = [1, 1]} : vector<64x128xf32> to vector<32x128xf32>
    %cst_72 = arith.constant 1.000000e+00 : f32
    %263 = vector.broadcast %cst_72 : f32 to vector<32x128xf32>
    %264 = arith.subf %263, %262 : vector<32x128xf32>
    %265 = arith.mulf %207, %264 : vector<32x128xf32>
    %266 = vector.extract_strided_slice %261 {offsets = [0, 0], sizes = [32, 128], strides = [1, 1]} : vector<64x128xf32> to vector<32x128xf32>
    %267 = arith.addf %265, %266 : vector<32x128xf32>
    %268 = arith.index_cast %c2_i32 : i32 to index
    %c0_73 = arith.constant 0 : index
    %269 = vector.load %arg7[%268, %c0_73] : memref<8x128xf32, #tpu.memory_space<vmem>>, vector<1x128xf32>
    tpu.vector_store %arg7[%268, %c0_73], %260 {strides = array<i32>} : memref<8x128xf32, #tpu.memory_space<vmem>>, vector<1x128xf32>,
    %c3_i32 = arith.constant 3 : i32
    %270 = arith.index_cast %c3_i32 : i32 to index
    %c0_74 = arith.constant 0 : index
    %271 = vector.load %arg8[%270, %c0_74] : memref<8x32xf32, #tpu.memory_space<vmem>>, vector<1x32xf32>
    %272 = arith.index_cast %c3_i32 : i32 to index
    %c0_75 = arith.constant 0 : index
    %273 = vector.load %arg9[%272, %c0_75] : memref<8x64xf32, #tpu.memory_space<vmem>>, vector<1x64xf32>
    %274 = arith.index_cast %c3_i32 : i32 to index
    %c0_76 = arith.constant 0 : index
    %275 = vector.load %arg10[%274, %c0_76] : memref<8x1024xf32, #tpu.memory_space<vmem>>, vector<1x1024xf32>
    %276 = vector.extract_strided_slice %275 {offsets = [0, 0], sizes = [1, 128], strides = [1, 1]} : vector<1x1024xf32> to vector<1x128xf32>
    %277 = vector.extract_strided_slice %275 {offsets = [0, 128], sizes = [1, 128], strides = [1, 1]} : vector<1x1024xf32> to vector<1x128xf32>
    %278 = vector.extract_strided_slice %275 {offsets = [0, 256], sizes = [1, 128], strides = [1, 1]} : vector<1x1024xf32> to vector<1x128xf32>
    %279 = vector.extract_strided_slice %275 {offsets = [0, 384], sizes = [1, 128], strides = [1, 1]} : vector<1x1024xf32> to vector<1x128xf32>
    %280 = vector.extract_strided_slice %275 {offsets = [0, 512], sizes = [1, 128], strides = [1, 1]} : vector<1x1024xf32> to vector<1x128xf32>
    %281 = vector.extract_strided_slice %275 {offsets = [0, 640], sizes = [1, 128], strides = [1, 1]} : vector<1x1024xf32> to vector<1x128xf32>
    %282 = vector.extract_strided_slice %275 {offsets = [0, 768], sizes = [1, 128], strides = [1, 1]} : vector<1x1024xf32> to vector<1x128xf32>
    %283 = vector.extract_strided_slice %275 {offsets = [0, 896], sizes = [1, 128], strides = [1, 1]} : vector<1x1024xf32> to vector<1x128xf32>
    %cst_77 = arith.constant dense<0.000000e+00> : vector<1x128xf32>
    %284 = tpu.matmul %271, %267, %cst_77 {dimension_numbers = #tpu.dot_dimension_numbers<[1], [0], [0], [1], [0, 0, 1, 1], [], []>} : vector<1x32xf32>, vector<32x128xf32>, vector<1x128xf32> -> vector<1x128xf32>
    %285 = arith.mulf %267, %267 : vector<32x128xf32>
    %cst_78 = arith.constant dense<0.000000e+00> : vector<128xf32>
    %286 = vector.multi_reduction <add>, %285, %cst_78 [0] : vector<32x128xf32> to vector<128xf32>
    %287 = vector.shape_cast %286 : vector<128xf32> to vector<1x128xf32>
    %288 = math.sqrt %287 : vector<1x128xf32>
    %289 = arith.mulf %288, %283 : vector<1x128xf32>
    %cst_79 = arith.constant 1.000000e-16 : f32
    %290 = vector.broadcast %cst_79 : f32 to vector<1x128xf32>
    %291 = arith.maximumf %289, %290 : vector<1x128xf32>
    %292 = arith.divf %284, %291 : vector<1x128xf32>
    %293 = arith.mulf %276, %292 : vector<1x128xf32>
    %294 = arith.subf %293, %276 : vector<1x128xf32>
    %295 = math.exp %294 : vector<1x128xf32>
    %cst_80 = arith.constant dense<0.000000e+00> : vector<1xf32>
    %296 = vector.multi_reduction <add>, %295, %cst_80 [1] : vector<1x128xf32> to vector<1xf32>
    %297 = vector.shape_cast %296 : vector<1xf32> to vector<1x1xf32>
    %298 = vector.broadcast %297 : vector<1x1xf32> to vector<1x128xf32>
    %299 = arith.divf %295, %298 : vector<1x128xf32>
    %300 = arith.mulf %277, %299 : vector<1x128xf32>
    %301 = arith.mulf %278, %260 : vector<1x128xf32>
    %302 = arith.addf %300, %301 : vector<1x128xf32>
    %c1_i32_81 = arith.constant 1 : i32
    %303 = tpu.dynamic_rotate %302 by %c1_i32_81 dim 1 : vector<1x128xf32>, i32 -> vector<1x128xf32>
    %c127_i32_82 = arith.constant 127 : i32
    %304 = tpu.dynamic_rotate %302 by %c127_i32_82 dim 1 : vector<1x128xf32>, i32 -> vector<1x128xf32>
    %305 = arith.mulf %280, %303 : vector<1x128xf32>
    %306 = arith.mulf %281, %302 : vector<1x128xf32>
    %307 = arith.addf %305, %306 : vector<1x128xf32>
    %308 = arith.mulf %282, %304 : vector<1x128xf32>
    %309 = arith.addf %307, %308 : vector<1x128xf32>
    %cst_83 = arith.constant 1.000000e-16 : f32
    %310 = vector.broadcast %cst_83 : f32 to vector<1x128xf32>
    %311 = arith.maximumf %309, %310 : vector<1x128xf32>
    %312 = math.log %311 : vector<1x128xf32>
    %313 = arith.mulf %279, %312 : vector<1x128xf32>
    %314 = math.exp %313 : vector<1x128xf32>
    %cst_84 = arith.constant dense<0.000000e+00> : vector<1xf32>
    %315 = vector.multi_reduction <add>, %314, %cst_84 [1] : vector<1x128xf32> to vector<1xf32>
    %316 = vector.shape_cast %315 : vector<1xf32> to vector<1x1xf32>
    %cst_85 = arith.constant 1.000000e-16 : f32
    %317 = vector.broadcast %cst_85 : f32 to vector<1x1xf32>
    %318 = arith.addf %316, %317 : vector<1x1xf32>
    %319 = vector.broadcast %318 : vector<1x1xf32> to vector<1x128xf32>
    %320 = arith.divf %314, %319 : vector<1x128xf32>
    %cst_86 = arith.constant dense<0.000000e+00> : vector<64x128xf32>
    %321 = tpu.matmul %273, %320, %cst_86 {dimension_numbers = #tpu.dot_dimension_numbers<[0], [0], [1], [1], [0, 1, 1, 1], [], []>} : vector<1x64xf32>, vector<1x128xf32>, vector<64x128xf32> -> vector<64x128xf32>
    %322 = vector.extract_strided_slice %321 {offsets = [32, 0], sizes = [32, 128], strides = [1, 1]} : vector<64x128xf32> to vector<32x128xf32>
    %cst_87 = arith.constant 1.000000e+00 : f32
    %323 = vector.broadcast %cst_87 : f32 to vector<32x128xf32>
    %324 = arith.subf %323, %322 : vector<32x128xf32>
    %325 = arith.mulf %267, %324 : vector<32x128xf32>
    %326 = vector.extract_strided_slice %321 {offsets = [0, 0], sizes = [32, 128], strides = [1, 1]} : vector<64x128xf32> to vector<32x128xf32>
    %327 = arith.addf %325, %326 : vector<32x128xf32>
    %328 = arith.index_cast %c3_i32 : i32 to index
    %c0_88 = arith.constant 0 : index
    %329 = vector.load %arg7[%328, %c0_88] : memref<8x128xf32, #tpu.memory_space<vmem>>, vector<1x128xf32>
    tpu.vector_store %arg7[%328, %c0_88], %320 {strides = array<i32>} : memref<8x128xf32, #tpu.memory_space<vmem>>, vector<1x128xf32>,
    %c4_i32 = arith.constant 4 : i32
    %330 = arith.index_cast %c4_i32 : i32 to index
    %c0_89 = arith.constant 0 : index
    %331 = vector.load %arg8[%330, %c0_89] : memref<8x32xf32, #tpu.memory_space<vmem>>, vector<1x32xf32>
    %332 = arith.index_cast %c4_i32 : i32 to index
    %c0_90 = arith.constant 0 : index
    %333 = vector.load %arg9[%332, %c0_90] : memref<8x64xf32, #tpu.memory_space<vmem>>, vector<1x64xf32>
    %334 = arith.index_cast %c4_i32 : i32 to index
    %c0_91 = arith.constant 0 : index
    %335 = vector.load %arg10[%334, %c0_91] : memref<8x1024xf32, #tpu.memory_space<vmem>>, vector<1x1024xf32>
    %336 = vector.extract_strided_slice %335 {offsets = [0, 0], sizes = [1, 128], strides = [1, 1]} : vector<1x1024xf32> to vector<1x128xf32>
    %337 = vector.extract_strided_slice %335 {offsets = [0, 128], sizes = [1, 128], strides = [1, 1]} : vector<1x1024xf32> to vector<1x128xf32>
    %338 = vector.extract_strided_slice %335 {offsets = [0, 256], sizes = [1, 128], strides = [1, 1]} : vector<1x1024xf32> to vector<1x128xf32>
    %339 = vector.extract_strided_slice %335 {offsets = [0, 384], sizes = [1, 128], strides = [1, 1]} : vector<1x1024xf32> to vector<1x128xf32>
    %340 = vector.extract_strided_slice %335 {offsets = [0, 512], sizes = [1, 128], strides = [1, 1]} : vector<1x1024xf32> to vector<1x128xf32>
    %341 = vector.extract_strided_slice %335 {offsets = [0, 640], sizes = [1, 128], strides = [1, 1]} : vector<1x1024xf32> to vector<1x128xf32>
    %342 = vector.extract_strided_slice %335 {offsets = [0, 768], sizes = [1, 128], strides = [1, 1]} : vector<1x1024xf32> to vector<1x128xf32>
    %343 = vector.extract_strided_slice %335 {offsets = [0, 896], sizes = [1, 128], strides = [1, 1]} : vector<1x1024xf32> to vector<1x128xf32>
    %cst_92 = arith.constant dense<0.000000e+00> : vector<1x128xf32>
    %344 = tpu.matmul %331, %327, %cst_92 {dimension_numbers = #tpu.dot_dimension_numbers<[1], [0], [0], [1], [0, 0, 1, 1], [], []>} : vector<1x32xf32>, vector<32x128xf32>, vector<1x128xf32> -> vector<1x128xf32>
    %345 = arith.mulf %327, %327 : vector<32x128xf32>
    %cst_93 = arith.constant dense<0.000000e+00> : vector<128xf32>
    %346 = vector.multi_reduction <add>, %345, %cst_93 [0] : vector<32x128xf32> to vector<128xf32>
    %347 = vector.shape_cast %346 : vector<128xf32> to vector<1x128xf32>
    %348 = math.sqrt %347 : vector<1x128xf32>
    %349 = arith.mulf %348, %343 : vector<1x128xf32>
    %cst_94 = arith.constant 1.000000e-16 : f32
    %350 = vector.broadcast %cst_94 : f32 to vector<1x128xf32>
    %351 = arith.maximumf %349, %350 : vector<1x128xf32>
    %352 = arith.divf %344, %351 : vector<1x128xf32>
    %353 = arith.mulf %336, %352 : vector<1x128xf32>
    %354 = arith.subf %353, %336 : vector<1x128xf32>
    %355 = math.exp %354 : vector<1x128xf32>
    %cst_95 = arith.constant dense<0.000000e+00> : vector<1xf32>
    %356 = vector.multi_reduction <add>, %355, %cst_95 [1] : vector<1x128xf32> to vector<1xf32>
    %357 = vector.shape_cast %356 : vector<1xf32> to vector<1x1xf32>
    %358 = vector.broadcast %357 : vector<1x1xf32> to vector<1x128xf32>
    %359 = arith.divf %355, %358 : vector<1x128xf32>
    %360 = arith.mulf %337, %359 : vector<1x128xf32>
    %361 = arith.mulf %338, %320 : vector<1x128xf32>
    %362 = arith.addf %360, %361 : vector<1x128xf32>
    %c1_i32_96 = arith.constant 1 : i32
    %363 = tpu.dynamic_rotate %362 by %c1_i32_96 dim 1 : vector<1x128xf32>, i32 -> vector<1x128xf32>
    %c127_i32_97 = arith.constant 127 : i32
    %364 = tpu.dynamic_rotate %362 by %c127_i32_97 dim 1 : vector<1x128xf32>, i32 -> vector<1x128xf32>
    %365 = arith.mulf %340, %363 : vector<1x128xf32>
    %366 = arith.mulf %341, %362 : vector<1x128xf32>
    %367 = arith.addf %365, %366 : vector<1x128xf32>
    %368 = arith.mulf %342, %364 : vector<1x128xf32>
    %369 = arith.addf %367, %368 : vector<1x128xf32>
    %cst_98 = arith.constant 1.000000e-16 : f32
    %370 = vector.broadcast %cst_98 : f32 to vector<1x128xf32>
    %371 = arith.maximumf %369, %370 : vector<1x128xf32>
    %372 = math.log %371 : vector<1x128xf32>
    %373 = arith.mulf %339, %372 : vector<1x128xf32>
    %374 = math.exp %373 : vector<1x128xf32>
    %cst_99 = arith.constant dense<0.000000e+00> : vector<1xf32>
    %375 = vector.multi_reduction <add>, %374, %cst_99 [1] : vector<1x128xf32> to vector<1xf32>
    %376 = vector.shape_cast %375 : vector<1xf32> to vector<1x1xf32>
    %cst_100 = arith.constant 1.000000e-16 : f32
    %377 = vector.broadcast %cst_100 : f32 to vector<1x1xf32>
    %378 = arith.addf %376, %377 : vector<1x1xf32>
    %379 = vector.broadcast %378 : vector<1x1xf32> to vector<1x128xf32>
    %380 = arith.divf %374, %379 : vector<1x128xf32>
    %cst_101 = arith.constant dense<0.000000e+00> : vector<64x128xf32>
    %381 = tpu.matmul %333, %380, %cst_101 {dimension_numbers = #tpu.dot_dimension_numbers<[0], [0], [1], [1], [0, 1, 1, 1], [], []>} : vector<1x64xf32>, vector<1x128xf32>, vector<64x128xf32> -> vector<64x128xf32>
    %382 = vector.extract_strided_slice %381 {offsets = [32, 0], sizes = [32, 128], strides = [1, 1]} : vector<64x128xf32> to vector<32x128xf32>
    %cst_102 = arith.constant 1.000000e+00 : f32
    %383 = vector.broadcast %cst_102 : f32 to vector<32x128xf32>
    %384 = arith.subf %383, %382 : vector<32x128xf32>
    %385 = arith.mulf %327, %384 : vector<32x128xf32>
    %386 = vector.extract_strided_slice %381 {offsets = [0, 0], sizes = [32, 128], strides = [1, 1]} : vector<64x128xf32> to vector<32x128xf32>
    %387 = arith.addf %385, %386 : vector<32x128xf32>
    %388 = arith.index_cast %c4_i32 : i32 to index
    %c0_103 = arith.constant 0 : index
    %389 = vector.load %arg7[%388, %c0_103] : memref<8x128xf32, #tpu.memory_space<vmem>>, vector<1x128xf32>
    tpu.vector_store %arg7[%388, %c0_103], %380 {strides = array<i32>} : memref<8x128xf32, #tpu.memory_space<vmem>>, vector<1x128xf32>,
    %c5_i32 = arith.constant 5 : i32
    %390 = arith.index_cast %c5_i32 : i32 to index
    %c0_104 = arith.constant 0 : index
    %391 = vector.load %arg8[%390, %c0_104] : memref<8x32xf32, #tpu.memory_space<vmem>>, vector<1x32xf32>
    %392 = arith.index_cast %c5_i32 : i32 to index
    %c0_105 = arith.constant 0 : index
    %393 = vector.load %arg9[%392, %c0_105] : memref<8x64xf32, #tpu.memory_space<vmem>>, vector<1x64xf32>
    %394 = arith.index_cast %c5_i32 : i32 to index
    %c0_106 = arith.constant 0 : index
    %395 = vector.load %arg10[%394, %c0_106] : memref<8x1024xf32, #tpu.memory_space<vmem>>, vector<1x1024xf32>
    %396 = vector.extract_strided_slice %395 {offsets = [0, 0], sizes = [1, 128], strides = [1, 1]} : vector<1x1024xf32> to vector<1x128xf32>
    %397 = vector.extract_strided_slice %395 {offsets = [0, 128], sizes = [1, 128], strides = [1, 1]} : vector<1x1024xf32> to vector<1x128xf32>
    %398 = vector.extract_strided_slice %395 {offsets = [0, 256], sizes = [1, 128], strides = [1, 1]} : vector<1x1024xf32> to vector<1x128xf32>
    %399 = vector.extract_strided_slice %395 {offsets = [0, 384], sizes = [1, 128], strides = [1, 1]} : vector<1x1024xf32> to vector<1x128xf32>
    %400 = vector.extract_strided_slice %395 {offsets = [0, 512], sizes = [1, 128], strides = [1, 1]} : vector<1x1024xf32> to vector<1x128xf32>
    %401 = vector.extract_strided_slice %395 {offsets = [0, 640], sizes = [1, 128], strides = [1, 1]} : vector<1x1024xf32> to vector<1x128xf32>
    %402 = vector.extract_strided_slice %395 {offsets = [0, 768], sizes = [1, 128], strides = [1, 1]} : vector<1x1024xf32> to vector<1x128xf32>
    %403 = vector.extract_strided_slice %395 {offsets = [0, 896], sizes = [1, 128], strides = [1, 1]} : vector<1x1024xf32> to vector<1x128xf32>
    %cst_107 = arith.constant dense<0.000000e+00> : vector<1x128xf32>
    %404 = tpu.matmul %391, %387, %cst_107 {dimension_numbers = #tpu.dot_dimension_numbers<[1], [0], [0], [1], [0, 0, 1, 1], [], []>} : vector<1x32xf32>, vector<32x128xf32>, vector<1x128xf32> -> vector<1x128xf32>
    %405 = arith.mulf %387, %387 : vector<32x128xf32>
    %cst_108 = arith.constant dense<0.000000e+00> : vector<128xf32>
    %406 = vector.multi_reduction <add>, %405, %cst_108 [0] : vector<32x128xf32> to vector<128xf32>
    %407 = vector.shape_cast %406 : vector<128xf32> to vector<1x128xf32>
    %408 = math.sqrt %407 : vector<1x128xf32>
    %409 = arith.mulf %408, %403 : vector<1x128xf32>
    %cst_109 = arith.constant 1.000000e-16 : f32
    %410 = vector.broadcast %cst_109 : f32 to vector<1x128xf32>
    %411 = arith.maximumf %409, %410 : vector<1x128xf32>
    %412 = arith.divf %404, %411 : vector<1x128xf32>
    %413 = arith.mulf %396, %412 : vector<1x128xf32>
    %414 = arith.subf %413, %396 : vector<1x128xf32>
    %415 = math.exp %414 : vector<1x128xf32>
    %cst_110 = arith.constant dense<0.000000e+00> : vector<1xf32>
    %416 = vector.multi_reduction <add>, %415, %cst_110 [1] : vector<1x128xf32> to vector<1xf32>
    %417 = vector.shape_cast %416 : vector<1xf32> to vector<1x1xf32>
    %418 = vector.broadcast %417 : vector<1x1xf32> to vector<1x128xf32>
    %419 = arith.divf %415, %418 : vector<1x128xf32>
    %420 = arith.mulf %397, %419 : vector<1x128xf32>
    %421 = arith.mulf %398, %380 : vector<1x128xf32>
    %422 = arith.addf %420, %421 : vector<1x128xf32>
    %c1_i32_111 = arith.constant 1 : i32
    %423 = tpu.dynamic_rotate %422 by %c1_i32_111 dim 1 : vector<1x128xf32>, i32 -> vector<1x128xf32>
    %c127_i32_112 = arith.constant 127 : i32
    %424 = tpu.dynamic_rotate %422 by %c127_i32_112 dim 1 : vector<1x128xf32>, i32 -> vector<1x128xf32>
    %425 = arith.mulf %400, %423 : vector<1x128xf32>
    %426 = arith.mulf %401, %422 : vector<1x128xf32>
    %427 = arith.addf %425, %426 : vector<1x128xf32>
    %428 = arith.mulf %402, %424 : vector<1x128xf32>
    %429 = arith.addf %427, %428 : vector<1x128xf32>
    %cst_113 = arith.constant 1.000000e-16 : f32
    %430 = vector.broadcast %cst_113 : f32 to vector<1x128xf32>
    %431 = arith.maximumf %429, %430 : vector<1x128xf32>
    %432 = math.log %431 : vector<1x128xf32>
    %433 = arith.mulf %399, %432 : vector<1x128xf32>
    %434 = math.exp %433 : vector<1x128xf32>
    %cst_114 = arith.constant dense<0.000000e+00> : vector<1xf32>
    %435 = vector.multi_reduction <add>, %434, %cst_114 [1] : vector<1x128xf32> to vector<1xf32>
    %436 = vector.shape_cast %435 : vector<1xf32> to vector<1x1xf32>
    %cst_115 = arith.constant 1.000000e-16 : f32
    %437 = vector.broadcast %cst_115 : f32 to vector<1x1xf32>
    %438 = arith.addf %436, %437 : vector<1x1xf32>
    %439 = vector.broadcast %438 : vector<1x1xf32> to vector<1x128xf32>
    %440 = arith.divf %434, %439 : vector<1x128xf32>
    %cst_116 = arith.constant dense<0.000000e+00> : vector<64x128xf32>
    %441 = tpu.matmul %393, %440, %cst_116 {dimension_numbers = #tpu.dot_dimension_numbers<[0], [0], [1], [1], [0, 1, 1, 1], [], []>} : vector<1x64xf32>, vector<1x128xf32>, vector<64x128xf32> -> vector<64x128xf32>
    %442 = vector.extract_strided_slice %441 {offsets = [32, 0], sizes = [32, 128], strides = [1, 1]} : vector<64x128xf32> to vector<32x128xf32>
    %cst_117 = arith.constant 1.000000e+00 : f32
    %443 = vector.broadcast %cst_117 : f32 to vector<32x128xf32>
    %444 = arith.subf %443, %442 : vector<32x128xf32>
    %445 = arith.mulf %387, %444 : vector<32x128xf32>
    %446 = vector.extract_strided_slice %441 {offsets = [0, 0], sizes = [32, 128], strides = [1, 1]} : vector<64x128xf32> to vector<32x128xf32>
    %447 = arith.addf %445, %446 : vector<32x128xf32>
    %448 = arith.index_cast %c5_i32 : i32 to index
    %c0_118 = arith.constant 0 : index
    %449 = vector.load %arg7[%448, %c0_118] : memref<8x128xf32, #tpu.memory_space<vmem>>, vector<1x128xf32>
    tpu.vector_store %arg7[%448, %c0_118], %440 {strides = array<i32>} : memref<8x128xf32, #tpu.memory_space<vmem>>, vector<1x128xf32>,
    %c6_i32 = arith.constant 6 : i32
    %450 = arith.index_cast %c6_i32 : i32 to index
    %c0_119 = arith.constant 0 : index
    %451 = vector.load %arg8[%450, %c0_119] : memref<8x32xf32, #tpu.memory_space<vmem>>, vector<1x32xf32>
    %452 = arith.index_cast %c6_i32 : i32 to index
    %c0_120 = arith.constant 0 : index
    %453 = vector.load %arg9[%452, %c0_120] : memref<8x64xf32, #tpu.memory_space<vmem>>, vector<1x64xf32>
    %454 = arith.index_cast %c6_i32 : i32 to index
    %c0_121 = arith.constant 0 : index
    %455 = vector.load %arg10[%454, %c0_121] : memref<8x1024xf32, #tpu.memory_space<vmem>>, vector<1x1024xf32>
    %456 = vector.extract_strided_slice %455 {offsets = [0, 0], sizes = [1, 128], strides = [1, 1]} : vector<1x1024xf32> to vector<1x128xf32>
    %457 = vector.extract_strided_slice %455 {offsets = [0, 128], sizes = [1, 128], strides = [1, 1]} : vector<1x1024xf32> to vector<1x128xf32>
    %458 = vector.extract_strided_slice %455 {offsets = [0, 256], sizes = [1, 128], strides = [1, 1]} : vector<1x1024xf32> to vector<1x128xf32>
    %459 = vector.extract_strided_slice %455 {offsets = [0, 384], sizes = [1, 128], strides = [1, 1]} : vector<1x1024xf32> to vector<1x128xf32>
    %460 = vector.extract_strided_slice %455 {offsets = [0, 512], sizes = [1, 128], strides = [1, 1]} : vector<1x1024xf32> to vector<1x128xf32>
    %461 = vector.extract_strided_slice %455 {offsets = [0, 640], sizes = [1, 128], strides = [1, 1]} : vector<1x1024xf32> to vector<1x128xf32>
    %462 = vector.extract_strided_slice %455 {offsets = [0, 768], sizes = [1, 128], strides = [1, 1]} : vector<1x1024xf32> to vector<1x128xf32>
    %463 = vector.extract_strided_slice %455 {offsets = [0, 896], sizes = [1, 128], strides = [1, 1]} : vector<1x1024xf32> to vector<1x128xf32>
    %cst_122 = arith.constant dense<0.000000e+00> : vector<1x128xf32>
    %464 = tpu.matmul %451, %447, %cst_122 {dimension_numbers = #tpu.dot_dimension_numbers<[1], [0], [0], [1], [0, 0, 1, 1], [], []>} : vector<1x32xf32>, vector<32x128xf32>, vector<1x128xf32> -> vector<1x128xf32>
    %465 = arith.mulf %447, %447 : vector<32x128xf32>
    %cst_123 = arith.constant dense<0.000000e+00> : vector<128xf32>
    %466 = vector.multi_reduction <add>, %465, %cst_123 [0] : vector<32x128xf32> to vector<128xf32>
    %467 = vector.shape_cast %466 : vector<128xf32> to vector<1x128xf32>
    %468 = math.sqrt %467 : vector<1x128xf32>
    %469 = arith.mulf %468, %463 : vector<1x128xf32>
    %cst_124 = arith.constant 1.000000e-16 : f32
    %470 = vector.broadcast %cst_124 : f32 to vector<1x128xf32>
    %471 = arith.maximumf %469, %470 : vector<1x128xf32>
    %472 = arith.divf %464, %471 : vector<1x128xf32>
    %473 = arith.mulf %456, %472 : vector<1x128xf32>
    %474 = arith.subf %473, %456 : vector<1x128xf32>
    %475 = math.exp %474 : vector<1x128xf32>
    %cst_125 = arith.constant dense<0.000000e+00> : vector<1xf32>
    %476 = vector.multi_reduction <add>, %475, %cst_125 [1] : vector<1x128xf32> to vector<1xf32>
    %477 = vector.shape_cast %476 : vector<1xf32> to vector<1x1xf32>
    %478 = vector.broadcast %477 : vector<1x1xf32> to vector<1x128xf32>
    %479 = arith.divf %475, %478 : vector<1x128xf32>
    %480 = arith.mulf %457, %479 : vector<1x128xf32>
    %481 = arith.mulf %458, %440 : vector<1x128xf32>
    %482 = arith.addf %480, %481 : vector<1x128xf32>
    %c1_i32_126 = arith.constant 1 : i32
    %483 = tpu.dynamic_rotate %482 by %c1_i32_126 dim 1 : vector<1x128xf32>, i32 -> vector<1x128xf32>
    %c127_i32_127 = arith.constant 127 : i32
    %484 = tpu.dynamic_rotate %482 by %c127_i32_127 dim 1 : vector<1x128xf32>, i32 -> vector<1x128xf32>
    %485 = arith.mulf %460, %483 : vector<1x128xf32>
    %486 = arith.mulf %461, %482 : vector<1x128xf32>
    %487 = arith.addf %485, %486 : vector<1x128xf32>
    %488 = arith.mulf %462, %484 : vector<1x128xf32>
    %489 = arith.addf %487, %488 : vector<1x128xf32>
    %cst_128 = arith.constant 1.000000e-16 : f32
    %490 = vector.broadcast %cst_128 : f32 to vector<1x128xf32>
    %491 = arith.maximumf %489, %490 : vector<1x128xf32>
    %492 = math.log %491 : vector<1x128xf32>
    %493 = arith.mulf %459, %492 : vector<1x128xf32>
    %494 = math.exp %493 : vector<1x128xf32>
    %cst_129 = arith.constant dense<0.000000e+00> : vector<1xf32>
    %495 = vector.multi_reduction <add>, %494, %cst_129 [1] : vector<1x128xf32> to vector<1xf32>
    %496 = vector.shape_cast %495 : vector<1xf32> to vector<1x1xf32>
    %cst_130 = arith.constant 1.000000e-16 : f32
    %497 = vector.broadcast %cst_130 : f32 to vector<1x1xf32>
    %498 = arith.addf %496, %497 : vector<1x1xf32>
    %499 = vector.broadcast %498 : vector<1x1xf32> to vector<1x128xf32>
    %500 = arith.divf %494, %499 : vector<1x128xf32>
    %cst_131 = arith.constant dense<0.000000e+00> : vector<64x128xf32>
    %501 = tpu.matmul %453, %500, %cst_131 {dimension_numbers = #tpu.dot_dimension_numbers<[0], [0], [1], [1], [0, 1, 1, 1], [], []>} : vector<1x64xf32>, vector<1x128xf32>, vector<64x128xf32> -> vector<64x128xf32>
    %502 = vector.extract_strided_slice %501 {offsets = [32, 0], sizes = [32, 128], strides = [1, 1]} : vector<64x128xf32> to vector<32x128xf32>
    %cst_132 = arith.constant 1.000000e+00 : f32
    %503 = vector.broadcast %cst_132 : f32 to vector<32x128xf32>
    %504 = arith.subf %503, %502 : vector<32x128xf32>
    %505 = arith.mulf %447, %504 : vector<32x128xf32>
    %506 = vector.extract_strided_slice %501 {offsets = [0, 0], sizes = [32, 128], strides = [1, 1]} : vector<64x128xf32> to vector<32x128xf32>
    %507 = arith.addf %505, %506 : vector<32x128xf32>
    %508 = arith.index_cast %c6_i32 : i32 to index
    %c0_133 = arith.constant 0 : index
    %509 = vector.load %arg7[%508, %c0_133] : memref<8x128xf32, #tpu.memory_space<vmem>>, vector<1x128xf32>
    tpu.vector_store %arg7[%508, %c0_133], %500 {strides = array<i32>} : memref<8x128xf32, #tpu.memory_space<vmem>>, vector<1x128xf32>,
    %c7_i32 = arith.constant 7 : i32
    %510 = arith.index_cast %c7_i32 : i32 to index
    %c0_134 = arith.constant 0 : index
    %511 = vector.load %arg8[%510, %c0_134] : memref<8x32xf32, #tpu.memory_space<vmem>>, vector<1x32xf32>
    %512 = arith.index_cast %c7_i32 : i32 to index
    %c0_135 = arith.constant 0 : index
    %513 = vector.load %arg9[%512, %c0_135] : memref<8x64xf32, #tpu.memory_space<vmem>>, vector<1x64xf32>
    %514 = arith.index_cast %c7_i32 : i32 to index
    %c0_136 = arith.constant 0 : index
    %515 = vector.load %arg10[%514, %c0_136] : memref<8x1024xf32, #tpu.memory_space<vmem>>, vector<1x1024xf32>
    %516 = vector.extract_strided_slice %515 {offsets = [0, 0], sizes = [1, 128], strides = [1, 1]} : vector<1x1024xf32> to vector<1x128xf32>
    %517 = vector.extract_strided_slice %515 {offsets = [0, 128], sizes = [1, 128], strides = [1, 1]} : vector<1x1024xf32> to vector<1x128xf32>
    %518 = vector.extract_strided_slice %515 {offsets = [0, 256], sizes = [1, 128], strides = [1, 1]} : vector<1x1024xf32> to vector<1x128xf32>
    %519 = vector.extract_strided_slice %515 {offsets = [0, 384], sizes = [1, 128], strides = [1, 1]} : vector<1x1024xf32> to vector<1x128xf32>
    %520 = vector.extract_strided_slice %515 {offsets = [0, 512], sizes = [1, 128], strides = [1, 1]} : vector<1x1024xf32> to vector<1x128xf32>
    %521 = vector.extract_strided_slice %515 {offsets = [0, 640], sizes = [1, 128], strides = [1, 1]} : vector<1x1024xf32> to vector<1x128xf32>
    %522 = vector.extract_strided_slice %515 {offsets = [0, 768], sizes = [1, 128], strides = [1, 1]} : vector<1x1024xf32> to vector<1x128xf32>
    %523 = vector.extract_strided_slice %515 {offsets = [0, 896], sizes = [1, 128], strides = [1, 1]} : vector<1x1024xf32> to vector<1x128xf32>
    %cst_137 = arith.constant dense<0.000000e+00> : vector<1x128xf32>
    %524 = tpu.matmul %511, %507, %cst_137 {dimension_numbers = #tpu.dot_dimension_numbers<[1], [0], [0], [1], [0, 0, 1, 1], [], []>} : vector<1x32xf32>, vector<32x128xf32>, vector<1x128xf32> -> vector<1x128xf32>
    %525 = arith.mulf %507, %507 : vector<32x128xf32>
    %cst_138 = arith.constant dense<0.000000e+00> : vector<128xf32>
    %526 = vector.multi_reduction <add>, %525, %cst_138 [0] : vector<32x128xf32> to vector<128xf32>
    %527 = vector.shape_cast %526 : vector<128xf32> to vector<1x128xf32>
    %528 = math.sqrt %527 : vector<1x128xf32>
    %529 = arith.mulf %528, %523 : vector<1x128xf32>
    %cst_139 = arith.constant 1.000000e-16 : f32
    %530 = vector.broadcast %cst_139 : f32 to vector<1x128xf32>
    %531 = arith.maximumf %529, %530 : vector<1x128xf32>
    %532 = arith.divf %524, %531 : vector<1x128xf32>
    %533 = arith.mulf %516, %532 : vector<1x128xf32>
    %534 = arith.subf %533, %516 : vector<1x128xf32>
    %535 = math.exp %534 : vector<1x128xf32>
    %cst_140 = arith.constant dense<0.000000e+00> : vector<1xf32>
    %536 = vector.multi_reduction <add>, %535, %cst_140 [1] : vector<1x128xf32> to vector<1xf32>
    %537 = vector.shape_cast %536 : vector<1xf32> to vector<1x1xf32>
    %538 = vector.broadcast %537 : vector<1x1xf32> to vector<1x128xf32>
    %539 = arith.divf %535, %538 : vector<1x128xf32>
    %540 = arith.mulf %517, %539 : vector<1x128xf32>
    %541 = arith.mulf %518, %500 : vector<1x128xf32>
    %542 = arith.addf %540, %541 : vector<1x128xf32>
    %c1_i32_141 = arith.constant 1 : i32
    %543 = tpu.dynamic_rotate %542 by %c1_i32_141 dim 1 : vector<1x128xf32>, i32 -> vector<1x128xf32>
    %c127_i32_142 = arith.constant 127 : i32
    %544 = tpu.dynamic_rotate %542 by %c127_i32_142 dim 1 : vector<1x128xf32>, i32 -> vector<1x128xf32>
    %545 = arith.mulf %520, %543 : vector<1x128xf32>
    %546 = arith.mulf %521, %542 : vector<1x128xf32>
    %547 = arith.addf %545, %546 : vector<1x128xf32>
    %548 = arith.mulf %522, %544 : vector<1x128xf32>
    %549 = arith.addf %547, %548 : vector<1x128xf32>
    %cst_143 = arith.constant 1.000000e-16 : f32
    %550 = vector.broadcast %cst_143 : f32 to vector<1x128xf32>
    %551 = arith.maximumf %549, %550 : vector<1x128xf32>
    %552 = math.log %551 : vector<1x128xf32>
    %553 = arith.mulf %519, %552 : vector<1x128xf32>
    %554 = math.exp %553 : vector<1x128xf32>
    %cst_144 = arith.constant dense<0.000000e+00> : vector<1xf32>
    %555 = vector.multi_reduction <add>, %554, %cst_144 [1] : vector<1x128xf32> to vector<1xf32>
    %556 = vector.shape_cast %555 : vector<1xf32> to vector<1x1xf32>
    %cst_145 = arith.constant 1.000000e-16 : f32
    %557 = vector.broadcast %cst_145 : f32 to vector<1x1xf32>
    %558 = arith.addf %556, %557 : vector<1x1xf32>
    %559 = vector.broadcast %558 : vector<1x1xf32> to vector<1x128xf32>
    %560 = arith.divf %554, %559 : vector<1x128xf32>
    %cst_146 = arith.constant dense<0.000000e+00> : vector<64x128xf32>
    %561 = tpu.matmul %513, %560, %cst_146 {dimension_numbers = #tpu.dot_dimension_numbers<[0], [0], [1], [1], [0, 1, 1, 1], [], []>} : vector<1x64xf32>, vector<1x128xf32>, vector<64x128xf32> -> vector<64x128xf32>
    %562 = vector.extract_strided_slice %561 {offsets = [32, 0], sizes = [32, 128], strides = [1, 1]} : vector<64x128xf32> to vector<32x128xf32>
    %cst_147 = arith.constant 1.000000e+00 : f32
    %563 = vector.broadcast %cst_147 : f32 to vector<32x128xf32>
    %564 = arith.subf %563, %562 : vector<32x128xf32>
    %565 = arith.mulf %507, %564 : vector<32x128xf32>
    %566 = vector.extract_strided_slice %561 {offsets = [0, 0], sizes = [32, 128], strides = [1, 1]} : vector<64x128xf32> to vector<32x128xf32>
    %567 = arith.addf %565, %566 : vector<32x128xf32>
    %568 = arith.index_cast %c7_i32 : i32 to index
    %c0_148 = arith.constant 0 : index
    %569 = vector.load %arg7[%568, %c0_148] : memref<8x128xf32, #tpu.memory_space<vmem>>, vector<1x128xf32>
    tpu.vector_store %arg7[%568, %c0_148], %560 {strides = array<i32>} : memref<8x128xf32, #tpu.memory_space<vmem>>, vector<1x128xf32>,
    %c8_i32 = arith.constant 8 : i32
    %c0_149 = arith.constant 0 : index
    %c0_150 = arith.constant 0 : index
    %570 = vector.load %arg6[%c0_149, %c0_150] : memref<32x128xf32, #tpu.memory_space<vmem>>, vector<32x128xf32>
    tpu.vector_store %arg6[%c0_149, %c0_150], %567 {strides = array<i32>} : memref<32x128xf32, #tpu.memory_space<vmem>>, vector<32x128xf32>,
    return
  }
  func.func @transform_0(%arg0: i32) -> (i32, i32) {
    %c0_i32 = arith.constant 0 : i32
    %c0_i32_0 = arith.constant 0 : i32
    %c0_i32_1 = arith.constant 0 : i32
    return %c0_i32, %c0_i32_0 : i32, i32
  }
  func.func @transform_1(%arg0: i32) -> (i32, i32) {
    %c0_i32 = arith.constant 0 : i32
    %c0_i32_0 = arith.constant 0 : i32
    %c0_i32_1 = arith.constant 0 : i32
    return %c0_i32, %c0_i32_0 : i32, i32
  }
  func.func @transform_2(%arg0: i32) -> (i32, i32) {
    %c0_i32 = arith.constant 0 : i32
    %c0_i32_0 = arith.constant 0 : i32
    %c0_i32_1 = arith.constant 0 : i32
    return %c0_i32, %c0_i32_0 : i32, i32
  }
  func.func @transform_3(%arg0: i32) -> (i32, i32) {
    %c0_i32 = arith.constant 0 : i32
    %c0_i32_0 = arith.constant 0 : i32
    %c0_i32_1 = arith.constant 0 : i32
    return %c0_i32, %c0_i32_0 : i32, i32
  }
  func.func @transform_4(%arg0: i32) -> (i32, i32) {
    %c0_i32 = arith.constant 0 : i32
    %c0_i32_0 = arith.constant 0 : i32
    %c0_i32_1 = arith.constant 0 : i32
    return %c0_i32, %c0_i32_0 : i32, i32
  }
  func.func @transform_5(%arg0: i32) -> (i32, i32) {
    %c0_i32 = arith.constant 0 : i32
    %c0_i32_0 = arith.constant 0 : i32
    %c0_i32_1 = arith.constant 0 : i32
    return %c0_i32, %c0_i32_0 : i32, i32
  }
  func.func @transform_6(%arg0: i32) -> (i32, i32) {
    %c0_i32 = arith.constant 0 : i32
    %c0_i32_0 = arith.constant 0 : i32
    %c0_i32_1 = arith.constant 0 : i32
    return %c0_i32, %c0_i32_0 : i32, i32
  }
}

</mosaic_0001>

<llo_original>
// kernel: write_head_forward_seq.1
$region0: #{write_head_forward_seq.1}
  #allocation0 [shape = 'u32[]', space=smem, size = 0x4, offset = 0x4, fixed_abs, tag = 'smem constant byte address 0x4 - core index']
  #allocation1 [shape = 'u32[72,128]{1,0:T(1,128)}', space=vmem, size = 0x9000, scoped, tag = 'internal scratch']
  #allocation2 [shape = 'f32[8,32]{1,0:T(8,128)}', space=vmem, size = 0x1000, scoped, tag = 'scratch operand']
  #allocation3 [shape = 'f32[8,64]{1,0:T(8,128)}', space=vmem, size = 0x1000, scoped, tag = 'scratch operand']
  #allocation4 [shape = 'f32[8,1024]{1,0:T(8,128)}', space=vmem, size = 0x8000, scoped, tag = 'scratch operand']
  %s0 = inlined_call_operand.vmem [shape: f32[8,64], index: 0, kind: input, shape index: {}]
  %s1 = inlined_call_operand.vmem [shape: f32[128,64], index: 1, kind: input, shape index: {}]
  %s2 = inlined_call_operand.vmem [shape: f32[1,128], index: 2, kind: input, shape index: {}]
  %s3 = inlined_call_operand.vmem [shape: f32[32,128], index: 3, kind: input, shape index: {}, may-alias: {3,5}]
  %s4 = inlined_call_operand.vmem [shape: f32[1,128], index: 4, kind: input, shape index: {}]
  %s5 = inlined_call_operand.vmem [shape: f32[32,128], index: 5, kind: output, shape index: {0}, may-alias: {3,5}]
  %s6 = inlined_call_operand.hbm [shape: f32[8,128], index: 6, kind: output, shape index: {1}]
  %7 = xla_tuple %s5, %s6
  %s8 = sld [smem:[#allocation0]]
  $region38: #{write_head_forward_seq.1} parent=0
    _
  %s10 = ssub.s32 1, %s8
  %s11 = scalar_select 0, %s10, %s8
  $region1: #{write_head_forward_seq.1} parent=0
    #allocation5 [shape = 'u8[4096]{0}', space=vmem, size = 0x1000, scoped, tag = 'output window, operand 1, single buffered']
    #allocation6 [shape = 's32[1]{0}', space=sflag, size = 0x4, scoped, tag = 'scoped memory for write_head_forward_seq.1']
    %12 = vsyncpa [#allocation6], 0
    // Predicated region
    $region2: #{write_head_forward_seq.1} parent=1 // pred_check
      _
    $region3: #{write_head_forward_seq.1} parent=1 // pred_check_branch
      %14 = sbr.rel (0) target = $region5
    $region4: #{write_head_forward_seq.1} parent=1 // pred_region
      _
    $region5: #{write_head_forward_seq.1} parent=1 // pred_fallthru
      _
    // Predicated region
    $region6: #{write_head_forward_seq.1} parent=1 // pred_check
      _
    $region7: #{write_head_forward_seq.1} parent=1 // pred_check_branch
      %16 = sbr.rel (0) target = $region9
    $region8: #{write_head_forward_seq.1} parent=1 // pred_region
      _
    $region9: #{write_head_forward_seq.1} parent=1 // pred_fallthru
      _
    // Predicated region
    $region10: #{write_head_forward_seq.1} parent=1 // pred_check
      _
    $region11: #{write_head_forward_seq.1} parent=1 // pred_check_branch
      %18 = sbr.rel (0) target = $region13
    $region12: #{write_head_forward_seq.1} parent=1 // pred_region
      _
    $region13: #{write_head_forward_seq.1} parent=1 // pred_fallthru
      _
    // Predicated region
    $region14: #{write_head_forward_seq.1} parent=1 // pred_check
      _
    $region15: #{write_head_forward_seq.1} parent=1 // pred_check_branch
      %20 = sbr.rel (0) target = $region17
    $region16: #{write_head_forward_seq.1} parent=1 // pred_region
      _
    $region17: #{write_head_forward_seq.1} parent=1 // pred_fallthru
      _
    // Predicated region
    $region18: #{write_head_forward_seq.1} parent=1 // pred_check
      _
    $region19: #{write_head_forward_seq.1} parent=1 // pred_check_branch
      %22 = sbr.rel (0) target = $region21
    $region20: #{write_head_forward_seq.1} parent=1 // pred_region
      _
    $region21: #{write_head_forward_seq.1} parent=1 // pred_fallthru
      _
    %v23 = vld [vmem:[%s0] sm:$0xff]
    %v24 = vld [vmem:[%s1] sm:$0xff]
    %v25 = vld [vmem:[%s1 + $0x8] sm:$0xff]
    %v26 = vld [vmem:[%s1 + $0x10] sm:$0xff]
    %v27 = vld [vmem:[%s1 + $0x18] sm:$0xff]
    %v28 = vld [vmem:[%s1 + $0x20] sm:$0xff]
    %v29 = vld [vmem:[%s1 + $0x28] sm:$0xff]
    %v30 = vld [vmem:[%s1 + $0x30] sm:$0xff]
    %v31 = vld [vmem:[%s1 + $0x38] sm:$0xff]
    %v32 = vld [vmem:[%s1 + $0x40] sm:$0xff]
    %v33 = vld [vmem:[%s1 + $0x48] sm:$0xff]
    %v34 = vld [vmem:[%s1 + $0x50] sm:$0xff]
    %v35 = vld [vmem:[%s1 + $0x58] sm:$0xff]
    %v36 = vld [vmem:[%s1 + $0x60] sm:$0xff]
    %v37 = vld [vmem:[%s1 + $0x68] sm:$0xff]
    %v38 = vld [vmem:[%s1 + $0x70] sm:$0xff]
    %v39 = vld [vmem:[%s1 + $0x78] sm:$0xff]
    %v40 = vld [vmem:[%s2] sm:$0x1]
    %v42 = vperm.slane %v40, 0
    %vm44 = vcmask 523264
    %v46 = vsel %vm44, %v23, 0
    %v49 = vsel %vm44, %v24, 0
    %v52 = vsel %vm44, %v25, 0
    %v55 = vsel %vm44, %v26, 0
    %v58 = vsel %vm44, %v27, 0
    %v61 = vsel %vm44, %v28, 0
    %v64 = vsel %vm44, %v29, 0
    %v67 = vsel %vm44, %v30, 0
    %v70 = vsel %vm44, %v31, 0
    %v73 = vsel %vm44, %v32, 0
    %v76 = vsel %vm44, %v33, 0
    %v79 = vsel %vm44, %v34, 0
    %v82 = vsel %vm44, %v35, 0
    %v85 = vsel %vm44, %v36, 0
    %v88 = vsel %vm44, %v37, 0
    %v91 = vsel %vm44, %v38, 0
    %v94 = vsel %vm44, %v39, 0
    %96 = vmatpush.xpose.msra.mxu0 %v94
    %97 = vmatpush.xpose.msra.mxu0 %v91
    %98 = vmatpush.xpose.msra.mxu0 %v88
    %99 = vmatpush.xpose.msra.mxu0 %v85
    %100 = vmatpush.xpose.msra.mxu0 %v82
    %101 = vmatpush.xpose.msra.mxu0 %v79
    %102 = vmatpush.xpose.msra.mxu0 %v76
    %103 = vmatpush.xpose.msra.mxu0 %v73
    %104 = vmatpush.xpose.msra.mxu0 %v70
    %105 = vmatpush.xpose.msra.mxu0 %v67
    %106 = vmatpush.xpose.msra.mxu0 %v64
    %107 = vmatpush.xpose.msra.mxu0 %v61
    %108 = vmatpush.xpose.msra.mxu0 %v58
    %109 = vmatpush.xpose.msra.mxu0 %v55
    %110 = vmatpush.xpose.msra.mxu0 %v52
    %111 = vmatpush.xpose.msra.mxu0 %v49
    %112 = vmatmul.f32.gmra.mxu0 %v46
    %v113 = vpop.f32.mrf.mxu0
    %v114 = vadd.f32 %v42, %v113
    %115 = vdwg.mxu0
    %v116 = vtanh.pop %v114
    %v117 = vmax.f32 %v114, 0.0
    %v118 = vand.u32 2147483647, %v114
    %v119 = vsub.f32 0.0, %v118
    %v120 = vmul.f32 %v119, 1.442695
    %v121 = vpow.pop %v120
    %v122 = vadd.f32 %v121, 1.0
    %v123 = vlog2.pop %v122
    %v124 = vmul.f32 %v123, 0.6931472
    %v125 = vmul.f32 -0.5, %v121
    %v126 = vadd.f32 %v125, 1.0
    %v127 = vmul.f32 %v126, %v121
    %v128 = vand.u32 2147483647, %v121
    %vm129 = vcmp.lt.f32.partialorder %v128, 0.0004427343
    %v130 = vsel %vm129, %v127, %v124
    %v131 = vadd.f32 %v117, %v130
    %v132 = vsub.f32 0.0, %v114
    %v133 = vmul.f32 %v132, 1.442695
    %v134 = vpow.pop %v133
    %v135 = vadd.f32 %v134, 1.0
    %v136 = vrcp.pop %v135
    %v137 = vmul.f32 %v135, %v136
    %v138 = vsub.f32 1.0, %v137
    %v139 = vmul.f32 %v136, %v138
    %v140 = vadd.f32 %v136, %v139
    %vm141 = vweird.f32 %v135
    %vm142 = vweird.f32 %v136
    %vm143 = vmor %vm141, %vm142
    %v144 = vsel %vm143, %v136, %v140
    %v145 = vand.u32 2147483647, %v135
    %vm146 = vcmp.eq.f32.partialorder %v145, 8.507059e+37
    %v147 = vand.u32 %v135, 2147483648
    %v148 = vor.u32 1.1754944e-38, %v147
    %v149 = vsel %vm146, %v148, %v144
    %v150 = vmul.f32 1.0, %v149
    %v151 = vadd.f32 %v131, 1.0
    %v152 = vlaneseq
    %v153 = vand.u32 %v152, 127
    %vm154 = vcmp.lt.s32.totalorder %v153, 32
    %156 = vrot.lane.b32.xlu0 %v116, 90
    %v157 = vpop.permute.xlu0 %156
    %160 = vrot.lane.b32.xlu0 %v150, 90
    %v161 = vpop.permute.xlu0 %160
    %v163 = vsel %vm154, %v157, %v161
    %vm164 = vcmask 302352
    %v165 = vsel %vm164, %v114, -inf
    %166 = vmax.xlane.f32.xlu0 %v165
    %v167 = vpop.xlane.xlu0 %166
    %v168 = vsub.f32 %v114, %v167
    %v169 = vmul.f32 %v168, 1.442695
    %v170 = vpow.pop %v169
    %172 = vrot.lane.b32.xlu0 %v170, 94
    %v173 = vpop.permute.xlu0 %172
    %vm175 = vcmask 23552
    %v176 = vsel %vm175, %v173, 0.0
    %177 = vadd.xlane.f32.xlu0 %v176
    %v178 = vpop.xlane.xlu0 %177
    %v179 = vrcp.pop %v178
    %v180 = vmul.f32 %v178, %v179
    %v181 = vsub.f32 1.0, %v180
    %v182 = vmul.f32 %v179, %v181
    %v183 = vadd.f32 %v179, %v182
    %vm184 = vweird.f32 %v178
    %vm185 = vweird.f32 %v179
    %vm186 = vmor %vm184, %vm185
    %v187 = vsel %vm186, %v179, %v183
    %v188 = vand.u32 2147483647, %v178
    %vm189 = vcmp.eq.f32.partialorder %v188, 8.507059e+37
    %v190 = vand.u32 %v178, 2147483648
    %v191 = vor.u32 1.1754944e-38, %v190
    %v192 = vsel %vm189, %v191, %v187
    %v193 = vmul.f32 %v170, %v192
    %v194 = vmul.f32 %v116, %v116
    %vm195 = vcmask 261120
    %v196 = vsel %vm195, %v194, 0.0
    %197 = vadd.xlane.f32.xlu0 %v196
    %v198 = vpop.xlane.xlu0 %197
    %v199 = vrsqrt.pop %v198
    %v200 = vmul.f32 %v199, %v198
    %v201 = vmul.f32 %v200, %v199
    %v202 = vmul.f32 0.5, %v201
    %v203 = vsub.f32 1.5, %v202
    %v204 = vmul.f32 %v199, %v203
    %v205 = vmul.f32 %v198, %v204
    %vm206 = vcmp.eq.f32.partialorder %v198, inf
    %v207 = vsel %vm206, %v198, %v205
    %vm208 = vcmp.eq.f32.partialorder %v198, 0.0
    %v209 = vand.u32 %v198, 2147483648
    %v210 = vsel %vm208, %v209, %v207
    %212 = vset.pattern.permute.xlu0 32
    %213 = vperm.xlu0 %212, %v131
    %v214 = vpop.permute.xlu0 %213
    %216 = vset.pattern.permute.xlu0 33
    %217 = vperm.xlu0 %216, %v150
    %v218 = vpop.permute.xlu0 %217
    %v220 = vsub.f32 1.0, %v150
    %222 = vset.pattern.permute.xlu0 33
    %223 = vperm.xlu0 %222, %v220
    %v224 = vpop.permute.xlu0 %223
    %227 = vset.pattern.permute.xlu0 37
    %228 = vperm.xlu0 %227, %v151
    %v229 = vpop.permute.xlu0 %228
    %232 = vset.pattern.permute.xlu0 34
    %233 = vperm.xlu0 %232, %v193
    %v234 = vpop.permute.xlu0 %233
    %236 = vset.pattern.permute.xlu0 35
    %237 = vperm.xlu0 %236, %v193
    %v238 = vpop.permute.xlu0 %237
    %240 = vset.pattern.permute.xlu0 36
    %241 = vperm.xlu0 %240, %v193
    %v242 = vpop.permute.xlu0 %241
    %244 = vst [vmem:[#allocation4] sm:$0xff] %v214
    %245 = vst [vmem:[#allocation4 + $0x8] sm:$0xff] %v218
    %246 = vst [vmem:[#allocation4 + $0x10] sm:$0xff] %v224
    %247 = vst [vmem:[#allocation4 + $0x18] sm:$0xff] %v229
    %248 = vst [vmem:[#allocation4 + $0x20] sm:$0xff] %v234
    %249 = vst [vmem:[#allocation4 + $0x28] sm:$0xff] %v238
    %250 = vst [vmem:[#allocation4 + $0x30] sm:$0xff] %v242
    %251 = vst [vmem:[#allocation4 + $0x38] sm:$0xff] %v210
    %252 = vst.msk [vmem:[#allocation2] sm:$0xff] %vm195, %v116
    %253 = vst.msk [vmem:[#allocation3] sm:$0xff] %vm44, %v163
    %v254 = vld [vmem:[%s3] sm:$0xff]
    %v255 = vld [vmem:[%s3 + $0x8] sm:$0xff]
    %v256 = vld [vmem:[%s3 + $0x10] sm:$0xff]
    %v257 = vld [vmem:[%s3 + $0x18] sm:$0xff]
    %v258 = vld [vmem:[%s4] sm:$0x1]
    %v259 = vld [vmem:[#allocation2] sm:$0x1]
    %v260 = vld [vmem:[#allocation3] sm:$0x1]
    %v261 = vld [vmem:[#allocation4] ss:$8 sm:$0xf]
    %v262 = vld [vmem:[#allocation4] ss:$8 sm:$0xf0]
    %v263 = vor.u32 %v261, %v262
    %v265 = vsel %vm195, %v259, 0
    %267 = vmatpush.msra.mxu0 0.0
    %268 = vmatpush.msra.mxu0 0.0
    %269 = vmatpush.msra.mxu0 0.0
    %270 = vmatpush.msra.mxu0 0.0
    %271 = vmatpush.msra.mxu0 0.0
    %272 = vmatpush.msra.mxu0 0.0
    %273 = vmatpush.msra.mxu0 0.0
    %274 = vmatpush.msra.mxu0 0.0
    %275 = vmatpush.msra.mxu0 0.0
    %276 = vmatpush.msra.mxu0 0.0
    %277 = vmatpush.msra.mxu0 0.0
    %278 = vmatpush.msra.mxu0 0.0
    %279 = vmatpush.msra.mxu0 %v257
    %280 = vmatpush.msra.mxu0 %v256
    %281 = vmatpush.msra.mxu0 %v255
    %282 = vmatpush.msra.mxu0 %v254
    %283 = vmatmul.f32.gmra.mxu0 %v265
    %v284 = vpop.f32.mrf.mxu0
    %v285 = vadd.f32 0.0, %v284
    %286 = vdwg.mxu0
    %v287 = vmul.f32 %v254, %v254
    %v288 = vmul.f32 %v255, %v255
    %v289 = vmul.f32 %v256, %v256
    %v290 = vmul.f32 %v257, %v257
    %v291 = vadd.f32 %v287, %v288
    %v292 = vadd.f32 %v291, %v289
    %v293 = vadd.f32 %v292, %v290
    %v294 = vrot.slane %v293, 4
    %v295 = vadd.f32 %v293, %v294
    %v296 = vrot.slane %v295, 2
    %v297 = vadd.f32 %v295, %v296
    %v298 = vrot.slane %v297, 1
    %v299 = vadd.f32 %v297, %v298
    %v300 = vrsqrt.pop %v299
    %v301 = vmul.f32 %v300, %v299
    %v302 = vmul.f32 %v301, %v300
    %v303 = vmul.f32 0.5, %v302
    %v304 = vsub.f32 1.5, %v303
    %v305 = vmul.f32 %v300, %v304
    %v306 = vmul.f32 %v299, %v305
    %vm307 = vcmp.eq.f32.partialorder %v299, inf
    %v308 = vsel %vm307, %v299, %v306
    %vm309 = vcmp.eq.f32.partialorder %v299, 0.0
    %v310 = vand.u32 %v299, 2147483648
    %v311 = vsel %vm309, %v310, %v308
    %v313 = vperm.slane %v263, 7
    %v315 = vmul.f32 %v311, %v313
    %v316 = vmax.f32 %v315, 1e-16
    %v317 = vrcp.pop %v316
    %v318 = vmul.f32 %v316, %v317
    %v319 = vsub.f32 1.0, %v318
    %v320 = vmul.f32 %v317, %v319
    %v321 = vadd.f32 %v317, %v320
    %vm322 = vweird.f32 %v316
    %vm323 = vweird.f32 %v317
    %vm324 = vmor %vm322, %vm323
    %v325 = vsel %vm324, %v317, %v321
    %v326 = vand.u32 2147483647, %v316
    %vm327 = vcmp.eq.f32.partialorder %v326, 8.507059e+37
    %v328 = vand.u32 %v316, 2147483648
    %v329 = vor.u32 1.1754944e-38, %v328
    %v330 = vsel %vm327, %v329, %v325
    %v331 = vmul.f32 %v285, %v330
    %v332 = vmul.f32 %v263, %v331
    %v333 = vsub.f32 %v332, %v263
    %v334 = vmul.f32 %v333, 1.442695
    %v335 = vpow.pop %v334
    %vm336 = vcmask 1040384
    %v337 = vsel %vm336, %v335, 0.0
    %338 = vadd.xlane.f32.xlu0 %v337
    %v339 = vpop.xlane.xlu0 %338
    %v340 = vrcp.pop %v339
    %v341 = vmul.f32 %v339, %v340
    %v342 = vsub.f32 1.0, %v341
    %v343 = vmul.f32 %v340, %v342
    %v344 = vadd.f32 %v340, %v343
    %vm345 = vweird.f32 %v339
    %vm346 = vweird.f32 %v340
    %vm347 = vmor %vm345, %vm346
    %v348 = vsel %vm347, %v340, %v344
    %v349 = vand.u32 2147483647, %v339
    %vm350 = vcmp.eq.f32.partialorder %v349, 8.507059e+37
    %v351 = vand.u32 %v339, 2147483648
    %v352 = vor.u32 1.1754944e-38, %v351
    %v353 = vsel %vm350, %v352, %v348
    %v354 = vmul.f32 %v335, %v353
    %v355 = vrot.slane %v263, 1
    %v357 = vmul.f32 %v355, %v354
    %v358 = vrot.slane %v263, 2
    %v360 = vmul.f32 %v358, %v258
    %v361 = vadd.f32 %v357, %v360
    %362 = vrot.lane.b32.xlu0 %v361, 1
    %v363 = vpop.permute.xlu0 %362
    %364 = vrot.lane.b32.xlu0 %v361, 127
    %v365 = vpop.permute.xlu0 %364
    %v366 = vrot.slane %v263, 4
    %v368 = vmul.f32 %v366, %v363
    %v369 = vrot.slane %v263, 5
    %v371 = vmul.f32 %v369, %v361
    %v372 = vadd.f32 %v368, %v371
    %v373 = vrot.slane %v263, 6
    %v375 = vmul.f32 %v373, %v365
    %v376 = vadd.f32 %v372, %v375
    %v377 = vmax.f32 %v376, 1e-16
    %v378 = vlog2.pop %v377
    %v379 = vmul.f32 %v378, 0.6931472
    %v380 = vrot.slane %v263, 3
    %v382 = vmul.f32 %v380, %v379
    %v383 = vmul.f32 %v382, 1.442695
    %v384 = vpow.pop %v383
    %v385 = vsel %vm336, %v384, 0.0
    %386 = vadd.xlane.f32.xlu0 %v385
    %v387 = vpop.xlane.xlu0 %386
    %v388 = vadd.f32 %v387, 1e-16
    %v389 = vrcp.pop %v388
    %v390 = vmul.f32 %v388, %v389
    %v391 = vsub.f32 1.0, %v390
    %v392 = vmul.f32 %v389, %v391
    %v393 = vadd.f32 %v389, %v392
    %vm394 = vweird.f32 %v388
    %vm395 = vweird.f32 %v389
    %vm396 = vmor %vm394, %vm395
    %v397 = vsel %vm396, %v389, %v393
    %v398 = vand.u32 2147483647, %v388
    %vm399 = vcmp.eq.f32.partialorder %v398, 8.507059e+37
    %v400 = vand.u32 %v388, 2147483648
    %v401 = vor.u32 1.1754944e-38, %v400
    %v402 = vsel %vm399, %v401, %v397
    %v403 = vmul.f32 %v384, %v402
    %404 = vxpose.xlu0.b32.start [1/16] %v260, 128
    %405 = vxpose.xlu0.b32.cont [2/16] 0.0, 128
    %406 = vxpose.xlu0.b32.cont [3/16] 0.0, 128
    %407 = vxpose.xlu0.b32.cont [4/16] 0.0, 128
    %408 = vxpose.xlu0.b32.cont [5/16] 0.0, 128
    %409 = vxpose.xlu0.b32.cont [6/16] 0.0, 128
    %410 = vxpose.xlu0.b32.cont [7/16] 0.0, 128
    %411 = vxpose.xlu0.b32.cont [8/16] 0.0, 128
    %412 = vxpose.xlu0.b32.cont [9/16] 0.0, 128
    %413 = vxpose.xlu0.b32.cont [10/16] 0.0, 128
    %414 = vxpose.xlu0.b32.cont [11/16] 0.0, 128
    %415 = vxpose.xlu0.b32.cont [12/16] 0.0, 128
    %416 = vxpose.xlu0.b32.cont [13/16] 0.0, 128
    %417 = vxpose.xlu0.b32.cont [14/16] 0.0, 128
    %418 = vxpose.xlu0.b32.cont [15/16] 0.0, 128
    %419 = vxpose.xlu0.b32.end [16/16] 0.0, 128
    %v420 = vpop.trf.xlu0
    %v421 = vpop.trf.xlu0
    %v422 = vpop.trf.xlu0
    %v423 = vpop.trf.xlu0
    %v424 = vpop.trf.xlu0
    %v425 = vpop.trf.xlu0
    %v426 = vpop.trf.xlu0
    %v427 = vpop.trf.xlu0
    %v428 = vpop.trf.xlu0
    %v429 = vpop.trf.xlu0
    %v430 = vpop.trf.xlu0
    %v431 = vpop.trf.xlu0
    %v432 = vpop.trf.xlu0
    %v433 = vpop.trf.xlu0
    %v434 = vpop.trf.xlu0
    %v435 = vpop.trf.xlu0
    %vm436 = vcmask 7168
    %v438 = vsel %vm436, %v420, 0
    %v441 = vsel %vm436, %v421, 0
    %v444 = vsel %vm436, %v422, 0
    %v447 = vsel %vm436, %v423, 0
    %v450 = vsel %vm436, %v424, 0
    %v453 = vsel %vm436, %v425, 0
    %v456 = vsel %vm436, %v426, 0
    %v459 = vsel %vm436, %v427, 0
    %v462 = vsel %vm336, %v403, 0
    %464 = vmatpush.msra.mxu0 0.0
    %465 = vmatpush.msra.mxu0 0.0
    %466 = vmatpush.msra.mxu0 0.0
    %467 = vmatpush.msra.mxu0 0.0
    %468 = vmatpush.msra.mxu0 0.0
    %469 = vmatpush.msra.mxu0 0.0
    %470 = vmatpush.msra.mxu0 0.0
    %471 = vmatpush.msra.mxu0 0.0
    %472 = vmatpush.msra.mxu0 0.0
    %473 = vmatpush.msra.mxu0 0.0
    %474 = vmatpush.msra.mxu0 0.0
    %475 = vmatpush.msra.mxu0 0.0
    %476 = vmatpush.msra.mxu0 0.0
    %477 = vmatpush.msra.mxu0 0.0
    %478 = vmatpush.msra.mxu0 0.0
    %479 = vmatpush.msra.mxu0 %v462
    %480 = vmatmul.f32.gmra.mxu0 %v438
    %v481 = vpop.f32.mrf.mxu0
    %v482 = vadd.f32 0.0, %v481
    %483 = vmatmul.f32.gmra.mxu0 %v441
    %v484 = vpop.f32.mrf.mxu0
    %v485 = vadd.f32 0.0, %v484
    %486 = vmatmul.f32.gmra.mxu0 %v444
    %v487 = vpop.f32.mrf.mxu0
    %v488 = vadd.f32 0.0, %v487
    %489 = vmatmul.f32.gmra.mxu0 %v447
    %v490 = vpop.f32.mrf.mxu0
    %v491 = vadd.f32 0.0, %v490
    %492 = vmatmul.f32.gmra.mxu0 %v450
    %v493 = vpop.f32.mrf.mxu0
    %v494 = vadd.f32 0.0, %v493
    %495 = vmatmul.f32.gmra.mxu0 %v453
    %v496 = vpop.f32.mrf.mxu0
    %v497 = vadd.f32 0.0, %v496
    %498 = vmatmul.f32.gmra.mxu0 %v456
    %v499 = vpop.f32.mrf.mxu0
    %v500 = vadd.f32 0.0, %v499
    %501 = vmatmul.f32.gmra.mxu0 %v459
    %v502 = vpop.f32.mrf.mxu0
    %v503 = vadd.f32 0.0, %v502
    %504 = vdwg.mxu0
    %v505 = vsub.f32 1.0, %v494
    %v506 = vsub.f32 1.0, %v497
    %v507 = vsub.f32 1.0, %v500
    %v508 = vsub.f32 1.0, %v503
    %v509 = vmul.f32 %v254, %v505
    %v510 = vmul.f32 %v255, %v506
    %v511 = vmul.f32 %v256, %v507
    %v512 = vmul.f32 %v257, %v508
    %v513 = vadd.f32 %v509, %v482
    %v514 = vadd.f32 %v510, %v485
    %v515 = vadd.f32 %v511, %v488
    %v516 = vadd.f32 %v512, %v491
    %517 = vst [vmem:[#allocation5] sm:$0x1] %v403
    %v518 = vld [vmem:[#allocation2 + $0x1] sm:$0x1]
    %v519 = vld [vmem:[#allocation3 + $0x1] sm:$0x1]
    %s520 = scalar_lea.vmem [#allocation4], 1
    %v521 = vld [vmem:[%s520] ss:$8 sm:$0xf]
    %v522 = vld [vmem:[%s520] ss:$8 sm:$0xf0]
    %v523 = vor.u32 %v521, %v522
    %v525 = vsel %vm195, %v518, 0
    %527 = vmatpush.msra.mxu0 0.0
    %528 = vmatpush.msra.mxu0 0.0
    %529 = vmatpush.msra.mxu0 0.0
    %530 = vmatpush.msra.mxu0 0.0
    %531 = vmatpush.msra.mxu0 0.0
    %532 = vmatpush.msra.mxu0 0.0
    %533 = vmatpush.msra.mxu0 0.0
    %534 = vmatpush.msra.mxu0 0.0
    %535 = vmatpush.msra.mxu0 0.0
    %536 = vmatpush.msra.mxu0 0.0
    %537 = vmatpush.msra.mxu0 0.0
    %538 = vmatpush.msra.mxu0 0.0
    %539 = vmatpush.msra.mxu0 %v516
    %540 = vmatpush.msra.mxu0 %v515
    %541 = vmatpush.msra.mxu0 %v514
    %542 = vmatpush.msra.mxu0 %v513
    %543 = vmatmul.f32.gmra.mxu0 %v525
    %v544 = vpop.f32.mrf.mxu0
    %v545 = vadd.f32 0.0, %v544
    %546 = vdwg.mxu0
    %v547 = vmul.f32 %v513, %v513
    %v548 = vmul.f32 %v514, %v514
    %v549 = vmul.f32 %v515, %v515
    %v550 = vmul.f32 %v516, %v516
    %v551 = vadd.f32 %v547, %v548
    %v552 = vadd.f32 %v551, %v549
    %v553 = vadd.f32 %v552, %v550
    %v554 = vrot.slane %v553, 4
    %v555 = vadd.f32 %v553, %v554
    %v556 = vrot.slane %v555, 2
    %v557 = vadd.f32 %v555, %v556
    %v558 = vrot.slane %v557, 1
    %v559 = vadd.f32 %v557, %v558
    %v560 = vrsqrt.pop %v559
    %v561 = vmul.f32 %v560, %v559
    %v562 = vmul.f32 %v561, %v560
    %v563 = vmul.f32 0.5, %v562
    %v564 = vsub.f32 1.5, %v563
    %v565 = vmul.f32 %v560, %v564
    %v566 = vmul.f32 %v559, %v565
    %vm567 = vcmp.eq.f32.partialorder %v559, inf
    %v568 = vsel %vm567, %v559, %v566
    %vm569 = vcmp.eq.f32.partialorder %v559, 0.0
    %v570 = vand.u32 %v559, 2147483648
    %v571 = vsel %vm569, %v570, %v568
    %v573 = vperm.slane %v523, 7
    %v575 = vmul.f32 %v571, %v573
    %v576 = vmax.f32 %v575, 1e-16
    %v577 = vrcp.pop %v576
    %v578 = vmul.f32 %v576, %v577
    %v579 = vsub.f32 1.0, %v578
    %v580 = vmul.f32 %v577, %v579
    %v581 = vadd.f32 %v577, %v580
    %vm582 = vweird.f32 %v576
    %vm583 = vweird.f32 %v577
    %vm584 = vmor %vm582, %vm583
    %v585 = vsel %vm584, %v577, %v581
    %v586 = vand.u32 2147483647, %v576
    %vm587 = vcmp.eq.f32.partialorder %v586, 8.507059e+37
    %v588 = vand.u32 %v576, 2147483648
    %v589 = vor.u32 1.1754944e-38, %v588
    %v590 = vsel %vm587, %v589, %v585
    %v591 = vmul.f32 %v545, %v590
    %v592 = vmul.f32 %v523, %v591
    %v593 = vsub.f32 %v592, %v523
    %v594 = vmul.f32 %v593, 1.442695
    %v595 = vpow.pop %v594
    %v596 = vsel %vm336, %v595, 0.0
    %597 = vadd.xlane.f32.xlu0 %v596
    %v598 = vpop.xlane.xlu0 %597
    %v599 = vrcp.pop %v598
    %v600 = vmul.f32 %v598, %v599
    %v601 = vsub.f32 1.0, %v600
    %v602 = vmul.f32 %v599, %v601
    %v603 = vadd.f32 %v599, %v602
    %vm604 = vweird.f32 %v598
    %vm605 = vweird.f32 %v599
    %vm606 = vmor %vm604, %vm605
    %v607 = vsel %vm606, %v599, %v603
    %v608 = vand.u32 2147483647, %v598
    %vm609 = vcmp.eq.f32.partialorder %v608, 8.507059e+37
    %v610 = vand.u32 %v598, 2147483648
    %v611 = vor.u32 1.1754944e-38, %v610
    %v612 = vsel %vm609, %v611, %v607
    %v613 = vmul.f32 %v595, %v612
    %v614 = vrot.slane %v523, 1
    %v616 = vmul.f32 %v614, %v613
    %v617 = vrot.slane %v523, 2
    %v619 = vmul.f32 %v617, %v403
    %v620 = vadd.f32 %v616, %v619
    %621 = vrot.lane.b32.xlu0 %v620, 1
    %v622 = vpop.permute.xlu0 %621
    %623 = vrot.lane.b32.xlu0 %v620, 127
    %v624 = vpop.permute.xlu0 %623
    %v625 = vrot.slane %v523, 4
    %v627 = vmul.f32 %v625, %v622
    %v628 = vrot.slane %v523, 5
    %v630 = vmul.f32 %v628, %v620
    %v631 = vadd.f32 %v627, %v630
    %v632 = vrot.slane %v523, 6
    %v634 = vmul.f32 %v632, %v624
    %v635 = vadd.f32 %v631, %v634
    %v636 = vmax.f32 %v635, 1e-16
    %v637 = vlog2.pop %v636
    %v638 = vmul.f32 %v637, 0.6931472
    %v639 = vrot.slane %v523, 3
    %v641 = vmul.f32 %v639, %v638
    %v642 = vmul.f32 %v641, 1.442695
    %v643 = vpow.pop %v642
    %v644 = vsel %vm336, %v643, 0.0
    %645 = vadd.xlane.f32.xlu0 %v644
    %v646 = vpop.xlane.xlu0 %645
    %v647 = vadd.f32 %v646, 1e-16
    %v648 = vrcp.pop %v647
    %v649 = vmul.f32 %v647, %v648
    %v650 = vsub.f32 1.0, %v649
    %v651 = vmul.f32 %v648, %v650
    %v652 = vadd.f32 %v648, %v651
    %vm653 = vweird.f32 %v647
    %vm654 = vweird.f32 %v648
    %vm655 = vmor %vm653, %vm654
    %v656 = vsel %vm655, %v648, %v652
    %v657 = vand.u32 2147483647, %v647
    %vm658 = vcmp.eq.f32.partialorder %v657, 8.507059e+37
    %v659 = vand.u32 %v647, 2147483648
    %v660 = vor.u32 1.1754944e-38, %v659
    %v661 = vsel %vm658, %v660, %v656
    %v662 = vmul.f32 %v643, %v661
    %663 = vxpose.xlu0.b32.start [1/16] %v519, 128
    %664 = vxpose.xlu0.b32.cont [2/16] 0.0, 128
    %665 = vxpose.xlu0.b32.cont [3/16] 0.0, 128
    %666 = vxpose.xlu0.b32.cont [4/16] 0.0, 128
    %667 = vxpose.xlu0.b32.cont [5/16] 0.0, 128
    %668 = vxpose.xlu0.b32.cont [6/16] 0.0, 128
    %669 = vxpose.xlu0.b32.cont [7/16] 0.0, 128
    %670 = vxpose.xlu0.b32.cont [8/16] 0.0, 128
    %671 = vxpose.xlu0.b32.cont [9/16] 0.0, 128
    %672 = vxpose.xlu0.b32.cont [10/16] 0.0, 128
    %673 = vxpose.xlu0.b32.cont [11/16] 0.0, 128
    %674 = vxpose.xlu0.b32.cont [12/16] 0.0, 128
    %675 = vxpose.xlu0.b32.cont [13/16] 0.0, 128
    %676 = vxpose.xlu0.b32.cont [14/16] 0.0, 128
    %677 = vxpose.xlu0.b32.cont [15/16] 0.0, 128
    %678 = vxpose.xlu0.b32.end [16/16] 0.0, 128
    %v679 = vpop.trf.xlu0
    %v680 = vpop.trf.xlu0
    %v681 = vpop.trf.xlu0
    %v682 = vpop.trf.xlu0
    %v683 = vpop.trf.xlu0
    %v684 = vpop.trf.xlu0
    %v685 = vpop.trf.xlu0
    %v686 = vpop.trf.xlu0
    %v687 = vpop.trf.xlu0
    %v688 = vpop.trf.xlu0
    %v689 = vpop.trf.xlu0
    %v690 = vpop.trf.xlu0
    %v691 = vpop.trf.xlu0
    %v692 = vpop.trf.xlu0
    %v693 = vpop.trf.xlu0
    %v694 = vpop.trf.xlu0
    %v696 = vsel %vm436, %v679, 0
    %v699 = vsel %vm436, %v680, 0
    %v702 = vsel %vm436, %v681, 0
    %v705 = vsel %vm436, %v682, 0
    %v708 = vsel %vm436, %v683, 0
    %v711 = vsel %vm436, %v684, 0
    %v714 = vsel %vm436, %v685, 0
    %v717 = vsel %vm436, %v686, 0
    %v720 = vsel %vm336, %v662, 0
    %722 = vmatpush.msra.mxu0 0.0
    %723 = vmatpush.msra.mxu0 0.0
    %724 = vmatpush.msra.mxu0 0.0
    %725 = vmatpush.msra.mxu0 0.0
    %726 = vmatpush.msra.mxu0 0.0
    %727 = vmatpush.msra.mxu0 0.0
    %728 = vmatpush.msra.mxu0 0.0
    %729 = vmatpush.msra.mxu0 0.0
    %730 = vmatpush.msra.mxu0 0.0
    %731 = vmatpush.msra.mxu0 0.0
    %732 = vmatpush.msra.mxu0 0.0
    %733 = vmatpush.msra.mxu0 0.0
    %734 = vmatpush.msra.mxu0 0.0
    %735 = vmatpush.msra.mxu0 0.0
    %736 = vmatpush.msra.mxu0 0.0
    %737 = vmatpush.msra.mxu0 %v720
    %738 = vmatmul.f32.gmra.mxu0 %v696
    %v739 = vpop.f32.mrf.mxu0
    %v740 = vadd.f32 0.0, %v739
    %741 = vmatmul.f32.gmra.mxu0 %v699
    %v742 = vpop.f32.mrf.mxu0
    %v743 = vadd.f32 0.0, %v742
    %744 = vmatmul.f32.gmra.mxu0 %v702
    %v745 = vpop.f32.mrf.mxu0
    %v746 = vadd.f32 0.0, %v745
    %747 = vmatmul.f32.gmra.mxu0 %v705
    %v748 = vpop.f32.mrf.mxu0
    %v749 = vadd.f32 0.0, %v748
    %750 = vmatmul.f32.gmra.mxu0 %v708
    %v751 = vpop.f32.mrf.mxu0
    %v752 = vadd.f32 0.0, %v751
    %753 = vmatmul.f32.gmra.mxu0 %v711
    %v754 = vpop.f32.mrf.mxu0
    %v755 = vadd.f32 0.0, %v754
    %756 = vmatmul.f32.gmra.mxu0 %v714
    %v757 = vpop.f32.mrf.mxu0
    %v758 = vadd.f32 0.0, %v757
    %759 = vmatmul.f32.gmra.mxu0 %v717
    %v760 = vpop.f32.mrf.mxu0
    %v761 = vadd.f32 0.0, %v760
    %762 = vdwg.mxu0
    %v763 = vsub.f32 1.0, %v752
    %v764 = vsub.f32 1.0, %v755
    %v765 = vsub.f32 1.0, %v758
    %v766 = vsub.f32 1.0, %v761
    %v767 = vmul.f32 %v513, %v763
    %v768 = vmul.f32 %v514, %v764
    %v769 = vmul.f32 %v515, %v765
    %v770 = vmul.f32 %v516, %v766
    %v771 = vadd.f32 %v767, %v740
    %v772 = vadd.f32 %v768, %v743
    %v773 = vadd.f32 %v769, %v746
    %v774 = vadd.f32 %v770, %v749
    %775 = vst [vmem:[#allocation5 + $0x1] sm:$0x1] %v662
    %v776 = vld [vmem:[#allocation2 + $0x2] sm:$0x1]
    %v777 = vld [vmem:[#allocation3 + $0x2] sm:$0x1]
    %s778 = scalar_lea.vmem [#allocation4], 2
    %v779 = vld [vmem:[%s778] ss:$8 sm:$0xf]
    %v780 = vld [vmem:[%s778] ss:$8 sm:$0xf0]
    %v781 = vor.u32 %v779, %v780
    %v783 = vsel %vm195, %v776, 0
    %785 = vmatpush.msra.mxu0 0.0
    %786 = vmatpush.msra.mxu0 0.0
    %787 = vmatpush.msra.mxu0 0.0
    %788 = vmatpush.msra.mxu0 0.0
    %789 = vmatpush.msra.mxu0 0.0
    %790 = vmatpush.msra.mxu0 0.0
    %791 = vmatpush.msra.mxu0 0.0
    %792 = vmatpush.msra.mxu0 0.0
    %793 = vmatpush.msra.mxu0 0.0
    %794 = vmatpush.msra.mxu0 0.0
    %795 = vmatpush.msra.mxu0 0.0
    %796 = vmatpush.msra.mxu0 0.0
    %797 = vmatpush.msra.mxu0 %v774
    %798 = vmatpush.msra.mxu0 %v773
    %799 = vmatpush.msra.mxu0 %v772
    %800 = vmatpush.msra.mxu0 %v771
    %801 = vmatmul.f32.gmra.mxu0 %v783
    %v802 = vpop.f32.mrf.mxu0
    %v803 = vadd.f32 0.0, %v802
    %804 = vdwg.mxu0
    %v805 = vmul.f32 %v771, %v771
    %v806 = vmul.f32 %v772, %v772
    %v807 = vmul.f32 %v773, %v773
    %v808 = vmul.f32 %v774, %v774
    %v809 = vadd.f32 %v805, %v806
    %v810 = vadd.f32 %v809, %v807
    %v811 = vadd.f32 %v810, %v808
    %v812 = vrot.slane %v811, 4
    %v813 = vadd.f32 %v811, %v812
    %v814 = vrot.slane %v813, 2
    %v815 = vadd.f32 %v813, %v814
    %v816 = vrot.slane %v815, 1
    %v817 = vadd.f32 %v815, %v816
    %v818 = vrsqrt.pop %v817
    %v819 = vmul.f32 %v818, %v817
    %v820 = vmul.f32 %v819, %v818
    %v821 = vmul.f32 0.5, %v820
    %v822 = vsub.f32 1.5, %v821
    %v823 = vmul.f32 %v818, %v822
    %v824 = vmul.f32 %v817, %v823
    %vm825 = vcmp.eq.f32.partialorder %v817, inf
    %v826 = vsel %vm825, %v817, %v824
    %vm827 = vcmp.eq.f32.partialorder %v817, 0.0
    %v828 = vand.u32 %v817, 2147483648
    %v829 = vsel %vm827, %v828, %v826
    %v831 = vperm.slane %v781, 7
    %v833 = vmul.f32 %v829, %v831
    %v834 = vmax.f32 %v833, 1e-16
    %v835 = vrcp.pop %v834
    %v836 = vmul.f32 %v834, %v835
    %v837 = vsub.f32 1.0, %v836
    %v838 = vmul.f32 %v835, %v837
    %v839 = vadd.f32 %v835, %v838
    %vm840 = vweird.f32 %v834
    %vm841 = vweird.f32 %v835
    %vm842 = vmor %vm840, %vm841
    %v843 = vsel %vm842, %v835, %v839
    %v844 = vand.u32 2147483647, %v834
    %vm845 = vcmp.eq.f32.partialorder %v844, 8.507059e+37
    %v846 = vand.u32 %v834, 2147483648
    %v847 = vor.u32 1.1754944e-38, %v846
    %v848 = vsel %vm845, %v847, %v843
    %v849 = vmul.f32 %v803, %v848
    %v850 = vmul.f32 %v781, %v849
    %v851 = vsub.f32 %v850, %v781
    %v852 = vmul.f32 %v851, 1.442695
    %v853 = vpow.pop %v852
    %v854 = vsel %vm336, %v853, 0.0
    %855 = vadd.xlane.f32.xlu0 %v854
    %v856 = vpop.xlane.xlu0 %855
    %v857 = vrcp.pop %v856
    %v858 = vmul.f32 %v856, %v857
    %v859 = vsub.f32 1.0, %v858
    %v860 = vmul.f32 %v857, %v859
    %v861 = vadd.f32 %v857, %v860
    %vm862 = vweird.f32 %v856
    %vm863 = vweird.f32 %v857
    %vm864 = vmor %vm862, %vm863
    %v865 = vsel %vm864, %v857, %v861
    %v866 = vand.u32 2147483647, %v856
    %vm867 = vcmp.eq.f32.partialorder %v866, 8.507059e+37
    %v868 = vand.u32 %v856, 2147483648
    %v869 = vor.u32 1.1754944e-38, %v868
    %v870 = vsel %vm867, %v869, %v865
    %v871 = vmul.f32 %v853, %v870
    %v872 = vrot.slane %v781, 1
    %v874 = vmul.f32 %v872, %v871
    %v875 = vrot.slane %v781, 2
    %v877 = vmul.f32 %v875, %v662
    %v878 = vadd.f32 %v874, %v877
    %879 = vrot.lane.b32.xlu0 %v878, 1
    %v880 = vpop.permute.xlu0 %879
    %881 = vrot.lane.b32.xlu0 %v878, 127
    %v882 = vpop.permute.xlu0 %881
    %v883 = vrot.slane %v781, 4
    %v885 = vmul.f32 %v883, %v880
    %v886 = vrot.slane %v781, 5
    %v888 = vmul.f32 %v886, %v878
    %v889 = vadd.f32 %v885, %v888
    %v890 = vrot.slane %v781, 6
    %v892 = vmul.f32 %v890, %v882
    %v893 = vadd.f32 %v889, %v892
    %v894 = vmax.f32 %v893, 1e-16
    %v895 = vlog2.pop %v894
    %v896 = vmul.f32 %v895, 0.6931472
    %v897 = vrot.slane %v781, 3
    %v899 = vmul.f32 %v897, %v896
    %v900 = vmul.f32 %v899, 1.442695
    %v901 = vpow.pop %v900
    %v902 = vsel %vm336, %v901, 0.0
    %903 = vadd.xlane.f32.xlu0 %v902
    %v904 = vpop.xlane.xlu0 %903
    %v905 = vadd.f32 %v904, 1e-16
    %v906 = vrcp.pop %v905
    %v907 = vmul.f32 %v905, %v906
    %v908 = vsub.f32 1.0, %v907
    %v909 = vmul.f32 %v906, %v908
    %v910 = vadd.f32 %v906, %v909
    %vm911 = vweird.f32 %v905
    %vm912 = vweird.f32 %v906
    %vm913 = vmor %vm911, %vm912
    %v914 = vsel %vm913, %v906, %v910
    %v915 = vand.u32 2147483647, %v905
    %vm916 = vcmp.eq.f32.partialorder %v915, 8.507059e+37
    %v917 = vand.u32 %v905, 2147483648
    %v918 = vor.u32 1.1754944e-38, %v917
    %v919 = vsel %vm916, %v918, %v914
    %v920 = vmul.f32 %v901, %v919
    %921 = vxpose.xlu0.b32.start [1/16] %v777, 128
    %922 = vxpose.xlu0.b32.cont [2/16] 0.0, 128
    %923 = vxpose.xlu0.b32.cont [3/16] 0.0, 128
    %924 = vxpose.xlu0.b32.cont [4/16] 0.0, 128
    %925 = vxpose.xlu0.b32.cont [5/16] 0.0, 128
    %926 = vxpose.xlu0.b32.cont [6/16] 0.0, 128
    %927 = vxpose.xlu0.b32.cont [7/16] 0.0, 128
    %928 = vxpose.xlu0.b32.cont [8/16] 0.0, 128
    %929 = vxpose.xlu0.b32.cont [9/16] 0.0, 128
    %930 = vxpose.xlu0.b32.cont [10/16] 0.0, 128
    %931 = vxpose.xlu0.b32.cont [11/16] 0.0, 128
    %932 = vxpose.xlu0.b32.cont [12/16] 0.0, 128
    %933 = vxpose.xlu0.b32.cont [13/16] 0.0, 128
    %934 = vxpose.xlu0.b32.cont [14/16] 0.0, 128
    %935 = vxpose.xlu0.b32.cont [15/16] 0.0, 128
    %936 = vxpose.xlu0.b32.end [16/16] 0.0, 128
    %v937 = vpop.trf.xlu0
    %v938 = vpop.trf.xlu0
    %v939 = vpop.trf.xlu0
    %v940 = vpop.trf.xlu0
    %v941 = vpop.trf.xlu0
    %v942 = vpop.trf.xlu0
    %v943 = vpop.trf.xlu0
    %v944 = vpop.trf.xlu0
    %v945 = vpop.trf.xlu0
    %v946 = vpop.trf.xlu0
    %v947 = vpop.trf.xlu0
    %v948 = vpop.trf.xlu0
    %v949 = vpop.trf.xlu0
    %v950 = vpop.trf.xlu0
    %v951 = vpop.trf.xlu0
    %v952 = vpop.trf.xlu0
    %v954 = vsel %vm436, %v937, 0
    %v957 = vsel %vm436, %v938, 0
    %v960 = vsel %vm436, %v939, 0
    %v963 = vsel %vm436, %v940, 0
    %v966 = vsel %vm436, %v941, 0
    %v969 = vsel %vm436, %v942, 0
    %v972 = vsel %vm436, %v943, 0
    %v975 = vsel %vm436, %v944, 0
    %v978 = vsel %vm336, %v920, 0
    %980 = vmatpush.msra.mxu0 0.0
    %981 = vmatpush.msra.mxu0 0.0
    %982 = vmatpush.msra.mxu0 0.0
    %983 = vmatpush.msra.mxu0 0.0
    %984 = vmatpush.msra.mxu0 0.0
    %985 = vmatpush.msra.mxu0 0.0
    %986 = vmatpush.msra.mxu0 0.0
    %987 = vmatpush.msra.mxu0 0.0
    %988 = vmatpush.msra.mxu0 0.0
    %989 = vmatpush.msra.mxu0 0.0
    %990 = vmatpush.msra.mxu0 0.0
    %991 = vmatpush.msra.mxu0 0.0
    %992 = vmatpush.msra.mxu0 0.0
    %993 = vmatpush.msra.mxu0 0.0
    %994 = vmatpush.msra.mxu0 0.0
    %995 = vmatpush.msra.mxu0 %v978
    %996 = vmatmul.f32.gmra.mxu0 %v954
    %v997 = vpop.f32.mrf.mxu0
    %v998 = vadd.f32 0.0, %v997
    %999 = vmatmul.f32.gmra.mxu0 %v957
    %v1000 = vpop.f32.mrf.mxu0
    %v1001 = vadd.f32 0.0, %v1000
    %1002 = vmatmul.f32.gmra.mxu0 %v960
    %v1003 = vpop.f32.mrf.mxu0
    %v1004 = vadd.f32 0.0, %v1003
    %1005 = vmatmul.f32.gmra.mxu0 %v963
    %v1006 = vpop.f32.mrf.mxu0
    %v1007 = vadd.f32 0.0, %v1006
    %1008 = vmatmul.f32.gmra.mxu0 %v966
    %v1009 = vpop.f32.mrf.mxu0
    %v1010 = vadd.f32 0.0, %v1009
    %1011 = vmatmul.f32.gmra.mxu0 %v969
    %v1012 = vpop.f32.mrf.mxu0
    %v1013 = vadd.f32 0.0, %v1012
    %1014 = vmatmul.f32.gmra.mxu0 %v972
    %v1015 = vpop.f32.mrf.mxu0
    %v1016 = vadd.f32 0.0, %v1015
    %1017 = vmatmul.f32.gmra.mxu0 %v975
    %v1018 = vpop.f32.mrf.mxu0
    %v1019 = vadd.f32 0.0, %v1018
    %1020 = vdwg.mxu0
    %v1021 = vsub.f32 1.0, %v1010
    %v1022 = vsub.f32 1.0, %v1013
    %v1023 = vsub.f32 1.0, %v1016
    %v1024 = vsub.f32 1.0, %v1019
    %v1025 = vmul.f32 %v771, %v1021
    %v1026 = vmul.f32 %v772, %v1022
    %v1027 = vmul.f32 %v773, %v1023
    %v1028 = vmul.f32 %v774, %v1024
    %v1029 = vadd.f32 %v1025, %v998
    %v1030 = vadd.f32 %v1026, %v1001
    %v1031 = vadd.f32 %v1027, %v1004
    %v1032 = vadd.f32 %v1028, %v1007
    %1033 = vst [vmem:[#allocation5 + $0x2] sm:$0x1] %v920
    %v1034 = vld [vmem:[#allocation2 + $0x3] sm:$0x1]
    %v1035 = vld [vmem:[#allocation3 + $0x3] sm:$0x1]
    %s1036 = scalar_lea.vmem [#allocation4], 3
    %v1037 = vld [vmem:[%s1036] ss:$8 sm:$0xf]
    %v1038 = vld [vmem:[%s1036] ss:$8 sm:$0xf0]
    %v1039 = vor.u32 %v1037, %v1038
    %v1041 = vsel %vm195, %v1034, 0
    %1043 = vmatpush.msra.mxu0 0.0
    %1044 = vmatpush.msra.mxu0 0.0
    %1045 = vmatpush.msra.mxu0 0.0
    %1046 = vmatpush.msra.mxu0 0.0
    %1047 = vmatpush.msra.mxu0 0.0
    %1048 = vmatpush.msra.mxu0 0.0
    %1049 = vmatpush.msra.mxu0 0.0
    %1050 = vmatpush.msra.mxu0 0.0
    %1051 = vmatpush.msra.mxu0 0.0
    %1052 = vmatpush.msra.mxu0 0.0
    %1053 = vmatpush.msra.mxu0 0.0
    %1054 = vmatpush.msra.mxu0 0.0
    %1055 = vmatpush.msra.mxu0 %v1032
    %1056 = vmatpush.msra.mxu0 %v1031
    %1057 = vmatpush.msra.mxu0 %v1030
    %1058 = vmatpush.msra.mxu0 %v1029
    %1059 = vmatmul.f32.gmra.mxu0 %v1041
    %v1060 = vpop.f32.mrf.mxu0
    %v1061 = vadd.f32 0.0, %v1060
    %1062 = vdwg.mxu0
    %v1063 = vmul.f32 %v1029, %v1029
    %v1064 = vmul.f32 %v1030, %v1030
    %v1065 = vmul.f32 %v1031, %v1031
    %v1066 = vmul.f32 %v1032, %v1032
    %v1067 = vadd.f32 %v1063, %v1064
    %v1068 = vadd.f32 %v1067, %v1065
    %v1069 = vadd.f32 %v1068, %v1066
    %v1070 = vrot.slane %v1069, 4
    %v1071 = vadd.f32 %v1069, %v1070
    %v1072 = vrot.slane %v1071, 2
    %v1073 = vadd.f32 %v1071, %v1072
    %v1074 = vrot.slane %v1073, 1
    %v1075 = vadd.f32 %v1073, %v1074
    %v1076 = vrsqrt.pop %v1075
    %v1077 = vmul.f32 %v1076, %v1075
    %v1078 = vmul.f32 %v1077, %v1076
    %v1079 = vmul.f32 0.5, %v1078
    %v1080 = vsub.f32 1.5, %v1079
    %v1081 = vmul.f32 %v1076, %v1080
    %v1082 = vmul.f32 %v1075, %v1081
    %vm1083 = vcmp.eq.f32.partialorder %v1075, inf
    %v1084 = vsel %vm1083, %v1075, %v1082
    %vm1085 = vcmp.eq.f32.partialorder %v1075, 0.0
    %v1086 = vand.u32 %v1075, 2147483648
    %v1087 = vsel %vm1085, %v1086, %v1084
    %v1089 = vperm.slane %v1039, 7
    %v1091 = vmul.f32 %v1087, %v1089
    %v1092 = vmax.f32 %v1091, 1e-16
    %v1093 = vrcp.pop %v1092
    %v1094 = vmul.f32 %v1092, %v1093
    %v1095 = vsub.f32 1.0, %v1094
    %v1096 = vmul.f32 %v1093, %v1095
    %v1097 = vadd.f32 %v1093, %v1096
    %vm1098 = vweird.f32 %v1092
    %vm1099 = vweird.f32 %v1093
    %vm1100 = vmor %vm1098, %vm1099
    %v1101 = vsel %vm1100, %v1093, %v1097
    %v1102 = vand.u32 2147483647, %v1092
    %vm1103 = vcmp.eq.f32.partialorder %v1102, 8.507059e+37
    %v1104 = vand.u32 %v1092, 2147483648
    %v1105 = vor.u32 1.1754944e-38, %v1104
    %v1106 = vsel %vm1103, %v1105, %v1101
    %v1107 = vmul.f32 %v1061, %v1106
    %v1108 = vmul.f32 %v1039, %v1107
    %v1109 = vsub.f32 %v1108, %v1039
    %v1110 = vmul.f32 %v1109, 1.442695
    %v1111 = vpow.pop %v1110
    %v1112 = vsel %vm336, %v1111, 0.0
    %1113 = vadd.xlane.f32.xlu0 %v1112
    %v1114 = vpop.xlane.xlu0 %1113
    %v1115 = vrcp.pop %v1114
    %v1116 = vmul.f32 %v1114, %v1115
    %v1117 = vsub.f32 1.0, %v1116
    %v1118 = vmul.f32 %v1115, %v1117
    %v1119 = vadd.f32 %v1115, %v1118
    %vm1120 = vweird.f32 %v1114
    %vm1121 = vweird.f32 %v1115
    %vm1122 = vmor %vm1120, %vm1121
    %v1123 = vsel %vm1122, %v1115, %v1119
    %v1124 = vand.u32 2147483647, %v1114
    %vm1125 = vcmp.eq.f32.partialorder %v1124, 8.507059e+37
    %v1126 = vand.u32 %v1114, 2147483648
    %v1127 = vor.u32 1.1754944e-38, %v1126
    %v1128 = vsel %vm1125, %v1127, %v1123
    %v1129 = vmul.f32 %v1111, %v1128
    %v1130 = vrot.slane %v1039, 1
    %v1132 = vmul.f32 %v1130, %v1129
    %v1133 = vrot.slane %v1039, 2
    %v1135 = vmul.f32 %v1133, %v920
    %v1136 = vadd.f32 %v1132, %v1135
    %1137 = vrot.lane.b32.xlu0 %v1136, 1
    %v1138 = vpop.permute.xlu0 %1137
    %1139 = vrot.lane.b32.xlu0 %v1136, 127
    %v1140 = vpop.permute.xlu0 %1139
    %v1141 = vrot.slane %v1039, 4
    %v1143 = vmul.f32 %v1141, %v1138
    %v1144 = vrot.slane %v1039, 5
    %v1146 = vmul.f32 %v1144, %v1136
    %v1147 = vadd.f32 %v1143, %v1146
    %v1148 = vrot.slane %v1039, 6
    %v1150 = vmul.f32 %v1148, %v1140
    %v1151 = vadd.f32 %v1147, %v1150
    %v1152 = vmax.f32 %v1151, 1e-16
    %v1153 = vlog2.pop %v1152
    %v1154 = vmul.f32 %v1153, 0.6931472
    %v1155 = vrot.slane %v1039, 3
    %v1157 = vmul.f32 %v1155, %v1154
    %v1158 = vmul.f32 %v1157, 1.442695
    %v1159 = vpow.pop %v1158
    %v1160 = vsel %vm336, %v1159, 0.0
    %1161 = vadd.xlane.f32.xlu0 %v1160
    %v1162 = vpop.xlane.xlu0 %1161
    %v1163 = vadd.f32 %v1162, 1e-16
    %v1164 = vrcp.pop %v1163
    %v1165 = vmul.f32 %v1163, %v1164
    %v1166 = vsub.f32 1.0, %v1165
    %v1167 = vmul.f32 %v1164, %v1166
    %v1168 = vadd.f32 %v1164, %v1167
    %vm1169 = vweird.f32 %v1163
    %vm1170 = vweird.f32 %v1164
    %vm1171 = vmor %vm1169, %vm1170
    %v1172 = vsel %vm1171, %v1164, %v1168
    %v1173 = vand.u32 2147483647, %v1163
    %vm1174 = vcmp.eq.f32.partialorder %v1173, 8.507059e+37
    %v1175 = vand.u32 %v1163, 2147483648
    %v1176 = vor.u32 1.1754944e-38, %v1175
    %v1177 = vsel %vm1174, %v1176, %v1172
    %v1178 = vmul.f32 %v1159, %v1177
    %1179 = vxpose.xlu0.b32.start [1/16] %v1035, 128
    %1180 = vxpose.xlu0.b32.cont [2/16] 0.0, 128
    %1181 = vxpose.xlu0.b32.cont [3/16] 0.0, 128
    %1182 = vxpose.xlu0.b32.cont [4/16] 0.0, 128
    %1183 = vxpose.xlu0.b32.cont [5/16] 0.0, 128
    %1184 = vxpose.xlu0.b32.cont [6/16] 0.0, 128
    %1185 = vxpose.xlu0.b32.cont [7/16] 0.0, 128
    %1186 = vxpose.xlu0.b32.cont [8/16] 0.0, 128
    %1187 = vxpose.xlu0.b32.cont [9/16] 0.0, 128
    %1188 = vxpose.xlu0.b32.cont [10/16] 0.0, 128
    %1189 = vxpose.xlu0.b32.cont [11/16] 0.0, 128
    %1190 = vxpose.xlu0.b32.cont [12/16] 0.0, 128
    %1191 = vxpose.xlu0.b32.cont [13/16] 0.0, 128
    %1192 = vxpose.xlu0.b32.cont [14/16] 0.0, 128
    %1193 = vxpose.xlu0.b32.cont [15/16] 0.0, 128
    %1194 = vxpose.xlu0.b32.end [16/16] 0.0, 128
    %v1195 = vpop.trf.xlu0
    %v1196 = vpop.trf.xlu0
    %v1197 = vpop.trf.xlu0
    %v1198 = vpop.trf.xlu0
    %v1199 = vpop.trf.xlu0
    %v1200 = vpop.trf.xlu0
    %v1201 = vpop.trf.xlu0
    %v1202 = vpop.trf.xlu0
    %v1203 = vpop.trf.xlu0
    %v1204 = vpop.trf.xlu0
    %v1205 = vpop.trf.xlu0
    %v1206 = vpop.trf.xlu0
    %v1207 = vpop.trf.xlu0
    %v1208 = vpop.trf.xlu0
    %v1209 = vpop.trf.xlu0
    %v1210 = vpop.trf.xlu0
    %v1212 = vsel %vm436, %v1195, 0
    %v1215 = vsel %vm436, %v1196, 0
    %v1218 = vsel %vm436, %v1197, 0
    %v1221 = vsel %vm436, %v1198, 0
    %v1224 = vsel %vm436, %v1199, 0
    %v1227 = vsel %vm436, %v1200, 0
    %v1230 = vsel %vm436, %v1201, 0
    %v1233 = vsel %vm436, %v1202, 0
    %v1236 = vsel %vm336, %v1178, 0
    %1238 = vmatpush.msra.mxu0 0.0
    %1239 = vmatpush.msra.mxu0 0.0
    %1240 = vmatpush.msra.mxu0 0.0
    %1241 = vmatpush.msra.mxu0 0.0
    %1242 = vmatpush.msra.mxu0 0.0
    %1243 = vmatpush.msra.mxu0 0.0
    %1244 = vmatpush.msra.mxu0 0.0
    %1245 = vmatpush.msra.mxu0 0.0
    %1246 = vmatpush.msra.mxu0 0.0
    %1247 = vmatpush.msra.mxu0 0.0
    %1248 = vmatpush.msra.mxu0 0.0
    %1249 = vmatpush.msra.mxu0 0.0
    %1250 = vmatpush.msra.mxu0 0.0
    %1251 = vmatpush.msra.mxu0 0.0
    %1252 = vmatpush.msra.mxu0 0.0
    %1253 = vmatpush.msra.mxu0 %v1236
    %1254 = vmatmul.f32.gmra.mxu0 %v1212
    %v1255 = vpop.f32.mrf.mxu0
    %v1256 = vadd.f32 0.0, %v1255
    %1257 = vmatmul.f32.gmra.mxu0 %v1215
    %v1258 = vpop.f32.mrf.mxu0
    %v1259 = vadd.f32 0.0, %v1258
    %1260 = vmatmul.f32.gmra.mxu0 %v1218
    %v1261 = vpop.f32.mrf.mxu0
    %v1262 = vadd.f32 0.0, %v1261
    %1263 = vmatmul.f32.gmra.mxu0 %v1221
    %v1264 = vpop.f32.mrf.mxu0
    %v1265 = vadd.f32 0.0, %v1264
    %1266 = vmatmul.f32.gmra.mxu0 %v1224
    %v1267 = vpop.f32.mrf.mxu0
    %v1268 = vadd.f32 0.0, %v1267
    %1269 = vmatmul.f32.gmra.mxu0 %v1227
    %v1270 = vpop.f32.mrf.mxu0
    %v1271 = vadd.f32 0.0, %v1270
    %1272 = vmatmul.f32.gmra.mxu0 %v1230
    %v1273 = vpop.f32.mrf.mxu0
    %v1274 = vadd.f32 0.0, %v1273
    %1275 = vmatmul.f32.gmra.mxu0 %v1233
    %v1276 = vpop.f32.mrf.mxu0
    %v1277 = vadd.f32 0.0, %v1276
    %1278 = vdwg.mxu0
    %v1279 = vsub.f32 1.0, %v1268
    %v1280 = vsub.f32 1.0, %v1271
    %v1281 = vsub.f32 1.0, %v1274
    %v1282 = vsub.f32 1.0, %v1277
    %v1283 = vmul.f32 %v1029, %v1279
    %v1284 = vmul.f32 %v1030, %v1280
    %v1285 = vmul.f32 %v1031, %v1281
    %v1286 = vmul.f32 %v1032, %v1282
    %v1287 = vadd.f32 %v1283, %v1256
    %v1288 = vadd.f32 %v1284, %v1259
    %v1289 = vadd.f32 %v1285, %v1262
    %v1290 = vadd.f32 %v1286, %v1265
    %1291 = vst [vmem:[#allocation5 + $0x3] sm:$0x1] %v1178
    %v1292 = vld [vmem:[#allocation2 + $0x4] sm:$0x1]
    %v1293 = vld [vmem:[#allocation3 + $0x4] sm:$0x1]
    %s1294 = scalar_lea.vmem [#allocation4], 4
    %v1295 = vld [vmem:[%s1294] ss:$8 sm:$0xf]
    %v1296 = vld [vmem:[%s1294] ss:$8 sm:$0xf0]
    %v1297 = vor.u32 %v1295, %v1296
    %v1299 = vsel %vm195, %v1292, 0
    %1301 = vmatpush.msra.mxu0 0.0
    %1302 = vmatpush.msra.mxu0 0.0
    %1303 = vmatpush.msra.mxu0 0.0
    %1304 = vmatpush.msra.mxu0 0.0
    %1305 = vmatpush.msra.mxu0 0.0
    %1306 = vmatpush.msra.mxu0 0.0
    %1307 = vmatpush.msra.mxu0 0.0
    %1308 = vmatpush.msra.mxu0 0.0
    %1309 = vmatpush.msra.mxu0 0.0
    %1310 = vmatpush.msra.mxu0 0.0
    %1311 = vmatpush.msra.mxu0 0.0
    %1312 = vmatpush.msra.mxu0 0.0
    %1313 = vmatpush.msra.mxu0 %v1290
    %1314 = vmatpush.msra.mxu0 %v1289
    %1315 = vmatpush.msra.mxu0 %v1288
    %1316 = vmatpush.msra.mxu0 %v1287
    %1317 = vmatmul.f32.gmra.mxu0 %v1299
    %v1318 = vpop.f32.mrf.mxu0
    %v1319 = vadd.f32 0.0, %v1318
    %1320 = vdwg.mxu0
    %v1321 = vmul.f32 %v1287, %v1287
    %v1322 = vmul.f32 %v1288, %v1288
    %v1323 = vmul.f32 %v1289, %v1289
    %v1324 = vmul.f32 %v1290, %v1290
    %v1325 = vadd.f32 %v1321, %v1322
    %v1326 = vadd.f32 %v1325, %v1323
    %v1327 = vadd.f32 %v1326, %v1324
    %v1328 = vrot.slane %v1327, 4
    %v1329 = vadd.f32 %v1327, %v1328
    %v1330 = vrot.slane %v1329, 2
    %v1331 = vadd.f32 %v1329, %v1330
    %v1332 = vrot.slane %v1331, 1
    %v1333 = vadd.f32 %v1331, %v1332
    %v1334 = vrsqrt.pop %v1333
    %v1335 = vmul.f32 %v1334, %v1333
    %v1336 = vmul.f32 %v1335, %v1334
    %v1337 = vmul.f32 0.5, %v1336
    %v1338 = vsub.f32 1.5, %v1337
    %v1339 = vmul.f32 %v1334, %v1338
    %v1340 = vmul.f32 %v1333, %v1339
    %vm1341 = vcmp.eq.f32.partialorder %v1333, inf
    %v1342 = vsel %vm1341, %v1333, %v1340
    %vm1343 = vcmp.eq.f32.partialorder %v1333, 0.0
    %v1344 = vand.u32 %v1333, 2147483648
    %v1345 = vsel %vm1343, %v1344, %v1342
    %v1347 = vperm.slane %v1297, 7
    %v1349 = vmul.f32 %v1345, %v1347
    %v1350 = vmax.f32 %v1349, 1e-16
    %v1351 = vrcp.pop %v1350
    %v1352 = vmul.f32 %v1350, %v1351
    %v1353 = vsub.f32 1.0, %v1352
    %v1354 = vmul.f32 %v1351, %v1353
    %v1355 = vadd.f32 %v1351, %v1354
    %vm1356 = vweird.f32 %v1350
    %vm1357 = vweird.f32 %v1351
    %vm1358 = vmor %vm1356, %vm1357
    %v1359 = vsel %vm1358, %v1351, %v1355
    %v1360 = vand.u32 2147483647, %v1350
    %vm1361 = vcmp.eq.f32.partialorder %v1360, 8.507059e+37
    %v1362 = vand.u32 %v1350, 2147483648
    %v1363 = vor.u32 1.1754944e-38, %v1362
    %v1364 = vsel %vm1361, %v1363, %v1359
    %v1365 = vmul.f32 %v1319, %v1364
    %v1366 = vmul.f32 %v1297, %v1365
    %v1367 = vsub.f32 %v1366, %v1297
    %v1368 = vmul.f32 %v1367, 1.442695
    %v1369 = vpow.pop %v1368
    %v1370 = vsel %vm336, %v1369, 0.0
    %1371 = vadd.xlane.f32.xlu0 %v1370
    %v1372 = vpop.xlane.xlu0 %1371
    %v1373 = vrcp.pop %v1372
    %v1374 = vmul.f32 %v1372, %v1373
    %v1375 = vsub.f32 1.0, %v1374
    %v1376 = vmul.f32 %v1373, %v1375
    %v1377 = vadd.f32 %v1373, %v1376
    %vm1378 = vweird.f32 %v1372
    %vm1379 = vweird.f32 %v1373
    %vm1380 = vmor %vm1378, %vm1379
    %v1381 = vsel %vm1380, %v1373, %v1377
    %v1382 = vand.u32 2147483647, %v1372
    %vm1383 = vcmp.eq.f32.partialorder %v1382, 8.507059e+37
    %v1384 = vand.u32 %v1372, 2147483648
    %v1385 = vor.u32 1.1754944e-38, %v1384
    %v1386 = vsel %vm1383, %v1385, %v1381
    %v1387 = vmul.f32 %v1369, %v1386
    %v1388 = vrot.slane %v1297, 1
    %v1390 = vmul.f32 %v1388, %v1387
    %v1391 = vrot.slane %v1297, 2
    %v1393 = vmul.f32 %v1391, %v1178
    %v1394 = vadd.f32 %v1390, %v1393
    %1395 = vrot.lane.b32.xlu0 %v1394, 1
    %v1396 = vpop.permute.xlu0 %1395
    %1397 = vrot.lane.b32.xlu0 %v1394, 127
    %v1398 = vpop.permute.xlu0 %1397
    %v1399 = vrot.slane %v1297, 4
    %v1401 = vmul.f32 %v1399, %v1396
    %v1402 = vrot.slane %v1297, 5
    %v1404 = vmul.f32 %v1402, %v1394
    %v1405 = vadd.f32 %v1401, %v1404
    %v1406 = vrot.slane %v1297, 6
    %v1408 = vmul.f32 %v1406, %v1398
    %v1409 = vadd.f32 %v1405, %v1408
    %v1410 = vmax.f32 %v1409, 1e-16
    %v1411 = vlog2.pop %v1410
    %v1412 = vmul.f32 %v1411, 0.6931472
    %v1413 = vrot.slane %v1297, 3
    %v1415 = vmul.f32 %v1413, %v1412
    %v1416 = vmul.f32 %v1415, 1.442695
    %v1417 = vpow.pop %v1416
    %v1418 = vsel %vm336, %v1417, 0.0
    %1419 = vadd.xlane.f32.xlu0 %v1418
    %v1420 = vpop.xlane.xlu0 %1419
    %v1421 = vadd.f32 %v1420, 1e-16
    %v1422 = vrcp.pop %v1421
    %v1423 = vmul.f32 %v1421, %v1422
    %v1424 = vsub.f32 1.0, %v1423
    %v1425 = vmul.f32 %v1422, %v1424
    %v1426 = vadd.f32 %v1422, %v1425
    %vm1427 = vweird.f32 %v1421
    %vm1428 = vweird.f32 %v1422
    %vm1429 = vmor %vm1427, %vm1428
    %v1430 = vsel %vm1429, %v1422, %v1426
    %v1431 = vand.u32 2147483647, %v1421
    %vm1432 = vcmp.eq.f32.partialorder %v1431, 8.507059e+37
    %v1433 = vand.u32 %v1421, 2147483648
    %v1434 = vor.u32 1.1754944e-38, %v1433
    %v1435 = vsel %vm1432, %v1434, %v1430
    %v1436 = vmul.f32 %v1417, %v1435
    %1437 = vxpose.xlu0.b32.start [1/16] %v1293, 128
    %1438 = vxpose.xlu0.b32.cont [2/16] 0.0, 128
    %1439 = vxpose.xlu0.b32.cont [3/16] 0.0, 128
    %1440 = vxpose.xlu0.b32.cont [4/16] 0.0, 128
    %1441 = vxpose.xlu0.b32.cont [5/16] 0.0, 128
    %1442 = vxpose.xlu0.b32.cont [6/16] 0.0, 128
    %1443 = vxpose.xlu0.b32.cont [7/16] 0.0, 128
    %1444 = vxpose.xlu0.b32.cont [8/16] 0.0, 128
    %1445 = vxpose.xlu0.b32.cont [9/16] 0.0, 128
    %1446 = vxpose.xlu0.b32.cont [10/16] 0.0, 128
    %1447 = vxpose.xlu0.b32.cont [11/16] 0.0, 128
    %1448 = vxpose.xlu0.b32.cont [12/16] 0.0, 128
    %1449 = vxpose.xlu0.b32.cont [13/16] 0.0, 128
    %1450 = vxpose.xlu0.b32.cont [14/16] 0.0, 128
    %1451 = vxpose.xlu0.b32.cont [15/16] 0.0, 128
    %1452 = vxpose.xlu0.b32.end [16/16] 0.0, 128
    %v1453 = vpop.trf.xlu0
    %v1454 = vpop.trf.xlu0
    %v1455 = vpop.trf.xlu0
    %v1456 = vpop.trf.xlu0
    %v1457 = vpop.trf.xlu0
    %v1458 = vpop.trf.xlu0
    %v1459 = vpop.trf.xlu0
    %v1460 = vpop.trf.xlu0
    %v1461 = vpop.trf.xlu0
    %v1462 = vpop.trf.xlu0
    %v1463 = vpop.trf.xlu0
    %v1464 = vpop.trf.xlu0
    %v1465 = vpop.trf.xlu0
    %v1466 = vpop.trf.xlu0
    %v1467 = vpop.trf.xlu0
    %v1468 = vpop.trf.xlu0
    %v1470 = vsel %vm436, %v1453, 0
    %v1473 = vsel %vm436, %v1454, 0
    %v1476 = vsel %vm436, %v1455, 0
    %v1479 = vsel %vm436, %v1456, 0
    %v1482 = vsel %vm436, %v1457, 0
    %v1485 = vsel %vm436, %v1458, 0
    %v1488 = vsel %vm436, %v1459, 0
    %v1491 = vsel %vm436, %v1460, 0
    %v1494 = vsel %vm336, %v1436, 0
    %1496 = vmatpush.msra.mxu0 0.0
    %1497 = vmatpush.msra.mxu0 0.0
    %1498 = vmatpush.msra.mxu0 0.0
    %1499 = vmatpush.msra.mxu0 0.0
    %1500 = vmatpush.msra.mxu0 0.0
    %1501 = vmatpush.msra.mxu0 0.0
    %1502 = vmatpush.msra.mxu0 0.0
    %1503 = vmatpush.msra.mxu0 0.0
    %1504 = vmatpush.msra.mxu0 0.0
    %1505 = vmatpush.msra.mxu0 0.0
    %1506 = vmatpush.msra.mxu0 0.0
    %1507 = vmatpush.msra.mxu0 0.0
    %1508 = vmatpush.msra.mxu0 0.0
    %1509 = vmatpush.msra.mxu0 0.0
    %1510 = vmatpush.msra.mxu0 0.0
    %1511 = vmatpush.msra.mxu0 %v1494
    %1512 = vmatmul.f32.gmra.mxu0 %v1470
    %v1513 = vpop.f32.mrf.mxu0
    %v1514 = vadd.f32 0.0, %v1513
    %1515 = vmatmul.f32.gmra.mxu0 %v1473
    %v1516 = vpop.f32.mrf.mxu0
    %v1517 = vadd.f32 0.0, %v1516
    %1518 = vmatmul.f32.gmra.mxu0 %v1476
    %v1519 = vpop.f32.mrf.mxu0
    %v1520 = vadd.f32 0.0, %v1519
    %1521 = vmatmul.f32.gmra.mxu0 %v1479
    %v1522 = vpop.f32.mrf.mxu0
    %v1523 = vadd.f32 0.0, %v1522
    %1524 = vmatmul.f32.gmra.mxu0 %v1482
    %v1525 = vpop.f32.mrf.mxu0
    %v1526 = vadd.f32 0.0, %v1525
    %1527 = vmatmul.f32.gmra.mxu0 %v1485
    %v1528 = vpop.f32.mrf.mxu0
    %v1529 = vadd.f32 0.0, %v1528
    %1530 = vmatmul.f32.gmra.mxu0 %v1488
    %v1531 = vpop.f32.mrf.mxu0
    %v1532 = vadd.f32 0.0, %v1531
    %1533 = vmatmul.f32.gmra.mxu0 %v1491
    %v1534 = vpop.f32.mrf.mxu0
    %v1535 = vadd.f32 0.0, %v1534
    %1536 = vdwg.mxu0
    %v1537 = vsub.f32 1.0, %v1526
    %v1538 = vsub.f32 1.0, %v1529
    %v1539 = vsub.f32 1.0, %v1532
    %v1540 = vsub.f32 1.0, %v1535
    %v1541 = vmul.f32 %v1287, %v1537
    %v1542 = vmul.f32 %v1288, %v1538
    %v1543 = vmul.f32 %v1289, %v1539
    %v1544 = vmul.f32 %v1290, %v1540
    %v1545 = vadd.f32 %v1541, %v1514
    %v1546 = vadd.f32 %v1542, %v1517
    %v1547 = vadd.f32 %v1543, %v1520
    %v1548 = vadd.f32 %v1544, %v1523
    %1549 = vst [vmem:[#allocation5 + $0x4] sm:$0x1] %v1436
    %v1550 = vld [vmem:[#allocation2 + $0x5] sm:$0x1]
    %v1551 = vld [vmem:[#allocation3 + $0x5] sm:$0x1]
    %s1552 = scalar_lea.vmem [#allocation4], 5
    %v1553 = vld [vmem:[%s1552] ss:$8 sm:$0xf]
    %v1554 = vld [vmem:[%s1552] ss:$8 sm:$0xf0]
    %v1555 = vor.u32 %v1553, %v1554
    %v1557 = vsel %vm195, %v1550, 0
    %1559 = vmatpush.msra.mxu0 0.0
    %1560 = vmatpush.msra.mxu0 0.0
    %1561 = vmatpush.msra.mxu0 0.0
    %1562 = vmatpush.msra.mxu0 0.0
    %1563 = vmatpush.msra.mxu0 0.0
    %1564 = vmatpush.msra.mxu0 0.0
    %1565 = vmatpush.msra.mxu0 0.0
    %1566 = vmatpush.msra.mxu0 0.0
    %1567 = vmatpush.msra.mxu0 0.0
    %1568 = vmatpush.msra.mxu0 0.0
    %1569 = vmatpush.msra.mxu0 0.0
    %1570 = vmatpush.msra.mxu0 0.0
    %1571 = vmatpush.msra.mxu0 %v1548
    %1572 = vmatpush.msra.mxu0 %v1547
    %1573 = vmatpush.msra.mxu0 %v1546
    %1574 = vmatpush.msra.mxu0 %v1545
    %1575 = vmatmul.f32.gmra.mxu0 %v1557
    %v1576 = vpop.f32.mrf.mxu0
    %v1577 = vadd.f32 0.0, %v1576
    %1578 = vdwg.mxu0
    %v1579 = vmul.f32 %v1545, %v1545
    %v1580 = vmul.f32 %v1546, %v1546
    %v1581 = vmul.f32 %v1547, %v1547
    %v1582 = vmul.f32 %v1548, %v1548
    %v1583 = vadd.f32 %v1579, %v1580
    %v1584 = vadd.f32 %v1583, %v1581
    %v1585 = vadd.f32 %v1584, %v1582
    %v1586 = vrot.slane %v1585, 4
    %v1587 = vadd.f32 %v1585, %v1586
    %v1588 = vrot.slane %v1587, 2
    %v1589 = vadd.f32 %v1587, %v1588
    %v1590 = vrot.slane %v1589, 1
    %v1591 = vadd.f32 %v1589, %v1590
    %v1592 = vrsqrt.pop %v1591
    %v1593 = vmul.f32 %v1592, %v1591
    %v1594 = vmul.f32 %v1593, %v1592
    %v1595 = vmul.f32 0.5, %v1594
    %v1596 = vsub.f32 1.5, %v1595
    %v1597 = vmul.f32 %v1592, %v1596
    %v1598 = vmul.f32 %v1591, %v1597
    %vm1599 = vcmp.eq.f32.partialorder %v1591, inf
    %v1600 = vsel %vm1599, %v1591, %v1598
    %vm1601 = vcmp.eq.f32.partialorder %v1591, 0.0
    %v1602 = vand.u32 %v1591, 2147483648
    %v1603 = vsel %vm1601, %v1602, %v1600
    %v1605 = vperm.slane %v1555, 7
    %v1607 = vmul.f32 %v1603, %v1605
    %v1608 = vmax.f32 %v1607, 1e-16
    %v1609 = vrcp.pop %v1608
    %v1610 = vmul.f32 %v1608, %v1609
    %v1611 = vsub.f32 1.0, %v1610
    %v1612 = vmul.f32 %v1609, %v1611
    %v1613 = vadd.f32 %v1609, %v1612
    %vm1614 = vweird.f32 %v1608
    %vm1615 = vweird.f32 %v1609
    %vm1616 = vmor %vm1614, %vm1615
    %v1617 = vsel %vm1616, %v1609, %v1613
    %v1618 = vand.u32 2147483647, %v1608
    %vm1619 = vcmp.eq.f32.partialorder %v1618, 8.507059e+37
    %v1620 = vand.u32 %v1608, 2147483648
    %v1621 = vor.u32 1.1754944e-38, %v1620
    %v1622 = vsel %vm1619, %v1621, %v1617
    %v1623 = vmul.f32 %v1577, %v1622
    %v1624 = vmul.f32 %v1555, %v1623
    %v1625 = vsub.f32 %v1624, %v1555
    %v1626 = vmul.f32 %v1625, 1.442695
    %v1627 = vpow.pop %v1626
    %v1628 = vsel %vm336, %v1627, 0.0
    %1629 = vadd.xlane.f32.xlu0 %v1628
    %v1630 = vpop.xlane.xlu0 %1629
    %v1631 = vrcp.pop %v1630
    %v1632 = vmul.f32 %v1630, %v1631
    %v1633 = vsub.f32 1.0, %v1632
    %v1634 = vmul.f32 %v1631, %v1633
    %v1635 = vadd.f32 %v1631, %v1634
    %vm1636 = vweird.f32 %v1630
    %vm1637 = vweird.f32 %v1631
    %vm1638 = vmor %vm1636, %vm1637
    %v1639 = vsel %vm1638, %v1631, %v1635
    %v1640 = vand.u32 2147483647, %v1630
    %vm1641 = vcmp.eq.f32.partialorder %v1640, 8.507059e+37
    %v1642 = vand.u32 %v1630, 2147483648
    %v1643 = vor.u32 1.1754944e-38, %v1642
    %v1644 = vsel %vm1641, %v1643, %v1639
    %v1645 = vmul.f32 %v1627, %v1644
    %v1646 = vrot.slane %v1555, 1
    %v1648 = vmul.f32 %v1646, %v1645
    %v1649 = vrot.slane %v1555, 2
    %v1651 = vmul.f32 %v1649, %v1436
    %v1652 = vadd.f32 %v1648, %v1651
    %1653 = vrot.lane.b32.xlu0 %v1652, 1
    %v1654 = vpop.permute.xlu0 %1653
    %1655 = vrot.lane.b32.xlu0 %v1652, 127
    %v1656 = vpop.permute.xlu0 %1655
    %v1657 = vrot.slane %v1555, 4
    %v1659 = vmul.f32 %v1657, %v1654
    %v1660 = vrot.slane %v1555, 5
    %v1662 = vmul.f32 %v1660, %v1652
    %v1663 = vadd.f32 %v1659, %v1662
    %v1664 = vrot.slane %v1555, 6
    %v1666 = vmul.f32 %v1664, %v1656
    %v1667 = vadd.f32 %v1663, %v1666
    %v1668 = vmax.f32 %v1667, 1e-16
    %v1669 = vlog2.pop %v1668
    %v1670 = vmul.f32 %v1669, 0.6931472
    %v1671 = vrot.slane %v1555, 3
    %v1673 = vmul.f32 %v1671, %v1670
    %v1674 = vmul.f32 %v1673, 1.442695
    %v1675 = vpow.pop %v1674
    %v1676 = vsel %vm336, %v1675, 0.0
    %1677 = vadd.xlane.f32.xlu0 %v1676
    %v1678 = vpop.xlane.xlu0 %1677
    %v1679 = vadd.f32 %v1678, 1e-16
    %v1680 = vrcp.pop %v1679
    %v1681 = vmul.f32 %v1679, %v1680
    %v1682 = vsub.f32 1.0, %v1681
    %v1683 = vmul.f32 %v1680, %v1682
    %v1684 = vadd.f32 %v1680, %v1683
    %vm1685 = vweird.f32 %v1679
    %vm1686 = vweird.f32 %v1680
    %vm1687 = vmor %vm1685, %vm1686
    %v1688 = vsel %vm1687, %v1680, %v1684
    %v1689 = vand.u32 2147483647, %v1679
    %vm1690 = vcmp.eq.f32.partialorder %v1689, 8.507059e+37
    %v1691 = vand.u32 %v1679, 2147483648
    %v1692 = vor.u32 1.1754944e-38, %v1691
    %v1693 = vsel %vm1690, %v1692, %v1688
    %v1694 = vmul.f32 %v1675, %v1693
    %1695 = vxpose.xlu0.b32.start [1/16] %v1551, 128
    %1696 = vxpose.xlu0.b32.cont [2/16] 0.0, 128
    %1697 = vxpose.xlu0.b32.cont [3/16] 0.0, 128
    %1698 = vxpose.xlu0.b32.cont [4/16] 0.0, 128
    %1699 = vxpose.xlu0.b32.cont [5/16] 0.0, 128
    %1700 = vxpose.xlu0.b32.cont [6/16] 0.0, 128
    %1701 = vxpose.xlu0.b32.cont [7/16] 0.0, 128
    %1702 = vxpose.xlu0.b32.cont [8/16] 0.0, 128
    %1703 = vxpose.xlu0.b32.cont [9/16] 0.0, 128
    %1704 = vxpose.xlu0.b32.cont [10/16] 0.0, 128
    %1705 = vxpose.xlu0.b32.cont [11/16] 0.0, 128
    %1706 = vxpose.xlu0.b32.cont [12/16] 0.0, 128
    %1707 = vxpose.xlu0.b32.cont [13/16] 0.0, 128
    %1708 = vxpose.xlu0.b32.cont [14/16] 0.0, 128
    %1709 = vxpose.xlu0.b32.cont [15/16] 0.0, 128
    %1710 = vxpose.xlu0.b32.end [16/16] 0.0, 128
    %v1711 = vpop.trf.xlu0
    %v1712 = vpop.trf.xlu0
    %v1713 = vpop.trf.xlu0
    %v1714 = vpop.trf.xlu0
    %v1715 = vpop.trf.xlu0
    %v1716 = vpop.trf.xlu0
    %v1717 = vpop.trf.xlu0
    %v1718 = vpop.trf.xlu0
    %v1719 = vpop.trf.xlu0
    %v1720 = vpop.trf.xlu0
    %v1721 = vpop.trf.xlu0
    %v1722 = vpop.trf.xlu0
    %v1723 = vpop.trf.xlu0
    %v1724 = vpop.trf.xlu0
    %v1725 = vpop.trf.xlu0
    %v1726 = vpop.trf.xlu0
    %v1728 = vsel %vm436, %v1711, 0
    %v1731 = vsel %vm436, %v1712, 0
    %v1734 = vsel %vm436, %v1713, 0
    %v1737 = vsel %vm436, %v1714, 0
    %v1740 = vsel %vm436, %v1715, 0
    %v1743 = vsel %vm436, %v1716, 0
    %v1746 = vsel %vm436, %v1717, 0
    %v1749 = vsel %vm436, %v1718, 0
    %v1752 = vsel %vm336, %v1694, 0
    %1754 = vmatpush.msra.mxu0 0.0
    %1755 = vmatpush.msra.mxu0 0.0
    %1756 = vmatpush.msra.mxu0 0.0
    %1757 = vmatpush.msra.mxu0 0.0
    %1758 = vmatpush.msra.mxu0 0.0
    %1759 = vmatpush.msra.mxu0 0.0
    %1760 = vmatpush.msra.mxu0 0.0
    %1761 = vmatpush.msra.mxu0 0.0
    %1762 = vmatpush.msra.mxu0 0.0
    %1763 = vmatpush.msra.mxu0 0.0
    %1764 = vmatpush.msra.mxu0 0.0
    %1765 = vmatpush.msra.mxu0 0.0
    %1766 = vmatpush.msra.mxu0 0.0
    %1767 = vmatpush.msra.mxu0 0.0
    %1768 = vmatpush.msra.mxu0 0.0
    %1769 = vmatpush.msra.mxu0 %v1752
    %1770 = vmatmul.f32.gmra.mxu0 %v1728
    %v1771 = vpop.f32.mrf.mxu0
    %v1772 = vadd.f32 0.0, %v1771
    %1773 = vmatmul.f32.gmra.mxu0 %v1731
    %v1774 = vpop.f32.mrf.mxu0
    %v1775 = vadd.f32 0.0, %v1774
    %1776 = vmatmul.f32.gmra.mxu0 %v1734
    %v1777 = vpop.f32.mrf.mxu0
    %v1778 = vadd.f32 0.0, %v1777
    %1779 = vmatmul.f32.gmra.mxu0 %v1737
    %v1780 = vpop.f32.mrf.mxu0
    %v1781 = vadd.f32 0.0, %v1780
    %1782 = vmatmul.f32.gmra.mxu0 %v1740
    %v1783 = vpop.f32.mrf.mxu0
    %v1784 = vadd.f32 0.0, %v1783
    %1785 = vmatmul.f32.gmra.mxu0 %v1743
    %v1786 = vpop.f32.mrf.mxu0
    %v1787 = vadd.f32 0.0, %v1786
    %1788 = vmatmul.f32.gmra.mxu0 %v1746
    %v1789 = vpop.f32.mrf.mxu0
    %v1790 = vadd.f32 0.0, %v1789
    %1791 = vmatmul.f32.gmra.mxu0 %v1749
    %v1792 = vpop.f32.mrf.mxu0
    %v1793 = vadd.f32 0.0, %v1792
    %1794 = vdwg.mxu0
    %v1795 = vsub.f32 1.0, %v1784
    %v1796 = vsub.f32 1.0, %v1787
    %v1797 = vsub.f32 1.0, %v1790
    %v1798 = vsub.f32 1.0, %v1793
    %v1799 = vmul.f32 %v1545, %v1795
    %v1800 = vmul.f32 %v1546, %v1796
    %v1801 = vmul.f32 %v1547, %v1797
    %v1802 = vmul.f32 %v1548, %v1798
    %v1803 = vadd.f32 %v1799, %v1772
    %v1804 = vadd.f32 %v1800, %v1775
    %v1805 = vadd.f32 %v1801, %v1778
    %v1806 = vadd.f32 %v1802, %v1781
    %1807 = vst [vmem:[#allocation5 + $0x5] sm:$0x1] %v1694
    %v1808 = vld [vmem:[#allocation2 + $0x6] sm:$0x1]
    %v1809 = vld [vmem:[#allocation3 + $0x6] sm:$0x1]
    %s1810 = scalar_lea.vmem [#allocation4], 6
    %v1811 = vld [vmem:[%s1810] ss:$8 sm:$0xf]
    %v1812 = vld [vmem:[%s1810] ss:$8 sm:$0xf0]
    %v1813 = vor.u32 %v1811, %v1812
    %v1815 = vsel %vm195, %v1808, 0
    %1817 = vmatpush.msra.mxu0 0.0
    %1818 = vmatpush.msra.mxu0 0.0
    %1819 = vmatpush.msra.mxu0 0.0
    %1820 = vmatpush.msra.mxu0 0.0
    %1821 = vmatpush.msra.mxu0 0.0
    %1822 = vmatpush.msra.mxu0 0.0
    %1823 = vmatpush.msra.mxu0 0.0
    %1824 = vmatpush.msra.mxu0 0.0
    %1825 = vmatpush.msra.mxu0 0.0
    %1826 = vmatpush.msra.mxu0 0.0
    %1827 = vmatpush.msra.mxu0 0.0
    %1828 = vmatpush.msra.mxu0 0.0
    %1829 = vmatpush.msra.mxu0 %v1806
    %1830 = vmatpush.msra.mxu0 %v1805
    %1831 = vmatpush.msra.mxu0 %v1804
    %1832 = vmatpush.msra.mxu0 %v1803
    %1833 = vmatmul.f32.gmra.mxu0 %v1815
    %v1834 = vpop.f32.mrf.mxu0
    %v1835 = vadd.f32 0.0, %v1834
    %1836 = vdwg.mxu0
    %v1837 = vmul.f32 %v1803, %v1803
    %v1838 = vmul.f32 %v1804, %v1804
    %v1839 = vmul.f32 %v1805, %v1805
    %v1840 = vmul.f32 %v1806, %v1806
    %v1841 = vadd.f32 %v1837, %v1838
    %v1842 = vadd.f32 %v1841, %v1839
    %v1843 = vadd.f32 %v1842, %v1840
    %v1844 = vrot.slane %v1843, 4
    %v1845 = vadd.f32 %v1843, %v1844
    %v1846 = vrot.slane %v1845, 2
    %v1847 = vadd.f32 %v1845, %v1846
    %v1848 = vrot.slane %v1847, 1
    %v1849 = vadd.f32 %v1847, %v1848
    %v1850 = vrsqrt.pop %v1849
    %v1851 = vmul.f32 %v1850, %v1849
    %v1852 = vmul.f32 %v1851, %v1850
    %v1853 = vmul.f32 0.5, %v1852
    %v1854 = vsub.f32 1.5, %v1853
    %v1855 = vmul.f32 %v1850, %v1854
    %v1856 = vmul.f32 %v1849, %v1855
    %vm1857 = vcmp.eq.f32.partialorder %v1849, inf
    %v1858 = vsel %vm1857, %v1849, %v1856
    %vm1859 = vcmp.eq.f32.partialorder %v1849, 0.0
    %v1860 = vand.u32 %v1849, 2147483648
    %v1861 = vsel %vm1859, %v1860, %v1858
    %v1863 = vperm.slane %v1813, 7
    %v1865 = vmul.f32 %v1861, %v1863
    %v1866 = vmax.f32 %v1865, 1e-16
    %v1867 = vrcp.pop %v1866
    %v1868 = vmul.f32 %v1866, %v1867
    %v1869 = vsub.f32 1.0, %v1868
    %v1870 = vmul.f32 %v1867, %v1869
    %v1871 = vadd.f32 %v1867, %v1870
    %vm1872 = vweird.f32 %v1866
    %vm1873 = vweird.f32 %v1867
    %vm1874 = vmor %vm1872, %vm1873
    %v1875 = vsel %vm1874, %v1867, %v1871
    %v1876 = vand.u32 2147483647, %v1866
    %vm1877 = vcmp.eq.f32.partialorder %v1876, 8.507059e+37
    %v1878 = vand.u32 %v1866, 2147483648
    %v1879 = vor.u32 1.1754944e-38, %v1878
    %v1880 = vsel %vm1877, %v1879, %v1875
    %v1881 = vmul.f32 %v1835, %v1880
    %v1882 = vmul.f32 %v1813, %v1881
    %v1883 = vsub.f32 %v1882, %v1813
    %v1884 = vmul.f32 %v1883, 1.442695
    %v1885 = vpow.pop %v1884
    %v1886 = vsel %vm336, %v1885, 0.0
    %1887 = vadd.xlane.f32.xlu0 %v1886
    %v1888 = vpop.xlane.xlu0 %1887
    %v1889 = vrcp.pop %v1888
    %v1890 = vmul.f32 %v1888, %v1889
    %v1891 = vsub.f32 1.0, %v1890
    %v1892 = vmul.f32 %v1889, %v1891
    %v1893 = vadd.f32 %v1889, %v1892
    %vm1894 = vweird.f32 %v1888
    %vm1895 = vweird.f32 %v1889
    %vm1896 = vmor %vm1894, %vm1895
    %v1897 = vsel %vm1896, %v1889, %v1893
    %v1898 = vand.u32 2147483647, %v1888
    %vm1899 = vcmp.eq.f32.partialorder %v1898, 8.507059e+37
    %v1900 = vand.u32 %v1888, 2147483648
    %v1901 = vor.u32 1.1754944e-38, %v1900
    %v1902 = vsel %vm1899, %v1901, %v1897
    %v1903 = vmul.f32 %v1885, %v1902
    %v1904 = vrot.slane %v1813, 1
    %v1906 = vmul.f32 %v1904, %v1903
    %v1907 = vrot.slane %v1813, 2
    %v1909 = vmul.f32 %v1907, %v1694
    %v1910 = vadd.f32 %v1906, %v1909
    %1911 = vrot.lane.b32.xlu0 %v1910, 1
    %v1912 = vpop.permute.xlu0 %1911
    %1913 = vrot.lane.b32.xlu0 %v1910, 127
    %v1914 = vpop.permute.xlu0 %1913
    %v1915 = vrot.slane %v1813, 4
    %v1917 = vmul.f32 %v1915, %v1912
    %v1918 = vrot.slane %v1813, 5
    %v1920 = vmul.f32 %v1918, %v1910
    %v1921 = vadd.f32 %v1917, %v1920
    %v1922 = vrot.slane %v1813, 6
    %v1924 = vmul.f32 %v1922, %v1914
    %v1925 = vadd.f32 %v1921, %v1924
    %v1926 = vmax.f32 %v1925, 1e-16
    %v1927 = vlog2.pop %v1926
    %v1928 = vmul.f32 %v1927, 0.6931472
    %v1929 = vrot.slane %v1813, 3
    %v1931 = vmul.f32 %v1929, %v1928
    %v1932 = vmul.f32 %v1931, 1.442695
    %v1933 = vpow.pop %v1932
    %v1934 = vsel %vm336, %v1933, 0.0
    %1935 = vadd.xlane.f32.xlu0 %v1934
    %v1936 = vpop.xlane.xlu0 %1935
    %v1937 = vadd.f32 %v1936, 1e-16
    %v1938 = vrcp.pop %v1937
    %v1939 = vmul.f32 %v1937, %v1938
    %v1940 = vsub.f32 1.0, %v1939
    %v1941 = vmul.f32 %v1938, %v1940
    %v1942 = vadd.f32 %v1938, %v1941
    %vm1943 = vweird.f32 %v1937
    %vm1944 = vweird.f32 %v1938
    %vm1945 = vmor %vm1943, %vm1944
    %v1946 = vsel %vm1945, %v1938, %v1942
    %v1947 = vand.u32 2147483647, %v1937
    %vm1948 = vcmp.eq.f32.partialorder %v1947, 8.507059e+37
    %v1949 = vand.u32 %v1937, 2147483648
    %v1950 = vor.u32 1.1754944e-38, %v1949
    %v1951 = vsel %vm1948, %v1950, %v1946
    %v1952 = vmul.f32 %v1933, %v1951
    %1953 = vxpose.xlu0.b32.start [1/16] %v1809, 128
    %1954 = vxpose.xlu0.b32.cont [2/16] 0.0, 128
    %1955 = vxpose.xlu0.b32.cont [3/16] 0.0, 128
    %1956 = vxpose.xlu0.b32.cont [4/16] 0.0, 128
    %1957 = vxpose.xlu0.b32.cont [5/16] 0.0, 128
    %1958 = vxpose.xlu0.b32.cont [6/16] 0.0, 128
    %1959 = vxpose.xlu0.b32.cont [7/16] 0.0, 128
    %1960 = vxpose.xlu0.b32.cont [8/16] 0.0, 128
    %1961 = vxpose.xlu0.b32.cont [9/16] 0.0, 128
    %1962 = vxpose.xlu0.b32.cont [10/16] 0.0, 128
    %1963 = vxpose.xlu0.b32.cont [11/16] 0.0, 128
    %1964 = vxpose.xlu0.b32.cont [12/16] 0.0, 128
    %1965 = vxpose.xlu0.b32.cont [13/16] 0.0, 128
    %1966 = vxpose.xlu0.b32.cont [14/16] 0.0, 128
    %1967 = vxpose.xlu0.b32.cont [15/16] 0.0, 128
    %1968 = vxpose.xlu0.b32.end [16/16] 0.0, 128
    %v1969 = vpop.trf.xlu0
    %v1970 = vpop.trf.xlu0
    %v1971 = vpop.trf.xlu0
    %v1972 = vpop.trf.xlu0
    %v1973 = vpop.trf.xlu0
    %v1974 = vpop.trf.xlu0
    %v1975 = vpop.trf.xlu0
    %v1976 = vpop.trf.xlu0
    %v1977 = vpop.trf.xlu0
    %v1978 = vpop.trf.xlu0
    %v1979 = vpop.trf.xlu0
    %v1980 = vpop.trf.xlu0
    %v1981 = vpop.trf.xlu0
    %v1982 = vpop.trf.xlu0
    %v1983 = vpop.trf.xlu0
    %v1984 = vpop.trf.xlu0
    %v1986 = vsel %vm436, %v1969, 0
    %v1989 = vsel %vm436, %v1970, 0
    %v1992 = vsel %vm436, %v1971, 0
    %v1995 = vsel %vm436, %v1972, 0
    %v1998 = vsel %vm436, %v1973, 0
    %v2001 = vsel %vm436, %v1974, 0
    %v2004 = vsel %vm436, %v1975, 0
    %v2007 = vsel %vm436, %v1976, 0
    %v2010 = vsel %vm336, %v1952, 0
    %2012 = vmatpush.msra.mxu0 0.0
    %2013 = vmatpush.msra.mxu0 0.0
    %2014 = vmatpush.msra.mxu0 0.0
    %2015 = vmatpush.msra.mxu0 0.0
    %2016 = vmatpush.msra.mxu0 0.0
    %2017 = vmatpush.msra.mxu0 0.0
    %2018 = vmatpush.msra.mxu0 0.0
    %2019 = vmatpush.msra.mxu0 0.0
    %2020 = vmatpush.msra.mxu0 0.0
    %2021 = vmatpush.msra.mxu0 0.0
    %2022 = vmatpush.msra.mxu0 0.0
    %2023 = vmatpush.msra.mxu0 0.0
    %2024 = vmatpush.msra.mxu0 0.0
    %2025 = vmatpush.msra.mxu0 0.0
    %2026 = vmatpush.msra.mxu0 0.0
    %2027 = vmatpush.msra.mxu0 %v2010
    %2028 = vmatmul.f32.gmra.mxu0 %v1986
    %v2029 = vpop.f32.mrf.mxu0
    %v2030 = vadd.f32 0.0, %v2029
    %2031 = vmatmul.f32.gmra.mxu0 %v1989
    %v2032 = vpop.f32.mrf.mxu0
    %v2033 = vadd.f32 0.0, %v2032
    %2034 = vmatmul.f32.gmra.mxu0 %v1992
    %v2035 = vpop.f32.mrf.mxu0
    %v2036 = vadd.f32 0.0, %v2035
    %2037 = vmatmul.f32.gmra.mxu0 %v1995
    %v2038 = vpop.f32.mrf.mxu0
    %v2039 = vadd.f32 0.0, %v2038
    %2040 = vmatmul.f32.gmra.mxu0 %v1998
    %v2041 = vpop.f32.mrf.mxu0
    %v2042 = vadd.f32 0.0, %v2041
    %2043 = vmatmul.f32.gmra.mxu0 %v2001
    %v2044 = vpop.f32.mrf.mxu0
    %v2045 = vadd.f32 0.0, %v2044
    %2046 = vmatmul.f32.gmra.mxu0 %v2004
    %v2047 = vpop.f32.mrf.mxu0
    %v2048 = vadd.f32 0.0, %v2047
    %2049 = vmatmul.f32.gmra.mxu0 %v2007
    %v2050 = vpop.f32.mrf.mxu0
    %v2051 = vadd.f32 0.0, %v2050
    %2052 = vdwg.mxu0
    %v2053 = vsub.f32 1.0, %v2042
    %v2054 = vsub.f32 1.0, %v2045
    %v2055 = vsub.f32 1.0, %v2048
    %v2056 = vsub.f32 1.0, %v2051
    %v2057 = vmul.f32 %v1803, %v2053
    %v2058 = vmul.f32 %v1804, %v2054
    %v2059 = vmul.f32 %v1805, %v2055
    %v2060 = vmul.f32 %v1806, %v2056
    %v2061 = vadd.f32 %v2057, %v2030
    %v2062 = vadd.f32 %v2058, %v2033
    %v2063 = vadd.f32 %v2059, %v2036
    %v2064 = vadd.f32 %v2060, %v2039
    %2065 = vst [vmem:[#allocation5 + $0x6] sm:$0x1] %v1952
    %v2066 = vld [vmem:[#allocation2 + $0x7] sm:$0x1]
    %v2067 = vld [vmem:[#allocation3 + $0x7] sm:$0x1]
    %s2068 = scalar_lea.vmem [#allocation4], 7
    %v2069 = vld [vmem:[%s2068] ss:$8 sm:$0xf]
    %v2070 = vld [vmem:[%s2068] ss:$8 sm:$0xf0]
    %v2071 = vor.u32 %v2069, %v2070
    %v2073 = vsel %vm195, %v2066, 0
    %2075 = vmatpush.msra.mxu0 0.0
    %2076 = vmatpush.msra.mxu0 0.0
    %2077 = vmatpush.msra.mxu0 0.0
    %2078 = vmatpush.msra.mxu0 0.0
    %2079 = vmatpush.msra.mxu0 0.0
    %2080 = vmatpush.msra.mxu0 0.0
    %2081 = vmatpush.msra.mxu0 0.0
    %2082 = vmatpush.msra.mxu0 0.0
    %2083 = vmatpush.msra.mxu0 0.0
    %2084 = vmatpush.msra.mxu0 0.0
    %2085 = vmatpush.msra.mxu0 0.0
    %2086 = vmatpush.msra.mxu0 0.0
    %2087 = vmatpush.msra.mxu0 %v2064
    %2088 = vmatpush.msra.mxu0 %v2063
    %2089 = vmatpush.msra.mxu0 %v2062
    %2090 = vmatpush.msra.mxu0 %v2061
    %2091 = vmatmul.f32.gmra.mxu0 %v2073
    %v2092 = vpop.f32.mrf.mxu0
    %v2093 = vadd.f32 0.0, %v2092
    %2094 = vdwg.mxu0
    %v2095 = vmul.f32 %v2061, %v2061
    %v2096 = vmul.f32 %v2062, %v2062
    %v2097 = vmul.f32 %v2063, %v2063
    %v2098 = vmul.f32 %v2064, %v2064
    %v2099 = vadd.f32 %v2095, %v2096
    %v2100 = vadd.f32 %v2099, %v2097
    %v2101 = vadd.f32 %v2100, %v2098
    %v2102 = vrot.slane %v2101, 4
    %v2103 = vadd.f32 %v2101, %v2102
    %v2104 = vrot.slane %v2103, 2
    %v2105 = vadd.f32 %v2103, %v2104
    %v2106 = vrot.slane %v2105, 1
    %v2107 = vadd.f32 %v2105, %v2106
    %v2108 = vrsqrt.pop %v2107
    %v2109 = vmul.f32 %v2108, %v2107
    %v2110 = vmul.f32 %v2109, %v2108
    %v2111 = vmul.f32 0.5, %v2110
    %v2112 = vsub.f32 1.5, %v2111
    %v2113 = vmul.f32 %v2108, %v2112
    %v2114 = vmul.f32 %v2107, %v2113
    %vm2115 = vcmp.eq.f32.partialorder %v2107, inf
    %v2116 = vsel %vm2115, %v2107, %v2114
    %vm2117 = vcmp.eq.f32.partialorder %v2107, 0.0
    %v2118 = vand.u32 %v2107, 2147483648
    %v2119 = vsel %vm2117, %v2118, %v2116
    %v2121 = vperm.slane %v2071, 7
    %v2123 = vmul.f32 %v2119, %v2121
    %v2124 = vmax.f32 %v2123, 1e-16
    %v2125 = vrcp.pop %v2124
    %v2126 = vmul.f32 %v2124, %v2125
    %v2127 = vsub.f32 1.0, %v2126
    %v2128 = vmul.f32 %v2125, %v2127
    %v2129 = vadd.f32 %v2125, %v2128
    %vm2130 = vweird.f32 %v2124
    %vm2131 = vweird.f32 %v2125
    %vm2132 = vmor %vm2130, %vm2131
    %v2133 = vsel %vm2132, %v2125, %v2129
    %v2134 = vand.u32 2147483647, %v2124
    %vm2135 = vcmp.eq.f32.partialorder %v2134, 8.507059e+37
    %v2136 = vand.u32 %v2124, 2147483648
    %v2137 = vor.u32 1.1754944e-38, %v2136
    %v2138 = vsel %vm2135, %v2137, %v2133
    %v2139 = vmul.f32 %v2093, %v2138
    %v2140 = vmul.f32 %v2071, %v2139
    %v2141 = vsub.f32 %v2140, %v2071
    %v2142 = vmul.f32 %v2141, 1.442695
    %v2143 = vpow.pop %v2142
    %v2144 = vsel %vm336, %v2143, 0.0
    %2145 = vadd.xlane.f32.xlu0 %v2144
    %v2146 = vpop.xlane.xlu0 %2145
    %v2147 = vrcp.pop %v2146
    %v2148 = vmul.f32 %v2146, %v2147
    %v2149 = vsub.f32 1.0, %v2148
    %v2150 = vmul.f32 %v2147, %v2149
    %v2151 = vadd.f32 %v2147, %v2150
    %vm2152 = vweird.f32 %v2146
    %vm2153 = vweird.f32 %v2147
    %vm2154 = vmor %vm2152, %vm2153
    %v2155 = vsel %vm2154, %v2147, %v2151
    %v2156 = vand.u32 2147483647, %v2146
    %vm2157 = vcmp.eq.f32.partialorder %v2156, 8.507059e+37
    %v2158 = vand.u32 %v2146, 2147483648
    %v2159 = vor.u32 1.1754944e-38, %v2158
    %v2160 = vsel %vm2157, %v2159, %v2155
    %v2161 = vmul.f32 %v2143, %v2160
    %v2162 = vrot.slane %v2071, 1
    %v2164 = vmul.f32 %v2162, %v2161
    %v2165 = vrot.slane %v2071, 2
    %v2167 = vmul.f32 %v2165, %v1952
    %v2168 = vadd.f32 %v2164, %v2167
    %2169 = vrot.lane.b32.xlu0 %v2168, 1
    %v2170 = vpop.permute.xlu0 %2169
    %2171 = vrot.lane.b32.xlu0 %v2168, 127
    %v2172 = vpop.permute.xlu0 %2171
    %v2173 = vrot.slane %v2071, 4
    %v2175 = vmul.f32 %v2173, %v2170
    %v2176 = vrot.slane %v2071, 5
    %v2178 = vmul.f32 %v2176, %v2168
    %v2179 = vadd.f32 %v2175, %v2178
    %v2180 = vrot.slane %v2071, 6
    %v2182 = vmul.f32 %v2180, %v2172
    %v2183 = vadd.f32 %v2179, %v2182
    %v2184 = vmax.f32 %v2183, 1e-16
    %v2185 = vlog2.pop %v2184
    %v2186 = vmul.f32 %v2185, 0.6931472
    %v2187 = vrot.slane %v2071, 3
    %v2189 = vmul.f32 %v2187, %v2186
    %v2190 = vmul.f32 %v2189, 1.442695
    %v2191 = vpow.pop %v2190
    %v2192 = vsel %vm336, %v2191, 0.0
    %2193 = vadd.xlane.f32.xlu0 %v2192
    %v2194 = vpop.xlane.xlu0 %2193
    %v2195 = vadd.f32 %v2194, 1e-16
    %v2196 = vrcp.pop %v2195
    %v2197 = vmul.f32 %v2195, %v2196
    %v2198 = vsub.f32 1.0, %v2197
    %v2199 = vmul.f32 %v2196, %v2198
    %v2200 = vadd.f32 %v2196, %v2199
    %vm2201 = vweird.f32 %v2195
    %vm2202 = vweird.f32 %v2196
    %vm2203 = vmor %vm2201, %vm2202
    %v2204 = vsel %vm2203, %v2196, %v2200
    %v2205 = vand.u32 2147483647, %v2195
    %vm2206 = vcmp.eq.f32.partialorder %v2205, 8.507059e+37
    %v2207 = vand.u32 %v2195, 2147483648
    %v2208 = vor.u32 1.1754944e-38, %v2207
    %v2209 = vsel %vm2206, %v2208, %v2204
    %v2210 = vmul.f32 %v2191, %v2209
    %2211 = vxpose.xlu0.b32.start [1/16] %v2067, 128
    %2212 = vxpose.xlu0.b32.cont [2/16] 0.0, 128
    %2213 = vxpose.xlu0.b32.cont [3/16] 0.0, 128
    %2214 = vxpose.xlu0.b32.cont [4/16] 0.0, 128
    %2215 = vxpose.xlu0.b32.cont [5/16] 0.0, 128
    %2216 = vxpose.xlu0.b32.cont [6/16] 0.0, 128
    %2217 = vxpose.xlu0.b32.cont [7/16] 0.0, 128
    %2218 = vxpose.xlu0.b32.cont [8/16] 0.0, 128
    %2219 = vxpose.xlu0.b32.cont [9/16] 0.0, 128
    %2220 = vxpose.xlu0.b32.cont [10/16] 0.0, 128
    %2221 = vxpose.xlu0.b32.cont [11/16] 0.0, 128
    %2222 = vxpose.xlu0.b32.cont [12/16] 0.0, 128
    %2223 = vxpose.xlu0.b32.cont [13/16] 0.0, 128
    %2224 = vxpose.xlu0.b32.cont [14/16] 0.0, 128
    %2225 = vxpose.xlu0.b32.cont [15/16] 0.0, 128
    %2226 = vxpose.xlu0.b32.end [16/16] 0.0, 128
    %v2227 = vpop.trf.xlu0
    %v2228 = vpop.trf.xlu0
    %v2229 = vpop.trf.xlu0
    %v2230 = vpop.trf.xlu0
    %v2231 = vpop.trf.xlu0
    %v2232 = vpop.trf.xlu0
    %v2233 = vpop.trf.xlu0
    %v2234 = vpop.trf.xlu0
    %v2235 = vpop.trf.xlu0
    %v2236 = vpop.trf.xlu0
    %v2237 = vpop.trf.xlu0
    %v2238 = vpop.trf.xlu0
    %v2239 = vpop.trf.xlu0
    %v2240 = vpop.trf.xlu0
    %v2241 = vpop.trf.xlu0
    %v2242 = vpop.trf.xlu0
    %v2244 = vsel %vm436, %v2227, 0
    %v2247 = vsel %vm436, %v2228, 0
    %v2250 = vsel %vm436, %v2229, 0
    %v2253 = vsel %vm436, %v2230, 0
    %v2256 = vsel %vm436, %v2231, 0
    %v2259 = vsel %vm436, %v2232, 0
    %v2262 = vsel %vm436, %v2233, 0
    %v2265 = vsel %vm436, %v2234, 0
    %v2268 = vsel %vm336, %v2210, 0
    %2270 = vmatpush.msra.mxu0 0.0
    %2271 = vmatpush.msra.mxu0 0.0
    %2272 = vmatpush.msra.mxu0 0.0
    %2273 = vmatpush.msra.mxu0 0.0
    %2274 = vmatpush.msra.mxu0 0.0
    %2275 = vmatpush.msra.mxu0 0.0
    %2276 = vmatpush.msra.mxu0 0.0
    %2277 = vmatpush.msra.mxu0 0.0
    %2278 = vmatpush.msra.mxu0 0.0
    %2279 = vmatpush.msra.mxu0 0.0
    %2280 = vmatpush.msra.mxu0 0.0
    %2281 = vmatpush.msra.mxu0 0.0
    %2282 = vmatpush.msra.mxu0 0.0
    %2283 = vmatpush.msra.mxu0 0.0
    %2284 = vmatpush.msra.mxu0 0.0
    %2285 = vmatpush.msra.mxu0 %v2268
    %2286 = vmatmul.f32.gmra.mxu0 %v2244
    %v2287 = vpop.f32.mrf.mxu0
    %v2288 = vadd.f32 0.0, %v2287
    %2289 = vmatmul.f32.gmra.mxu0 %v2247
    %v2290 = vpop.f32.mrf.mxu0
    %v2291 = vadd.f32 0.0, %v2290
    %2292 = vmatmul.f32.gmra.mxu0 %v2250
    %v2293 = vpop.f32.mrf.mxu0
    %v2294 = vadd.f32 0.0, %v2293
    %2295 = vmatmul.f32.gmra.mxu0 %v2253
    %v2296 = vpop.f32.mrf.mxu0
    %v2297 = vadd.f32 0.0, %v2296
    %2298 = vmatmul.f32.gmra.mxu0 %v2256
    %v2299 = vpop.f32.mrf.mxu0
    %v2300 = vadd.f32 0.0, %v2299
    %2301 = vmatmul.f32.gmra.mxu0 %v2259
    %v2302 = vpop.f32.mrf.mxu0
    %v2303 = vadd.f32 0.0, %v2302
    %2304 = vmatmul.f32.gmra.mxu0 %v2262
    %v2305 = vpop.f32.mrf.mxu0
    %v2306 = vadd.f32 0.0, %v2305
    %2307 = vmatmul.f32.gmra.mxu0 %v2265
    %v2308 = vpop.f32.mrf.mxu0
    %v2309 = vadd.f32 0.0, %v2308
    %2310 = vdwg.mxu0
    %v2311 = vsub.f32 1.0, %v2300
    %v2312 = vsub.f32 1.0, %v2303
    %v2313 = vsub.f32 1.0, %v2306
    %v2314 = vsub.f32 1.0, %v2309
    %v2315 = vmul.f32 %v2061, %v2311
    %v2316 = vmul.f32 %v2062, %v2312
    %v2317 = vmul.f32 %v2063, %v2313
    %v2318 = vmul.f32 %v2064, %v2314
    %v2319 = vadd.f32 %v2315, %v2288
    %v2320 = vadd.f32 %v2316, %v2291
    %v2321 = vadd.f32 %v2317, %v2294
    %v2322 = vadd.f32 %v2318, %v2297
    %2323 = vst [vmem:[#allocation5 + $0x7] sm:$0x1] %v2210
    %2324 = vst [vmem:[%s5] sm:$0xff] %v2319
    %2325 = vst [vmem:[%s5 + $0x8] sm:$0xff] %v2320
    %2326 = vst [vmem:[%s5 + $0x10] sm:$0xff] %v2321
    %2327 = vst [vmem:[%s5 + $0x18] sm:$0xff] %v2322
    // Predicated region
    $region22: #{write_head_forward_seq.1} parent=1 // pred_check
      _
    $region23: #{write_head_forward_seq.1} parent=1 // pred_check_branch
      %2329 = sbr.rel (0) target = $region25
    $region24: #{write_head_forward_seq.1} parent=1 // pred_region
      _
    $region25: #{write_head_forward_seq.1} parent=1 // pred_fallthru
      _
    // Predicated region
    $region26: #{write_head_forward_seq.1} parent=1 // pred_check
      _
    $region27: #{write_head_forward_seq.1} parent=1 // pred_check_branch
      %2331 = sbr.rel (0) target = $region29
    $region28: #{write_head_forward_seq.1} parent=1 // pred_region
      %2333 = vsyncadd [#allocation6], 0
      %s2335 = sshll.u32 [#allocation5], 4
      %s2336 = int_to_ptr.vmem [resolvable:$true] %s2335
      %s2337 = sshll.u32 %s6, 4
      %s2338 = int_to_ptr.hbm [resolvable:$true] %s2337
      %2340 = dma.vmem_to_hbm [thread:$0]  %s2336, 128, %s2338, [#allocation6]
    $region29: #{write_head_forward_seq.1} parent=1 // pred_fallthru
      _
    // Predicated region
    $region30: #{write_head_forward_seq.1} parent=1 // pred_check
      _
    $region31: #{write_head_forward_seq.1} parent=1 // pred_check_branch
      %2342 = sbr.rel (0) target = $region33
    $region32: #{write_head_forward_seq.1} parent=1 // pred_region
      _
    $region33: #{write_head_forward_seq.1} parent=1 // pred_fallthru
      _
    // Predicated region
    $region34: #{write_head_forward_seq.1} parent=1 // pred_check
      _
    $region35: #{write_head_forward_seq.1} parent=1 // pred_check_branch
      %2344 = sbr.rel (0) target = $region37
    $region36: #{write_head_forward_seq.1} parent=1 // pred_region
      %2346 = dma.done [#allocation6], 128
    $region37: #{write_head_forward_seq.1} parent=1 // pred_fallthru
      _
    %2347 = vsyncpa [#allocation6], 1

</llo_original>
